<compile_context>
chip_gen: v5e
topology: v5e:2x2
jax: 0.10.0
libtpu: 0.0.40
codegen_flags: <defaults>
</compile_context>

<pallas_src>
import functools

import jax
import jax.numpy as jnp
from jax.experimental import pallas as pl
from jax.experimental.pallas import tpu as pltpu

HIDDEN = 512
TILE_B_CAP = 1024          # max batch rows per grid step


def _round_up(x, m):
    return (x + m - 1) // m * m


def _mlp_kernel(x_ref,
                w1_ref, b1_ref,   # Linear(img_pad, 512)
                w2_ref, b2_ref,   # Linear(512, lat_pad)
                w3_ref, b3_ref,   # Linear(lat_pad, 512)
                w4_ref, b4_ref,   # Linear(512, img_pad)
                enc_ref, dec_ref):
    """One batch-tile of the full forward pass. Weights are VMEM-resident bf16,
    biases f32, matmuls accumulate in f32 on the MXU."""
    # x arrives as f32; cast to bf16 here (VPU work hidden under the MXU).
    x = x_ref[...].astype(jnp.bfloat16)                          # (TB, img_pad)

    # ---- encoder ----
    h1 = jnp.dot(x, w1_ref[...], preferred_element_type=jnp.float32) + b1_ref[...]
    h1 = jnp.maximum(h1, 0.0).astype(jnp.bfloat16)               # ReLU in f32, bf16 to MXU
    enc = jnp.dot(h1, w2_ref[...], preferred_element_type=jnp.float32) + b2_ref[...]
    enc_ref[...] = enc.astype(enc_ref.dtype)                     # lane-dense (TB, 128)

    # ---- decoder ----
    h2 = jnp.dot(enc.astype(jnp.bfloat16), w3_ref[...],
                 preferred_element_type=jnp.float32) + b3_ref[...]
    h2 = jnp.maximum(h2, 0.0).astype(jnp.bfloat16)
    logits = jnp.dot(h2, w4_ref[...], preferred_element_type=jnp.float32) + b4_ref[...]
    # Sigmoid: exp and approx reciprocal both run on the EUP slot.
    dec = pl.reciprocal(1.0 + jnp.exp(-logits), approx=True)
    dec_ref[...] = dec.astype(dec_ref.dtype)                     # bf16 writeback


def prepare_params(params, img_size, latent_dim):
    """One-time parameter packing (call OUTSIDE the per-step forward):
      * pad latent_dim -> multiple of 128 (extra w2 cols / b2 / w3 rows are 0,
        so padded enc columns are exactly 0 and contribute nothing to h2),
      * pad img_size  -> multiple of 128 (no-op when already aligned),
      * cast weights to bf16 (halves HBM weight traffic; MXU accumulates f32).
    """
    w1, b1, w2, b2, w3, b3, w4, b4 = params
    lat_pad = _round_up(latent_dim, 128)
    img_pad = _round_up(img_size, 128)
    pad_l = lat_pad - latent_dim
    pad_i = img_pad - img_size

    w1p = jnp.pad(w1, ((0, pad_i), (0, 0))).astype(jnp.bfloat16)
    w2p = jnp.pad(w2, ((0, 0), (0, pad_l))).astype(jnp.bfloat16)
    b2p = jnp.pad(b2, ((0, 0), (0, pad_l)))
    w3p = jnp.pad(w3, ((0, pad_l), (0, 0))).astype(jnp.bfloat16)
    w4p = jnp.pad(w4, ((0, 0), (0, pad_i))).astype(jnp.bfloat16)
    b4p = jnp.pad(b4, ((0, 0), (0, pad_i)))
    return (w1p, b1, w2p, b2p, w3p, b3, w4p, b4p)


@functools.partial(jax.jit, static_argnames=("img_shape", "latent_dim"))
def mlp_forward(frames, packed_params, img_shape, latent_dim):
    """frames: (B, *img_shape) float32. packed_params from prepare_params().
    Returns (encoding f32 (B, latent_dim), decoding bf16 (B, *img_shape))."""
    B = frames.shape[0]
    img_size = 1
    for d in img_shape:
        img_size *= d

    w1, b1, w2, b2, w3, b3, w4, b4 = packed_params
    img_pad = w1.shape[0]
    lat_pad = w2.shape[1]

    # --- batch tile: >=16 (bf16 sublane pack), cap at TILE_B_CAP; when the
    #     batch allows, force >=2 grid steps so both v7x TensorCores get work.
    b16 = _round_up(B, 16)
    if b16 >= 32:
        tile_b = min(TILE_B_CAP, _round_up((b16 + 1) // 2, 16))
    else:
        tile_b = b16
    b_pad = _round_up(B, tile_b)
    grid = (b_pad // tile_b,)

    # Feed f32 frames directly (bf16 cast happens in-kernel); pad only if needed.
    x = frames.reshape(B, img_size)
    if b_pad != B or img_pad != img_size:
        x = jnp.pad(x, ((0, b_pad - B), (0, img_pad - img_size)))

    def resident(shape):
        # Constant index_map => fetched once, stays VMEM-resident across the grid.
        return pl.BlockSpec(shape, lambda i: (0, 0))

    in_specs = [
        pl.BlockSpec((tile_b, img_pad), lambda i: (i, 0)),          # x  (batch-tiled)
        resident((img_pad, HIDDEN)), resident((1, HIDDEN)),         # w1, b1
        resident((HIDDEN, lat_pad)), resident((1, lat_pad)),        # w2, b2
        resident((lat_pad, HIDDEN)), resident((1, HIDDEN)),         # w3, b3
        resident((HIDDEN, img_pad)), resident((1, img_pad)),        # w4, b4
    ]
    out_specs = (
        pl.BlockSpec((tile_b, lat_pad), lambda i: (i, 0)),
        pl.BlockSpec((tile_b, img_pad), lambda i: (i, 0)),
    )

    flops = 2 * b_pad * (img_pad * HIDDEN + HIDDEN * lat_pad
                         + lat_pad * HIDDEN + HIDDEN * img_pad)
    bytes_accessed = (
        b_pad * img_pad * 4                                          # x (f32 in)
        + (w1.size + w2.size + w3.size + w4.size) * 2                # weights (bf16)
        + (b1.size + b2.size + b3.size + b4.size) * 4                # biases (f32)
        + b_pad * lat_pad * 4                                        # enc (f32 out)
        + b_pad * img_pad * 2)                                       # dec (bf16 out)
    cost = pl.CostEstimate(flops=flops,
                           transcendentals=2 * b_pad * img_pad,      # exp + rcp
                           bytes_accessed=bytes_accessed)

    enc_p, dec_p = pl.pallas_call(
        _mlp_kernel,
        out_shape=(
            jax.ShapeDtypeStruct((b_pad, lat_pad), jnp.float32),     # enc (small)
            jax.ShapeDtypeStruct((b_pad, img_pad), jnp.bfloat16),    # dec (biggest stream)
        ),
        grid_spec=pltpu.PrefetchScalarGridSpec(
            num_scalar_prefetch=0,
            grid=grid,
            in_specs=in_specs,
            out_specs=out_specs,
        ),
        compiler_params=pltpu.CompilerParams(
            dimension_semantics=("parallel",),        # split batch across TCs on v7x
            vmem_limit_bytes=48 * 1024 * 1024,        # ~18 MiB pipeline bufs + temps
        ),
        cost_estimate=cost,
    )(x, w1, b1, w2, b2, w3, b3, w4, b4)

    enc = enc_p[:B, :latent_dim]
    dec = dec_p[:B, :img_size].reshape(B, *img_shape)   # bf16; cast downstream if needed
    return enc, dec


def init_params(key, img_size, latent_dim):
    """Deterministic synthetic init. Weights are (in, out); biases are (1, out)."""
    ks = jax.random.split(key, 8)

    def lin(kw, kb, fan_in, fan_out):
        # torch.nn.Linear-style uniform(-1/sqrt(fan_in), 1/sqrt(fan_in))
        bound = 1.0 / jnp.sqrt(fan_in)
        w = jax.random.uniform(kw, (fan_in, fan_out), jnp.float32, -bound, bound)
        b = jax.random.uniform(kb, (1, fan_out), jnp.float32, -bound, bound)
        return w, b

    w1, b1 = lin(ks[0], ks[1], img_size, HIDDEN)
    w2, b2 = lin(ks[2], ks[3], HIDDEN, latent_dim)
    w3, b3 = lin(ks[4], ks[5], latent_dim, HIDDEN)
    w4, b4 = lin(ks[6], ks[7], HIDDEN, img_size)
    return (w1, b1, w2, b2, w3, b3, w4, b4)


def reference_forward(frames, params, img_shape, latent_dim):
    """Pure-JAX reference mirroring the PyTorch forward, with the same bf16
    casts the kernel applies (so tolerances stay tight and meaningful)."""
    B = frames.shape[0]
    w1, b1, w2, b2, w3, b3, w4, b4 = params

    def bf(a):  # emulate the kernel's bf16 rounding of MXU operands
        return a.astype(jnp.bfloat16).astype(jnp.float32)

    x = bf(frames.reshape(B, -1))
    h1 = bf(jnp.maximum(x @ bf(w1) + b1, 0.0))
    enc = h1 @ bf(w2) + b2
    h2 = bf(jnp.maximum(bf(enc) @ bf(w3) + b3, 0.0))
    dec = jax.nn.sigmoid(h2 @ bf(w4) + b4)
    return enc, dec.reshape(B, *img_shape)


if __name__ == "__main__":
    img_shape = (4, 16, 16)        # (C, H, W) -> img_size = 1024
    latent_dim = 100
    batch = 2
    img_size = 4 * 16 * 16

    key = jax.random.PRNGKey(0)
    k_x, k_p = jax.random.split(key)
    frames = jax.random.uniform(k_x, (batch, *img_shape), jnp.float32)
    params = init_params(k_p, img_size, latent_dim)

    # One-time parameter packing (padding + bf16 cast) outside the hot path.
    packed = prepare_params(params, img_size, latent_dim)
    packed = jax.block_until_ready(packed)

    enc, dec = mlp_forward(frames, packed, img_shape, latent_dim)
    jax.block_until_ready((enc, dec))

    enc_ref, dec_ref = reference_forward(frames, params, img_shape, latent_dim)
    assert enc.shape == (batch, latent_dim)
    assert dec.shape == (batch, *img_shape)
    assert jnp.allclose(enc, enc_ref, atol=1e-2, rtol=1e-2)
    assert jnp.allclose(dec.astype(jnp.float32), dec_ref, atol=1e-2, rtol=1e-2)

    print("KERNEL_OK")
</pallas_src>

<mosaic_0001>
module attributes {stable_mosaic.version = 11 : i64} {
  func.func @_mlp_kernel(%arg0: i32, %arg1: memref<16x1024xf32, #tpu.memory_space<vmem>>, %arg2: memref<1024x512xbf16, #tpu.memory_space<vmem>>, %arg3: memref<1x512xf32, #tpu.memory_space<vmem>>, %arg4: memref<512x128xbf16, #tpu.memory_space<vmem>>, %arg5: memref<1x128xf32, #tpu.memory_space<vmem>>, %arg6: memref<128x512xbf16, #tpu.memory_space<vmem>>, %arg7: memref<1x512xf32, #tpu.memory_space<vmem>>, %arg8: memref<512x1024xbf16, #tpu.memory_space<vmem>>, %arg9: memref<1x1024xf32, #tpu.memory_space<vmem>>, %arg10: memref<16x128xf32, #tpu.memory_space<vmem>>, %arg11: memref<16x1024xbf16, #tpu.memory_space<vmem>>) attributes {dimension_semantics = [#tpu.dimension_semantics<parallel>], iteration_bounds = array<i64: 1>, scalar_prefetch = 0 : i64, scratch_operands = 0 : i64, tpu.core_type = #tpu.core_type<tc>, window_params = [{transform_indices = @transform_0, window_bounds = array<i64: 16, 1024>}, {pipeline_mode = #tpu.pipeline_mode<synchronous>, transform_indices = @transform_1, window_bounds = array<i64: 1024, 512>}, {pipeline_mode = #tpu.pipeline_mode<synchronous>, transform_indices = @transform_2, window_bounds = array<i64: 1, 512>}, {pipeline_mode = #tpu.pipeline_mode<synchronous>, transform_indices = @transform_3, window_bounds = array<i64: 512, 128>}, {pipeline_mode = #tpu.pipeline_mode<synchronous>, transform_indices = @transform_4, window_bounds = array<i64: 1, 128>}, {pipeline_mode = #tpu.pipeline_mode<synchronous>, transform_indices = @transform_5, window_bounds = array<i64: 128, 512>}, {pipeline_mode = #tpu.pipeline_mode<synchronous>, transform_indices = @transform_6, window_bounds = array<i64: 1, 512>}, {pipeline_mode = #tpu.pipeline_mode<synchronous>, transform_indices = @transform_7, window_bounds = array<i64: 512, 1024>}, {pipeline_mode = #tpu.pipeline_mode<synchronous>, transform_indices = @transform_8, window_bounds = array<i64: 1, 1024>}, {transform_indices = @transform_9, window_bounds = array<i64: 16, 128>}, {transform_indices = @transform_10, window_bounds = array<i64: 16, 1024>}]} {
    %c0 = arith.constant 0 : index
    %c0_0 = arith.constant 0 : index
    %0 = vector.load %arg1[%c0, %c0_0] : memref<16x1024xf32, #tpu.memory_space<vmem>>, vector<16x1024xf32>
    %1 = arith.truncf %0 : vector<16x1024xf32> to vector<16x1024xbf16>
    %c0_1 = arith.constant 0 : index
    %c0_2 = arith.constant 0 : index
    %2 = vector.load %arg2[%c0_1, %c0_2] : memref<1024x512xbf16, #tpu.memory_space<vmem>>, vector<1024x512xbf16>
    %cst = arith.constant dense<0.000000e+00> : vector<16x512xf32>
    %3 = tpu.matmul %1, %2, %cst {dimension_numbers = #tpu.dot_dimension_numbers<[1], [0], [0], [1], [0, 0, 1, 1], [], []>} : vector<16x1024xbf16>, vector<1024x512xbf16>, vector<16x512xf32> -> vector<16x512xf32>
    %c0_3 = arith.constant 0 : index
    %c0_4 = arith.constant 0 : index
    %4 = vector.load %arg3[%c0_3, %c0_4] : memref<1x512xf32, #tpu.memory_space<vmem>>, vector<1x512xf32>
    %5 = vector.broadcast %4 : vector<1x512xf32> to vector<16x512xf32>
    %6 = arith.addf %3, %5 : vector<16x512xf32>
    %cst_5 = arith.constant 0.000000e+00 : f32
    %7 = vector.broadcast %cst_5 : f32 to vector<16x512xf32>
    %8 = arith.maximumf %6, %7 : vector<16x512xf32>
    %9 = arith.truncf %8 : vector<16x512xf32> to vector<16x512xbf16>
    %c0_6 = arith.constant 0 : index
    %c0_7 = arith.constant 0 : index
    %10 = vector.load %arg4[%c0_6, %c0_7] : memref<512x128xbf16, #tpu.memory_space<vmem>>, vector<512x128xbf16>
    %cst_8 = arith.constant dense<0.000000e+00> : vector<16x128xf32>
    %11 = tpu.matmul %9, %10, %cst_8 {dimension_numbers = #tpu.dot_dimension_numbers<[1], [0], [0], [1], [0, 0, 1, 1], [], []>} : vector<16x512xbf16>, vector<512x128xbf16>, vector<16x128xf32> -> vector<16x128xf32>
    %c0_9 = arith.constant 0 : index
    %c0_10 = arith.constant 0 : index
    %12 = vector.load %arg5[%c0_9, %c0_10] : memref<1x128xf32, #tpu.memory_space<vmem>>, vector<1x128xf32>
    %13 = vector.broadcast %12 : vector<1x128xf32> to vector<16x128xf32>
    %14 = arith.addf %11, %13 : vector<16x128xf32>
    %c0_11 = arith.constant 0 : index
    %c0_12 = arith.constant 0 : index
    %15 = vector.load %arg10[%c0_11, %c0_12] : memref<16x128xf32, #tpu.memory_space<vmem>>, vector<16x128xf32>
    tpu.vector_store %arg10[%c0_11, %c0_12], %14 {strides = array<i32>} : memref<16x128xf32, #tpu.memory_space<vmem>>, vector<16x128xf32>,
    %16 = arith.truncf %14 : vector<16x128xf32> to vector<16x128xbf16>
    %c0_13 = arith.constant 0 : index
    %c0_14 = arith.constant 0 : index
    %17 = vector.load %arg6[%c0_13, %c0_14] : memref<128x512xbf16, #tpu.memory_space<vmem>>, vector<128x512xbf16>
    %cst_15 = arith.constant dense<0.000000e+00> : vector<16x512xf32>
    %18 = tpu.matmul %16, %17, %cst_15 {dimension_numbers = #tpu.dot_dimension_numbers<[1], [0], [0], [1], [0, 0, 1, 1], [], []>} : vector<16x128xbf16>, vector<128x512xbf16>, vector<16x512xf32> -> vector<16x512xf32>
    %c0_16 = arith.constant 0 : index
    %c0_17 = arith.constant 0 : index
    %19 = vector.load %arg7[%c0_16, %c0_17] : memref<1x512xf32, #tpu.memory_space<vmem>>, vector<1x512xf32>
    %20 = vector.broadcast %19 : vector<1x512xf32> to vector<16x512xf32>
    %21 = arith.addf %18, %20 : vector<16x512xf32>
    %cst_18 = arith.constant 0.000000e+00 : f32
    %22 = vector.broadcast %cst_18 : f32 to vector<16x512xf32>
    %23 = arith.maximumf %21, %22 : vector<16x512xf32>
    %24 = arith.truncf %23 : vector<16x512xf32> to vector<16x512xbf16>
    %c0_19 = arith.constant 0 : index
    %c0_20 = arith.constant 0 : index
    %25 = vector.load %arg8[%c0_19, %c0_20] : memref<512x1024xbf16, #tpu.memory_space<vmem>>, vector<512x1024xbf16>
    %cst_21 = arith.constant dense<0.000000e+00> : vector<16x1024xf32>
    %26 = tpu.matmul %24, %25, %cst_21 {dimension_numbers = #tpu.dot_dimension_numbers<[1], [0], [0], [1], [0, 0, 1, 1], [], []>} : vector<16x512xbf16>, vector<512x1024xbf16>, vector<16x1024xf32> -> vector<16x1024xf32>
    %c0_22 = arith.constant 0 : index
    %c0_23 = arith.constant 0 : index
    %27 = vector.load %arg9[%c0_22, %c0_23] : memref<1x1024xf32, #tpu.memory_space<vmem>>, vector<1x1024xf32>
    %28 = vector.broadcast %27 : vector<1x1024xf32> to vector<16x1024xf32>
    %29 = arith.addf %26, %28 : vector<16x1024xf32>
    %cst_24 = arith.constant 0.000000e+00 : f32
    %30 = vector.broadcast %cst_24 : f32 to vector<16x1024xf32>
    %31 = arith.subf %30, %29 : vector<16x1024xf32>
    %32 = math.exp %31 : vector<16x1024xf32>
    %cst_25 = arith.constant 1.000000e+00 : f32
    %33 = vector.broadcast %cst_25 : f32 to vector<16x1024xf32>
    %34 = arith.addf %33, %32 : vector<16x1024xf32>
    %35 = tpu.reciprocal %34 {approx = true} : vector<16x1024xf32> -> vector<16x1024xf32>
    %36 = arith.truncf %35 : vector<16x1024xf32> to vector<16x1024xbf16>
    %c0_26 = arith.constant 0 : index
    %c0_27 = arith.constant 0 : index
    %37 = vector.load %arg11[%c0_26, %c0_27] : memref<16x1024xbf16, #tpu.memory_space<vmem>>, vector<16x1024xbf16>
    tpu.vector_store %arg11[%c0_26, %c0_27], %36 {strides = array<i32>} : memref<16x1024xbf16, #tpu.memory_space<vmem>>, vector<16x1024xbf16>,
    return
  }
  func.func @transform_0(%arg0: i32) -> (i32, i32) {
    %c0_i32 = arith.constant 0 : i32
    %c0_i32_0 = arith.constant 0 : i32
    return %arg0, %c0_i32 : i32, i32
  }
  func.func @transform_1(%arg0: i32) -> (i32, i32) {
    %c0_i32 = arith.constant 0 : i32
    %c0_i32_0 = arith.constant 0 : i32
    %c0_i32_1 = arith.constant 0 : i32
    return %c0_i32, %c0_i32_0 : i32, i32
  }
  func.func @transform_2(%arg0: i32) -> (i32, i32) {
    %c0_i32 = arith.constant 0 : i32
    %c0_i32_0 = arith.constant 0 : i32
    %c0_i32_1 = arith.constant 0 : i32
    return %c0_i32, %c0_i32_0 : i32, i32
  }
  func.func @transform_3(%arg0: i32) -> (i32, i32) {
    %c0_i32 = arith.constant 0 : i32
    %c0_i32_0 = arith.constant 0 : i32
    %c0_i32_1 = arith.constant 0 : i32
    return %c0_i32, %c0_i32_0 : i32, i32
  }
  func.func @transform_4(%arg0: i32) -> (i32, i32) {
    %c0_i32 = arith.constant 0 : i32
    %c0_i32_0 = arith.constant 0 : i32
    %c0_i32_1 = arith.constant 0 : i32
    return %c0_i32, %c0_i32_0 : i32, i32
  }
  func.func @transform_5(%arg0: i32) -> (i32, i32) {
    %c0_i32 = arith.constant 0 : i32
    %c0_i32_0 = arith.constant 0 : i32
    %c0_i32_1 = arith.constant 0 : i32
    return %c0_i32, %c0_i32_0 : i32, i32
  }
  func.func @transform_6(%arg0: i32) -> (i32, i32) {
    %c0_i32 = arith.constant 0 : i32
    %c0_i32_0 = arith.constant 0 : i32
    %c0_i32_1 = arith.constant 0 : i32
    return %c0_i32, %c0_i32_0 : i32, i32
  }
  func.func @transform_7(%arg0: i32) -> (i32, i32) {
    %c0_i32 = arith.constant 0 : i32
    %c0_i32_0 = arith.constant 0 : i32
    %c0_i32_1 = arith.constant 0 : i32
    return %c0_i32, %c0_i32_0 : i32, i32
  }
  func.func @transform_8(%arg0: i32) -> (i32, i32) {
    %c0_i32 = arith.constant 0 : i32
    %c0_i32_0 = arith.constant 0 : i32
    %c0_i32_1 = arith.constant 0 : i32
    return %c0_i32, %c0_i32_0 : i32, i32
  }
  func.func @transform_9(%arg0: i32) -> (i32, i32) {
    %c0_i32 = arith.constant 0 : i32
    %c0_i32_0 = arith.constant 0 : i32
    return %arg0, %c0_i32 : i32, i32
  }
  func.func @transform_10(%arg0: i32) -> (i32, i32) {
    %c0_i32 = arith.constant 0 : i32
    %c0_i32_0 = arith.constant 0 : i32
    return %arg0, %c0_i32 : i32, i32
  }
}

</mosaic_0001>

<llo_original>
// kernel: mlp_forward.1
$region0: #{mlp_forward.1}
  #allocation0 [shape = 'u32[]', space=smem, size = 0x4, offset = 0x4, fixed_abs, tag = 'smem constant byte address 0x4 - core index']
  #allocation1 [shape = 'u32[72,128]{1,0:T(1,128)}', space=vmem, size = 0x9000, scoped, tag = 'internal scratch']
  %s0 = inlined_call_operand.vmem [shape: f32[16,1024], index: 0, kind: input, shape index: {}]
  %s1 = inlined_call_operand.hbm [shape: bf16[1024,512], index: 1, kind: input, shape index: {}]
  %s2 = inlined_call_operand.vmem [shape: f32[1,512], index: 2, kind: input, shape index: {}]
  %s3 = inlined_call_operand.vmem [shape: bf16[512,128], index: 3, kind: input, shape index: {}]
  %s4 = inlined_call_operand.vmem [shape: f32[1,128], index: 4, kind: input, shape index: {}]
  %s5 = inlined_call_operand.hbm [shape: bf16[128,512], index: 5, kind: input, shape index: {}]
  %s6 = inlined_call_operand.vmem [shape: f32[1,512], index: 6, kind: input, shape index: {}]
  %s7 = inlined_call_operand.hbm [shape: bf16[512,1024], index: 7, kind: input, shape index: {}]
  %s8 = inlined_call_operand.vmem [shape: f32[1,1024], index: 8, kind: input, shape index: {}]
  %s9 = inlined_call_operand.vmem [shape: f32[16,128], index: 9, kind: output, shape index: {0}]
  %s10 = inlined_call_operand.vmem [shape: bf16[16,1024], index: 10, kind: output, shape index: {1}]
  %11 = xla_tuple %s9, %s10
  %s12 = sld [smem:[#allocation0]]
  $region66: #{mlp_forward.1} parent=0
    _
  %s14 = ssub.s32 1, %s12
  %s15 = scalar_select 0, %s14, %s12
  $region1: #{mlp_forward.1} parent=0
    #allocation2 [shape = 'u8[1048576]{0}', space=vmem, size = 0x100000, scoped, tag = 'input window, operand 1, single buffered']
    #allocation3 [shape = 's32[1]{0}', space=sflag, size = 0x4, scoped, tag = 'scoped memory for mlp_forward.1']
    #allocation4 [shape = 'u8[131072]{0}', space=vmem, size = 0x20000, scoped, tag = 'input window, operand 5, single buffered']
    #allocation5 [shape = 's32[1]{0}', space=sflag, size = 0x4, scoped, tag = 'scoped memory for mlp_forward.1']
    #allocation6 [shape = 'u8[1048576]{0}', space=vmem, size = 0x100000, scoped, tag = 'input window, operand 7, single buffered']
    %16 = vsyncpa [#allocation3], 0
    %17 = vsyncpa [#allocation5], 0
    // Predicated region
    $region2: #{mlp_forward.1} parent=1 // pred_check
      _
    $region3: #{mlp_forward.1} parent=1 // pred_check_branch
      %19 = sbr.rel (0) target = $region5
    $region4: #{mlp_forward.1} parent=1 // pred_region
      _
    $region5: #{mlp_forward.1} parent=1 // pred_fallthru
      _
    // Predicated region
    $region6: #{mlp_forward.1} parent=1 // pred_check
      _
    $region7: #{mlp_forward.1} parent=1 // pred_check_branch
      %21 = sbr.rel (0) target = $region9
    $region8: #{mlp_forward.1} parent=1 // pred_region
      %23 = vsyncadd [#allocation3], 0
      %s24 = sshll.u32 %s1, 4
      %s25 = int_to_ptr.hbm [resolvable:$true] %s24
      %s26 = sshll.u32 [#allocation2], 4
      %s27 = int_to_ptr.vmem [resolvable:$true] %s26
      %32 = dma.hbm_to_vmem [thread:$0]  %s25, 32768, %s27, [#allocation3], 256, 256, 16
    $region9: #{mlp_forward.1} parent=1 // pred_fallthru
      _
    // Predicated region
    $region10: #{mlp_forward.1} parent=1 // pred_check
      _
    $region11: #{mlp_forward.1} parent=1 // pred_check_branch
      %34 = sbr.rel (0) target = $region13
    $region12: #{mlp_forward.1} parent=1 // pred_region
      _
    $region13: #{mlp_forward.1} parent=1 // pred_fallthru
      _
    // Predicated region
    $region14: #{mlp_forward.1} parent=1 // pred_check
      _
    $region15: #{mlp_forward.1} parent=1 // pred_check_branch
      %36 = sbr.rel (0) target = $region17
    $region16: #{mlp_forward.1} parent=1 // pred_region
      _
    $region17: #{mlp_forward.1} parent=1 // pred_fallthru
      _
    // Predicated region
    $region18: #{mlp_forward.1} parent=1 // pred_check
      _
    $region19: #{mlp_forward.1} parent=1 // pred_check_branch
      %38 = sbr.rel (0) target = $region21
    $region20: #{mlp_forward.1} parent=1 // pred_region
      _
    $region21: #{mlp_forward.1} parent=1 // pred_fallthru
      _
    // Predicated region
    $region22: #{mlp_forward.1} parent=1 // pred_check
      _
    $region23: #{mlp_forward.1} parent=1 // pred_check_branch
      %40 = sbr.rel (0) target = $region25
    $region24: #{mlp_forward.1} parent=1 // pred_region
      %42 = vsyncadd [#allocation5], 0
      %s43 = sshll.u32 %s5, 4
      %s44 = int_to_ptr.hbm [resolvable:$true] %s43
      %s45 = sshll.u32 [#allocation4], 4
      %s46 = int_to_ptr.vmem [resolvable:$true] %s45
      %51 = dma.hbm_to_vmem [thread:$0]  %s44, 4096, %s46, [#allocation5], 256, 256, 16
    $region25: #{mlp_forward.1} parent=1 // pred_fallthru
      _
    // Predicated region
    $region26: #{mlp_forward.1} parent=1 // pred_check
      _
    $region27: #{mlp_forward.1} parent=1 // pred_check_branch
      %53 = sbr.rel (0) target = $region29
    $region28: #{mlp_forward.1} parent=1 // pred_region
      _
    $region29: #{mlp_forward.1} parent=1 // pred_fallthru
      _
    // Predicated region
    $region30: #{mlp_forward.1} parent=1 // pred_check
      _
    $region31: #{mlp_forward.1} parent=1 // pred_check_branch
      %55 = sbr.rel (0) target = $region33
    $region32: #{mlp_forward.1} parent=1 // pred_region
      %57 = vsyncadd [#allocation5], 0
      %s58 = sshll.u32 %s7, 4
      %s59 = int_to_ptr.hbm [resolvable:$true] %s58
      %s60 = sshll.u32 [#allocation6], 4
      %s61 = int_to_ptr.vmem [resolvable:$true] %s60
      %66 = dma.hbm_to_vmem [thread:$0]  %s59, 32768, %s61, [#allocation5], 512, 512, 32
    $region33: #{mlp_forward.1} parent=1 // pred_fallthru
      _
    // Predicated region
    $region34: #{mlp_forward.1} parent=1 // pred_check
      _
    $region35: #{mlp_forward.1} parent=1 // pred_check_branch
      %68 = sbr.rel (0) target = $region37
    $region36: #{mlp_forward.1} parent=1 // pred_region
      _
    $region37: #{mlp_forward.1} parent=1 // pred_fallthru
      _
    // Predicated region
    $region38: #{mlp_forward.1} parent=1 // pred_check
      _
    $region39: #{mlp_forward.1} parent=1 // pred_check_branch
      %70 = sbr.rel (0) target = $region41
    $region40: #{mlp_forward.1} parent=1 // pred_region
      %72 = dma.done [#allocation3], 32768
    $region41: #{mlp_forward.1} parent=1 // pred_fallthru
      _
    // Predicated region
    $region42: #{mlp_forward.1} parent=1 // pred_check
      _
    $region43: #{mlp_forward.1} parent=1 // pred_check_branch
      %74 = sbr.rel (0) target = $region45
    $region44: #{mlp_forward.1} parent=1 // pred_region
      %76 = dma.done [#allocation5], 4096
    $region45: #{mlp_forward.1} parent=1 // pred_fallthru
      _
    // Predicated region
    $region46: #{mlp_forward.1} parent=1 // pred_check
      _
    $region47: #{mlp_forward.1} parent=1 // pred_check_branch
      %78 = sbr.rel (0) target = $region49
    $region48: #{mlp_forward.1} parent=1 // pred_region
      %80 = dma.done [#allocation5], 32768
    $region49: #{mlp_forward.1} parent=1 // pred_fallthru
      _
    %v81 = vld [vmem:[%s0] sm:$0xff]
    %v82 = vld [vmem:[%s0 + $0x8] sm:$0xff]
    %v83 = vld [vmem:[%s0 + $0x10] sm:$0xff]
    %v84 = vld [vmem:[%s0 + $0x18] sm:$0xff]
    %v85 = vld [vmem:[%s0 + $0x20] sm:$0xff]
    %v86 = vld [vmem:[%s0 + $0x28] sm:$0xff]
    %v87 = vld [vmem:[%s0 + $0x30] sm:$0xff]
    %v88 = vld [vmem:[%s0 + $0x38] sm:$0xff]
    %v89 = vld [vmem:[%s0 + $0x40] sm:$0xff]
    %v90 = vld [vmem:[%s0 + $0x48] sm:$0xff]
    %v91 = vld [vmem:[%s0 + $0x50] sm:$0xff]
    %v92 = vld [vmem:[%s0 + $0x58] sm:$0xff]
    %v93 = vld [vmem:[%s0 + $0x60] sm:$0xff]
    %v94 = vld [vmem:[%s0 + $0x68] sm:$0xff]
    %v95 = vld [vmem:[%s0 + $0x70] sm:$0xff]
    %v96 = vld [vmem:[%s0 + $0x78] sm:$0xff]
    %v97 = vpack.c.bf16 %v89, %v81
    %v98 = vpack.c.bf16 %v90, %v82
    %v99 = vpack.c.bf16 %v91, %v83
    %v100 = vpack.c.bf16 %v92, %v84
    %v101 = vpack.c.bf16 %v93, %v85
    %v102 = vpack.c.bf16 %v94, %v86
    %v103 = vpack.c.bf16 %v95, %v87
    %v104 = vpack.c.bf16 %v96, %v88
    %v105 = vld [vmem:[#allocation2] sm:$0xff]
    %v106 = vld [vmem:[#allocation2 + $0x8] sm:$0xff]
    %v107 = vld [vmem:[#allocation2 + $0x10] sm:$0xff]
    %v108 = vld [vmem:[#allocation2 + $0x18] sm:$0xff]
    %v109 = vld [vmem:[#allocation2 + $0x20] sm:$0xff]
    %v110 = vld [vmem:[#allocation2 + $0x28] sm:$0xff]
    %v111 = vld [vmem:[#allocation2 + $0x30] sm:$0xff]
    %v112 = vld [vmem:[#allocation2 + $0x38] sm:$0xff]
    %v113 = vld [vmem:[#allocation2 + $0x40] sm:$0xff]
    %v114 = vld [vmem:[#allocation2 + $0x48] sm:$0xff]
    %v115 = vld [vmem:[#allocation2 + $0x50] sm:$0xff]
    %v116 = vld [vmem:[#allocation2 + $0x58] sm:$0xff]
    %v117 = vld [vmem:[#allocation2 + $0x60] sm:$0xff]
    %v118 = vld [vmem:[#allocation2 + $0x68] sm:$0xff]
    %v119 = vld [vmem:[#allocation2 + $0x70] sm:$0xff]
    %v120 = vld [vmem:[#allocation2 + $0x78] sm:$0xff]
    %v121 = vld [vmem:[#allocation2 + $0x80] sm:$0xff]
    %v122 = vld [vmem:[#allocation2 + $0x88] sm:$0xff]
    %v123 = vld [vmem:[#allocation2 + $0x90] sm:$0xff]
    %v124 = vld [vmem:[#allocation2 + $0x98] sm:$0xff]
    %v125 = vld [vmem:[#allocation2 + $0xa0] sm:$0xff]
    %v126 = vld [vmem:[#allocation2 + $0xa8] sm:$0xff]
    %v127 = vld [vmem:[#allocation2 + $0xb0] sm:$0xff]
    %v128 = vld [vmem:[#allocation2 + $0xb8] sm:$0xff]
    %v129 = vld [vmem:[#allocation2 + $0xc0] sm:$0xff]
    %v130 = vld [vmem:[#allocation2 + $0xc8] sm:$0xff]
    %v131 = vld [vmem:[#allocation2 + $0xd0] sm:$0xff]
    %v132 = vld [vmem:[#allocation2 + $0xd8] sm:$0xff]
    %v133 = vld [vmem:[#allocation2 + $0xe0] sm:$0xff]
    %v134 = vld [vmem:[#allocation2 + $0xe8] sm:$0xff]
    %v135 = vld [vmem:[#allocation2 + $0xf0] sm:$0xff]
    %v136 = vld [vmem:[#allocation2 + $0xf8] sm:$0xff]
    %v137 = vld [vmem:[#allocation2 + $0x100] sm:$0xff]
    %v138 = vld [vmem:[#allocation2 + $0x108] sm:$0xff]
    %v139 = vld [vmem:[#allocation2 + $0x110] sm:$0xff]
    %v140 = vld [vmem:[#allocation2 + $0x118] sm:$0xff]
    %v141 = vld [vmem:[#allocation2 + $0x120] sm:$0xff]
    %v142 = vld [vmem:[#allocation2 + $0x128] sm:$0xff]
    %v143 = vld [vmem:[#allocation2 + $0x130] sm:$0xff]
    %v144 = vld [vmem:[#allocation2 + $0x138] sm:$0xff]
    %v145 = vld [vmem:[#allocation2 + $0x140] sm:$0xff]
    %v146 = vld [vmem:[#allocation2 + $0x148] sm:$0xff]
    %v147 = vld [vmem:[#allocation2 + $0x150] sm:$0xff]
    %v148 = vld [vmem:[#allocation2 + $0x158] sm:$0xff]
    %v149 = vld [vmem:[#allocation2 + $0x160] sm:$0xff]
    %v150 = vld [vmem:[#allocation2 + $0x168] sm:$0xff]
    %v151 = vld [vmem:[#allocation2 + $0x170] sm:$0xff]
    %v152 = vld [vmem:[#allocation2 + $0x178] sm:$0xff]
    %v153 = vld [vmem:[#allocation2 + $0x180] sm:$0xff]
    %v154 = vld [vmem:[#allocation2 + $0x188] sm:$0xff]
    %v155 = vld [vmem:[#allocation2 + $0x190] sm:$0xff]
    %v156 = vld [vmem:[#allocation2 + $0x198] sm:$0xff]
    %v157 = vld [vmem:[#allocation2 + $0x1a0] sm:$0xff]
    %v158 = vld [vmem:[#allocation2 + $0x1a8] sm:$0xff]
    %v159 = vld [vmem:[#allocation2 + $0x1b0] sm:$0xff]
    %v160 = vld [vmem:[#allocation2 + $0x1b8] sm:$0xff]
    %v161 = vld [vmem:[#allocation2 + $0x1c0] sm:$0xff]
    %v162 = vld [vmem:[#allocation2 + $0x1c8] sm:$0xff]
    %v163 = vld [vmem:[#allocation2 + $0x1d0] sm:$0xff]
    %v164 = vld [vmem:[#allocation2 + $0x1d8] sm:$0xff]
    %v165 = vld [vmem:[#allocation2 + $0x1e0] sm:$0xff]
    %v166 = vld [vmem:[#allocation2 + $0x1e8] sm:$0xff]
    %v167 = vld [vmem:[#allocation2 + $0x1f0] sm:$0xff]
    %v168 = vld [vmem:[#allocation2 + $0x1f8] sm:$0xff]
    %v169 = vld [vmem:[#allocation2 + $0x200] sm:$0xff]
    %v170 = vld [vmem:[#allocation2 + $0x208] sm:$0xff]
    %v171 = vld [vmem:[#allocation2 + $0x210] sm:$0xff]
    %v172 = vld [vmem:[#allocation2 + $0x218] sm:$0xff]
    %v173 = vld [vmem:[#allocation2 + $0x220] sm:$0xff]
    %v174 = vld [vmem:[#allocation2 + $0x228] sm:$0xff]
    %v175 = vld [vmem:[#allocation2 + $0x230] sm:$0xff]
    %v176 = vld [vmem:[#allocation2 + $0x238] sm:$0xff]
    %v177 = vld [vmem:[#allocation2 + $0x240] sm:$0xff]
    %v178 = vld [vmem:[#allocation2 + $0x248] sm:$0xff]
    %v179 = vld [vmem:[#allocation2 + $0x250] sm:$0xff]
    %v180 = vld [vmem:[#allocation2 + $0x258] sm:$0xff]
    %v181 = vld [vmem:[#allocation2 + $0x260] sm:$0xff]
    %v182 = vld [vmem:[#allocation2 + $0x268] sm:$0xff]
    %v183 = vld [vmem:[#allocation2 + $0x270] sm:$0xff]
    %v184 = vld [vmem:[#allocation2 + $0x278] sm:$0xff]
    %v185 = vld [vmem:[#allocation2 + $0x280] sm:$0xff]
    %v186 = vld [vmem:[#allocation2 + $0x288] sm:$0xff]
    %v187 = vld [vmem:[#allocation2 + $0x290] sm:$0xff]
    %v188 = vld [vmem:[#allocation2 + $0x298] sm:$0xff]
    %v189 = vld [vmem:[#allocation2 + $0x2a0] sm:$0xff]
    %v190 = vld [vmem:[#allocation2 + $0x2a8] sm:$0xff]
    %v191 = vld [vmem:[#allocation2 + $0x2b0] sm:$0xff]
    %v192 = vld [vmem:[#allocation2 + $0x2b8] sm:$0xff]
    %v193 = vld [vmem:[#allocation2 + $0x2c0] sm:$0xff]
    %v194 = vld [vmem:[#allocation2 + $0x2c8] sm:$0xff]
    %v195 = vld [vmem:[#allocation2 + $0x2d0] sm:$0xff]
    %v196 = vld [vmem:[#allocation2 + $0x2d8] sm:$0xff]
    %v197 = vld [vmem:[#allocation2 + $0x2e0] sm:$0xff]
    %v198 = vld [vmem:[#allocation2 + $0x2e8] sm:$0xff]
    %v199 = vld [vmem:[#allocation2 + $0x2f0] sm:$0xff]
    %v200 = vld [vmem:[#allocation2 + $0x2f8] sm:$0xff]
    %v201 = vld [vmem:[#allocation2 + $0x300] sm:$0xff]
    %v202 = vld [vmem:[#allocation2 + $0x308] sm:$0xff]
    %v203 = vld [vmem:[#allocation2 + $0x310] sm:$0xff]
    %v204 = vld [vmem:[#allocation2 + $0x318] sm:$0xff]
    %v205 = vld [vmem:[#allocation2 + $0x320] sm:$0xff]
    %v206 = vld [vmem:[#allocation2 + $0x328] sm:$0xff]
    %v207 = vld [vmem:[#allocation2 + $0x330] sm:$0xff]
    %v208 = vld [vmem:[#allocation2 + $0x338] sm:$0xff]
    %v209 = vld [vmem:[#allocation2 + $0x340] sm:$0xff]
    %v210 = vld [vmem:[#allocation2 + $0x348] sm:$0xff]
    %v211 = vld [vmem:[#allocation2 + $0x350] sm:$0xff]
    %v212 = vld [vmem:[#allocation2 + $0x358] sm:$0xff]
    %v213 = vld [vmem:[#allocation2 + $0x360] sm:$0xff]
    %v214 = vld [vmem:[#allocation2 + $0x368] sm:$0xff]
    %v215 = vld [vmem:[#allocation2 + $0x370] sm:$0xff]
    %v216 = vld [vmem:[#allocation2 + $0x378] sm:$0xff]
    %v217 = vld [vmem:[#allocation2 + $0x380] sm:$0xff]
    %v218 = vld [vmem:[#allocation2 + $0x388] sm:$0xff]
    %v219 = vld [vmem:[#allocation2 + $0x390] sm:$0xff]
    %v220 = vld [vmem:[#allocation2 + $0x398] sm:$0xff]
    %v221 = vld [vmem:[#allocation2 + $0x3a0] sm:$0xff]
    %v222 = vld [vmem:[#allocation2 + $0x3a8] sm:$0xff]
    %v223 = vld [vmem:[#allocation2 + $0x3b0] sm:$0xff]
    %v224 = vld [vmem:[#allocation2 + $0x3b8] sm:$0xff]
    %v225 = vld [vmem:[#allocation2 + $0x3c0] sm:$0xff]
    %v226 = vld [vmem:[#allocation2 + $0x3c8] sm:$0xff]
    %v227 = vld [vmem:[#allocation2 + $0x3d0] sm:$0xff]
    %v228 = vld [vmem:[#allocation2 + $0x3d8] sm:$0xff]
    %v229 = vld [vmem:[#allocation2 + $0x3e0] sm:$0xff]
    %v230 = vld [vmem:[#allocation2 + $0x3e8] sm:$0xff]
    %v231 = vld [vmem:[#allocation2 + $0x3f0] sm:$0xff]
    %v232 = vld [vmem:[#allocation2 + $0x3f8] sm:$0xff]
    %v233 = vld [vmem:[#allocation2 + $0x400] sm:$0xff]
    %v234 = vld [vmem:[#allocation2 + $0x408] sm:$0xff]
    %v235 = vld [vmem:[#allocation2 + $0x410] sm:$0xff]
    %v236 = vld [vmem:[#allocation2 + $0x418] sm:$0xff]
    %v237 = vld [vmem:[#allocation2 + $0x420] sm:$0xff]
    %v238 = vld [vmem:[#allocation2 + $0x428] sm:$0xff]
    %v239 = vld [vmem:[#allocation2 + $0x430] sm:$0xff]
    %v240 = vld [vmem:[#allocation2 + $0x438] sm:$0xff]
    %v241 = vld [vmem:[#allocation2 + $0x440] sm:$0xff]
    %v242 = vld [vmem:[#allocation2 + $0x448] sm:$0xff]
    %v243 = vld [vmem:[#allocation2 + $0x450] sm:$0xff]
    %v244 = vld [vmem:[#allocation2 + $0x458] sm:$0xff]
    %v245 = vld [vmem:[#allocation2 + $0x460] sm:$0xff]
    %v246 = vld [vmem:[#allocation2 + $0x468] sm:$0xff]
    %v247 = vld [vmem:[#allocation2 + $0x470] sm:$0xff]
    %v248 = vld [vmem:[#allocation2 + $0x478] sm:$0xff]
    %v249 = vld [vmem:[#allocation2 + $0x480] sm:$0xff]
    %v250 = vld [vmem:[#allocation2 + $0x488] sm:$0xff]
    %v251 = vld [vmem:[#allocation2 + $0x490] sm:$0xff]
    %v252 = vld [vmem:[#allocation2 + $0x498] sm:$0xff]
    %v253 = vld [vmem:[#allocation2 + $0x4a0] sm:$0xff]
    %v254 = vld [vmem:[#allocation2 + $0x4a8] sm:$0xff]
    %v255 = vld [vmem:[#allocation2 + $0x4b0] sm:$0xff]
    %v256 = vld [vmem:[#allocation2 + $0x4b8] sm:$0xff]
    %v257 = vld [vmem:[#allocation2 + $0x4c0] sm:$0xff]
    %v258 = vld [vmem:[#allocation2 + $0x4c8] sm:$0xff]
    %v259 = vld [vmem:[#allocation2 + $0x4d0] sm:$0xff]
    %v260 = vld [vmem:[#allocation2 + $0x4d8] sm:$0xff]
    %v261 = vld [vmem:[#allocation2 + $0x4e0] sm:$0xff]
    %v262 = vld [vmem:[#allocation2 + $0x4e8] sm:$0xff]
    %v263 = vld [vmem:[#allocation2 + $0x4f0] sm:$0xff]
    %v264 = vld [vmem:[#allocation2 + $0x4f8] sm:$0xff]
    %v265 = vld [vmem:[#allocation2 + $0x500] sm:$0xff]
    %v266 = vld [vmem:[#allocation2 + $0x508] sm:$0xff]
    %v267 = vld [vmem:[#allocation2 + $0x510] sm:$0xff]
    %v268 = vld [vmem:[#allocation2 + $0x518] sm:$0xff]
    %v269 = vld [vmem:[#allocation2 + $0x520] sm:$0xff]
    %v270 = vld [vmem:[#allocation2 + $0x528] sm:$0xff]
    %v271 = vld [vmem:[#allocation2 + $0x530] sm:$0xff]
    %v272 = vld [vmem:[#allocation2 + $0x538] sm:$0xff]
    %v273 = vld [vmem:[#allocation2 + $0x540] sm:$0xff]
    %v274 = vld [vmem:[#allocation2 + $0x548] sm:$0xff]
    %v275 = vld [vmem:[#allocation2 + $0x550] sm:$0xff]
    %v276 = vld [vmem:[#allocation2 + $0x558] sm:$0xff]
    %v277 = vld [vmem:[#allocation2 + $0x560] sm:$0xff]
    %v278 = vld [vmem:[#allocation2 + $0x568] sm:$0xff]
    %v279 = vld [vmem:[#allocation2 + $0x570] sm:$0xff]
    %v280 = vld [vmem:[#allocation2 + $0x578] sm:$0xff]
    %v281 = vld [vmem:[#allocation2 + $0x580] sm:$0xff]
    %v282 = vld [vmem:[#allocation2 + $0x588] sm:$0xff]
    %v283 = vld [vmem:[#allocation2 + $0x590] sm:$0xff]
    %v284 = vld [vmem:[#allocation2 + $0x598] sm:$0xff]
    %v285 = vld [vmem:[#allocation2 + $0x5a0] sm:$0xff]
    %v286 = vld [vmem:[#allocation2 + $0x5a8] sm:$0xff]
    %v287 = vld [vmem:[#allocation2 + $0x5b0] sm:$0xff]
    %v288 = vld [vmem:[#allocation2 + $0x5b8] sm:$0xff]
    %v289 = vld [vmem:[#allocation2 + $0x5c0] sm:$0xff]
    %v290 = vld [vmem:[#allocation2 + $0x5c8] sm:$0xff]
    %v291 = vld [vmem:[#allocation2 + $0x5d0] sm:$0xff]
    %v292 = vld [vmem:[#allocation2 + $0x5d8] sm:$0xff]
    %v293 = vld [vmem:[#allocation2 + $0x5e0] sm:$0xff]
    %v294 = vld [vmem:[#allocation2 + $0x5e8] sm:$0xff]
    %v295 = vld [vmem:[#allocation2 + $0x5f0] sm:$0xff]
    %v296 = vld [vmem:[#allocation2 + $0x5f8] sm:$0xff]
    %v297 = vld [vmem:[#allocation2 + $0x600] sm:$0xff]
    %v298 = vld [vmem:[#allocation2 + $0x608] sm:$0xff]
    %v299 = vld [vmem:[#allocation2 + $0x610] sm:$0xff]
    %v300 = vld [vmem:[#allocation2 + $0x618] sm:$0xff]
    %v301 = vld [vmem:[#allocation2 + $0x620] sm:$0xff]
    %v302 = vld [vmem:[#allocation2 + $0x628] sm:$0xff]
    %v303 = vld [vmem:[#allocation2 + $0x630] sm:$0xff]
    %v304 = vld [vmem:[#allocation2 + $0x638] sm:$0xff]
    %v305 = vld [vmem:[#allocation2 + $0x640] sm:$0xff]
    %v306 = vld [vmem:[#allocation2 + $0x648] sm:$0xff]
    %v307 = vld [vmem:[#allocation2 + $0x650] sm:$0xff]
    %v308 = vld [vmem:[#allocation2 + $0x658] sm:$0xff]
    %v309 = vld [vmem:[#allocation2 + $0x660] sm:$0xff]
    %v310 = vld [vmem:[#allocation2 + $0x668] sm:$0xff]
    %v311 = vld [vmem:[#allocation2 + $0x670] sm:$0xff]
    %v312 = vld [vmem:[#allocation2 + $0x678] sm:$0xff]
    %v313 = vld [vmem:[#allocation2 + $0x680] sm:$0xff]
    %v314 = vld [vmem:[#allocation2 + $0x688] sm:$0xff]
    %v315 = vld [vmem:[#allocation2 + $0x690] sm:$0xff]
    %v316 = vld [vmem:[#allocation2 + $0x698] sm:$0xff]
    %v317 = vld [vmem:[#allocation2 + $0x6a0] sm:$0xff]
    %v318 = vld [vmem:[#allocation2 + $0x6a8] sm:$0xff]
    %v319 = vld [vmem:[#allocation2 + $0x6b0] sm:$0xff]
    %v320 = vld [vmem:[#allocation2 + $0x6b8] sm:$0xff]
    %v321 = vld [vmem:[#allocation2 + $0x6c0] sm:$0xff]
    %v322 = vld [vmem:[#allocation2 + $0x6c8] sm:$0xff]
    %v323 = vld [vmem:[#allocation2 + $0x6d0] sm:$0xff]
    %v324 = vld [vmem:[#allocation2 + $0x6d8] sm:$0xff]
    %v325 = vld [vmem:[#allocation2 + $0x6e0] sm:$0xff]
    %v326 = vld [vmem:[#allocation2 + $0x6e8] sm:$0xff]
    %v327 = vld [vmem:[#allocation2 + $0x6f0] sm:$0xff]
    %v328 = vld [vmem:[#allocation2 + $0x6f8] sm:$0xff]
    %v329 = vld [vmem:[#allocation2 + $0x700] sm:$0xff]
    %v330 = vld [vmem:[#allocation2 + $0x708] sm:$0xff]
    %v331 = vld [vmem:[#allocation2 + $0x710] sm:$0xff]
    %v332 = vld [vmem:[#allocation2 + $0x718] sm:$0xff]
    %v333 = vld [vmem:[#allocation2 + $0x720] sm:$0xff]
    %v334 = vld [vmem:[#allocation2 + $0x728] sm:$0xff]
    %v335 = vld [vmem:[#allocation2 + $0x730] sm:$0xff]
    %v336 = vld [vmem:[#allocation2 + $0x738] sm:$0xff]
    %v337 = vld [vmem:[#allocation2 + $0x740] sm:$0xff]
    %v338 = vld [vmem:[#allocation2 + $0x748] sm:$0xff]
    %v339 = vld [vmem:[#allocation2 + $0x750] sm:$0xff]
    %v340 = vld [vmem:[#allocation2 + $0x758] sm:$0xff]
    %v341 = vld [vmem:[#allocation2 + $0x760] sm:$0xff]
    %v342 = vld [vmem:[#allocation2 + $0x768] sm:$0xff]
    %v343 = vld [vmem:[#allocation2 + $0x770] sm:$0xff]
    %v344 = vld [vmem:[#allocation2 + $0x778] sm:$0xff]
    %v345 = vld [vmem:[#allocation2 + $0x780] sm:$0xff]
    %v346 = vld [vmem:[#allocation2 + $0x788] sm:$0xff]
    %v347 = vld [vmem:[#allocation2 + $0x790] sm:$0xff]
    %v348 = vld [vmem:[#allocation2 + $0x798] sm:$0xff]
    %v349 = vld [vmem:[#allocation2 + $0x7a0] sm:$0xff]
    %v350 = vld [vmem:[#allocation2 + $0x7a8] sm:$0xff]
    %v351 = vld [vmem:[#allocation2 + $0x7b0] sm:$0xff]
    %v352 = vld [vmem:[#allocation2 + $0x7b8] sm:$0xff]
    %v353 = vld [vmem:[#allocation2 + $0x7c0] sm:$0xff]
    %v354 = vld [vmem:[#allocation2 + $0x7c8] sm:$0xff]
    %v355 = vld [vmem:[#allocation2 + $0x7d0] sm:$0xff]
    %v356 = vld [vmem:[#allocation2 + $0x7d8] sm:$0xff]
    %v357 = vld [vmem:[#allocation2 + $0x7e0] sm:$0xff]
    %v358 = vld [vmem:[#allocation2 + $0x7e8] sm:$0xff]
    %v359 = vld [vmem:[#allocation2 + $0x7f0] sm:$0xff]
    %v360 = vld [vmem:[#allocation2 + $0x7f8] sm:$0xff]
    %v361 = vld [vmem:[%s2] sm:$0xf]
    %v363 = vperm.slane %v361, 0
    %v364 = vperm.slane %v361, 1
    %v365 = vperm.slane %v361, 2
    %v366 = vperm.slane %v361, 3
    %v627 = vunpack.c.l.b16 %v105
    %v628 = vunpack.c.h.b16 %v105
    %v629 = vunpack.c.l.b16 %v106
    %v630 = vunpack.c.h.b16 %v106
    %v631 = vunpack.c.l.b16 %v107
    %v632 = vunpack.c.h.b16 %v107
    %v633 = vunpack.c.l.b16 %v108
    %v634 = vunpack.c.h.b16 %v108
    %v635 = vunpack.c.l.b16 %v109
    %v636 = vunpack.c.h.b16 %v109
    %v637 = vunpack.c.l.b16 %v110
    %v638 = vunpack.c.h.b16 %v110
    %v639 = vunpack.c.l.b16 %v111
    %v640 = vunpack.c.h.b16 %v111
    %v641 = vunpack.c.l.b16 %v112
    %v642 = vunpack.c.h.b16 %v112
    %v643 = vunpack.c.l.b16 %v113
    %v644 = vunpack.c.h.b16 %v113
    %v645 = vunpack.c.l.b16 %v114
    %v646 = vunpack.c.h.b16 %v114
    %v647 = vunpack.c.l.b16 %v115
    %v648 = vunpack.c.h.b16 %v115
    %v649 = vunpack.c.l.b16 %v116
    %v650 = vunpack.c.h.b16 %v116
    %v651 = vunpack.c.l.b16 %v117
    %v652 = vunpack.c.h.b16 %v117
    %v653 = vunpack.c.l.b16 %v118
    %v654 = vunpack.c.h.b16 %v118
    %v655 = vunpack.c.l.b16 %v119
    %v656 = vunpack.c.h.b16 %v119
    %v657 = vunpack.c.l.b16 %v120
    %v658 = vunpack.c.h.b16 %v120
    %v659 = vunpack.c.l.b16 %v121
    %v660 = vunpack.c.h.b16 %v121
    %v661 = vunpack.c.l.b16 %v122
    %v662 = vunpack.c.h.b16 %v122
    %v663 = vunpack.c.l.b16 %v123
    %v664 = vunpack.c.h.b16 %v123
    %v665 = vunpack.c.l.b16 %v124
    %v666 = vunpack.c.h.b16 %v124
    %v667 = vunpack.c.l.b16 %v125
    %v668 = vunpack.c.h.b16 %v125
    %v669 = vunpack.c.l.b16 %v126
    %v670 = vunpack.c.h.b16 %v126
    %v671 = vunpack.c.l.b16 %v127
    %v672 = vunpack.c.h.b16 %v127
    %v673 = vunpack.c.l.b16 %v128
    %v674 = vunpack.c.h.b16 %v128
    %v675 = vunpack.c.l.b16 %v129
    %v676 = vunpack.c.h.b16 %v129
    %v677 = vunpack.c.l.b16 %v130
    %v678 = vunpack.c.h.b16 %v130
    %v679 = vunpack.c.l.b16 %v131
    %v680 = vunpack.c.h.b16 %v131
    %v681 = vunpack.c.l.b16 %v132
    %v682 = vunpack.c.h.b16 %v132
    %v683 = vunpack.c.l.b16 %v133
    %v684 = vunpack.c.h.b16 %v133
    %v685 = vunpack.c.l.b16 %v134
    %v686 = vunpack.c.h.b16 %v134
    %v687 = vunpack.c.l.b16 %v135
    %v688 = vunpack.c.h.b16 %v135
    %v689 = vunpack.c.l.b16 %v136
    %v690 = vunpack.c.h.b16 %v136
    %v691 = vunpack.c.l.b16 %v137
    %v692 = vunpack.c.h.b16 %v137
    %v693 = vunpack.c.l.b16 %v138
    %v694 = vunpack.c.h.b16 %v138
    %v695 = vunpack.c.l.b16 %v139
    %v696 = vunpack.c.h.b16 %v139
    %v697 = vunpack.c.l.b16 %v140
    %v698 = vunpack.c.h.b16 %v140
    %v699 = vunpack.c.l.b16 %v141
    %v700 = vunpack.c.h.b16 %v141
    %v701 = vunpack.c.l.b16 %v142
    %v702 = vunpack.c.h.b16 %v142
    %v703 = vunpack.c.l.b16 %v143
    %v704 = vunpack.c.h.b16 %v143
    %v705 = vunpack.c.l.b16 %v144
    %v706 = vunpack.c.h.b16 %v144
    %v707 = vunpack.c.l.b16 %v145
    %v708 = vunpack.c.h.b16 %v145
    %v709 = vunpack.c.l.b16 %v146
    %v710 = vunpack.c.h.b16 %v146
    %v711 = vunpack.c.l.b16 %v147
    %v712 = vunpack.c.h.b16 %v147
    %v713 = vunpack.c.l.b16 %v148
    %v714 = vunpack.c.h.b16 %v148
    %v715 = vunpack.c.l.b16 %v149
    %v716 = vunpack.c.h.b16 %v149
    %v717 = vunpack.c.l.b16 %v150
    %v718 = vunpack.c.h.b16 %v150
    %v719 = vunpack.c.l.b16 %v151
    %v720 = vunpack.c.h.b16 %v151
    %v721 = vunpack.c.l.b16 %v152
    %v722 = vunpack.c.h.b16 %v152
    %v723 = vunpack.c.l.b16 %v153
    %v724 = vunpack.c.h.b16 %v153
    %v725 = vunpack.c.l.b16 %v154
    %v726 = vunpack.c.h.b16 %v154
    %v727 = vunpack.c.l.b16 %v155
    %v728 = vunpack.c.h.b16 %v155
    %v729 = vunpack.c.l.b16 %v156
    %v730 = vunpack.c.h.b16 %v156
    %v731 = vunpack.c.l.b16 %v157
    %v732 = vunpack.c.h.b16 %v157
    %v733 = vunpack.c.l.b16 %v158
    %v734 = vunpack.c.h.b16 %v158
    %v735 = vunpack.c.l.b16 %v159
    %v736 = vunpack.c.h.b16 %v159
    %v737 = vunpack.c.l.b16 %v160
    %v738 = vunpack.c.h.b16 %v160
    %v739 = vunpack.c.l.b16 %v161
    %v740 = vunpack.c.h.b16 %v161
    %v741 = vunpack.c.l.b16 %v162
    %v742 = vunpack.c.h.b16 %v162
    %v743 = vunpack.c.l.b16 %v163
    %v744 = vunpack.c.h.b16 %v163
    %v745 = vunpack.c.l.b16 %v164
    %v746 = vunpack.c.h.b16 %v164
    %v747 = vunpack.c.l.b16 %v165
    %v748 = vunpack.c.h.b16 %v165
    %v749 = vunpack.c.l.b16 %v166
    %v750 = vunpack.c.h.b16 %v166
    %v751 = vunpack.c.l.b16 %v167
    %v752 = vunpack.c.h.b16 %v167
    %v753 = vunpack.c.l.b16 %v168
    %v754 = vunpack.c.h.b16 %v168
    %v755 = vunpack.c.l.b16 %v169
    %v756 = vunpack.c.h.b16 %v169
    %v757 = vunpack.c.l.b16 %v170
    %v758 = vunpack.c.h.b16 %v170
    %v759 = vunpack.c.l.b16 %v171
    %v760 = vunpack.c.h.b16 %v171
    %v761 = vunpack.c.l.b16 %v172
    %v762 = vunpack.c.h.b16 %v172
    %v763 = vunpack.c.l.b16 %v173
    %v764 = vunpack.c.h.b16 %v173
    %v765 = vunpack.c.l.b16 %v174
    %v766 = vunpack.c.h.b16 %v174
    %v767 = vunpack.c.l.b16 %v175
    %v768 = vunpack.c.h.b16 %v175
    %v769 = vunpack.c.l.b16 %v176
    %v770 = vunpack.c.h.b16 %v176
    %v771 = vunpack.c.l.b16 %v177
    %v772 = vunpack.c.h.b16 %v177
    %v773 = vunpack.c.l.b16 %v178
    %v774 = vunpack.c.h.b16 %v178
    %v775 = vunpack.c.l.b16 %v179
    %v776 = vunpack.c.h.b16 %v179
    %v777 = vunpack.c.l.b16 %v180
    %v778 = vunpack.c.h.b16 %v180
    %v779 = vunpack.c.l.b16 %v181
    %v780 = vunpack.c.h.b16 %v181
    %v781 = vunpack.c.l.b16 %v182
    %v782 = vunpack.c.h.b16 %v182
    %v783 = vunpack.c.l.b16 %v183
    %v784 = vunpack.c.h.b16 %v183
    %v785 = vunpack.c.l.b16 %v184
    %v786 = vunpack.c.h.b16 %v184
    %v787 = vunpack.c.l.b16 %v185
    %v788 = vunpack.c.h.b16 %v185
    %v789 = vunpack.c.l.b16 %v186
    %v790 = vunpack.c.h.b16 %v186
    %v791 = vunpack.c.l.b16 %v187
    %v792 = vunpack.c.h.b16 %v187
    %v793 = vunpack.c.l.b16 %v188
    %v794 = vunpack.c.h.b16 %v188
    %v795 = vunpack.c.l.b16 %v189
    %v796 = vunpack.c.h.b16 %v189
    %v797 = vunpack.c.l.b16 %v190
    %v798 = vunpack.c.h.b16 %v190
    %v799 = vunpack.c.l.b16 %v191
    %v800 = vunpack.c.h.b16 %v191
    %v801 = vunpack.c.l.b16 %v192
    %v802 = vunpack.c.h.b16 %v192
    %v803 = vunpack.c.l.b16 %v193
    %v804 = vunpack.c.h.b16 %v193
    %v805 = vunpack.c.l.b16 %v194
    %v806 = vunpack.c.h.b16 %v194
    %v807 = vunpack.c.l.b16 %v195
    %v808 = vunpack.c.h.b16 %v195
    %v809 = vunpack.c.l.b16 %v196
    %v810 = vunpack.c.h.b16 %v196
    %v811 = vunpack.c.l.b16 %v197
    %v812 = vunpack.c.h.b16 %v197
    %v813 = vunpack.c.l.b16 %v198
    %v814 = vunpack.c.h.b16 %v198
    %v815 = vunpack.c.l.b16 %v199
    %v816 = vunpack.c.h.b16 %v199
    %v817 = vunpack.c.l.b16 %v200
    %v818 = vunpack.c.h.b16 %v200
    %v819 = vunpack.c.l.b16 %v201
    %v820 = vunpack.c.h.b16 %v201
    %v821 = vunpack.c.l.b16 %v202
    %v822 = vunpack.c.h.b16 %v202
    %v823 = vunpack.c.l.b16 %v203
    %v824 = vunpack.c.h.b16 %v203
    %v825 = vunpack.c.l.b16 %v204
    %v826 = vunpack.c.h.b16 %v204
    %v827 = vunpack.c.l.b16 %v205
    %v828 = vunpack.c.h.b16 %v205
    %v829 = vunpack.c.l.b16 %v206
    %v830 = vunpack.c.h.b16 %v206
    %v831 = vunpack.c.l.b16 %v207
    %v832 = vunpack.c.h.b16 %v207
    %v833 = vunpack.c.l.b16 %v208
    %v834 = vunpack.c.h.b16 %v208
    %v835 = vunpack.c.l.b16 %v209
    %v836 = vunpack.c.h.b16 %v209
    %v837 = vunpack.c.l.b16 %v210
    %v838 = vunpack.c.h.b16 %v210
    %v839 = vunpack.c.l.b16 %v211
    %v840 = vunpack.c.h.b16 %v211
    %v841 = vunpack.c.l.b16 %v212
    %v842 = vunpack.c.h.b16 %v212
    %v843 = vunpack.c.l.b16 %v213
    %v844 = vunpack.c.h.b16 %v213
    %v845 = vunpack.c.l.b16 %v214
    %v846 = vunpack.c.h.b16 %v214
    %v847 = vunpack.c.l.b16 %v215
    %v848 = vunpack.c.h.b16 %v215
    %v849 = vunpack.c.l.b16 %v216
    %v850 = vunpack.c.h.b16 %v216
    %v851 = vunpack.c.l.b16 %v217
    %v852 = vunpack.c.h.b16 %v217
    %v853 = vunpack.c.l.b16 %v218
    %v854 = vunpack.c.h.b16 %v218
    %v855 = vunpack.c.l.b16 %v219
    %v856 = vunpack.c.h.b16 %v219
    %v857 = vunpack.c.l.b16 %v220
    %v858 = vunpack.c.h.b16 %v220
    %v859 = vunpack.c.l.b16 %v221
    %v860 = vunpack.c.h.b16 %v221
    %v861 = vunpack.c.l.b16 %v222
    %v862 = vunpack.c.h.b16 %v222
    %v863 = vunpack.c.l.b16 %v223
    %v864 = vunpack.c.h.b16 %v223
    %v865 = vunpack.c.l.b16 %v224
    %v866 = vunpack.c.h.b16 %v224
    %v867 = vunpack.c.l.b16 %v225
    %v868 = vunpack.c.h.b16 %v225
    %v869 = vunpack.c.l.b16 %v226
    %v870 = vunpack.c.h.b16 %v226
    %v871 = vunpack.c.l.b16 %v227
    %v872 = vunpack.c.h.b16 %v227
    %v873 = vunpack.c.l.b16 %v228
    %v874 = vunpack.c.h.b16 %v228
    %v875 = vunpack.c.l.b16 %v229
    %v876 = vunpack.c.h.b16 %v229
    %v877 = vunpack.c.l.b16 %v230
    %v878 = vunpack.c.h.b16 %v230
    %v879 = vunpack.c.l.b16 %v231
    %v880 = vunpack.c.h.b16 %v231
    %v881 = vunpack.c.l.b16 %v232
    %v882 = vunpack.c.h.b16 %v232
    %v883 = vunpack.c.l.b16 %v233
    %v884 = vunpack.c.h.b16 %v233
    %v885 = vunpack.c.l.b16 %v234
    %v886 = vunpack.c.h.b16 %v234
    %v887 = vunpack.c.l.b16 %v235
    %v888 = vunpack.c.h.b16 %v235
    %v889 = vunpack.c.l.b16 %v236
    %v890 = vunpack.c.h.b16 %v236
    %v891 = vunpack.c.l.b16 %v237
    %v892 = vunpack.c.h.b16 %v237
    %v893 = vunpack.c.l.b16 %v238
    %v894 = vunpack.c.h.b16 %v238
    %v895 = vunpack.c.l.b16 %v239
    %v896 = vunpack.c.h.b16 %v239
    %v897 = vunpack.c.l.b16 %v240
    %v898 = vunpack.c.h.b16 %v240
    %v899 = vunpack.c.l.b16 %v241
    %v900 = vunpack.c.h.b16 %v241
    %v901 = vunpack.c.l.b16 %v242
    %v902 = vunpack.c.h.b16 %v242
    %v903 = vunpack.c.l.b16 %v243
    %v904 = vunpack.c.h.b16 %v243
    %v905 = vunpack.c.l.b16 %v244
    %v906 = vunpack.c.h.b16 %v244
    %v907 = vunpack.c.l.b16 %v245
    %v908 = vunpack.c.h.b16 %v245
    %v909 = vunpack.c.l.b16 %v246
    %v910 = vunpack.c.h.b16 %v246
    %v911 = vunpack.c.l.b16 %v247
    %v912 = vunpack.c.h.b16 %v247
    %v913 = vunpack.c.l.b16 %v248
    %v914 = vunpack.c.h.b16 %v248
    %v915 = vunpack.c.l.b16 %v249
    %v916 = vunpack.c.h.b16 %v249
    %v917 = vunpack.c.l.b16 %v250
    %v918 = vunpack.c.h.b16 %v250
    %v919 = vunpack.c.l.b16 %v251
    %v920 = vunpack.c.h.b16 %v251
    %v921 = vunpack.c.l.b16 %v252
    %v922 = vunpack.c.h.b16 %v252
    %v923 = vunpack.c.l.b16 %v253
    %v924 = vunpack.c.h.b16 %v253
    %v925 = vunpack.c.l.b16 %v254
    %v926 = vunpack.c.h.b16 %v254
    %v927 = vunpack.c.l.b16 %v255
    %v928 = vunpack.c.h.b16 %v255
    %v929 = vunpack.c.l.b16 %v256
    %v930 = vunpack.c.h.b16 %v256
    %v931 = vunpack.c.l.b16 %v257
    %v932 = vunpack.c.h.b16 %v257
    %v933 = vunpack.c.l.b16 %v258
    %v934 = vunpack.c.h.b16 %v258
    %v935 = vunpack.c.l.b16 %v259
    %v936 = vunpack.c.h.b16 %v259
    %v937 = vunpack.c.l.b16 %v260
    %v938 = vunpack.c.h.b16 %v260
    %v939 = vunpack.c.l.b16 %v261
    %v940 = vunpack.c.h.b16 %v261
    %v941 = vunpack.c.l.b16 %v262
    %v942 = vunpack.c.h.b16 %v262
    %v943 = vunpack.c.l.b16 %v263
    %v944 = vunpack.c.h.b16 %v263
    %v945 = vunpack.c.l.b16 %v264
    %v946 = vunpack.c.h.b16 %v264
    %v947 = vunpack.c.l.b16 %v265
    %v948 = vunpack.c.h.b16 %v265
    %v949 = vunpack.c.l.b16 %v266
    %v950 = vunpack.c.h.b16 %v266
    %v951 = vunpack.c.l.b16 %v267
    %v952 = vunpack.c.h.b16 %v267
    %v953 = vunpack.c.l.b16 %v268
    %v954 = vunpack.c.h.b16 %v268
    %v955 = vunpack.c.l.b16 %v269
    %v956 = vunpack.c.h.b16 %v269
    %v957 = vunpack.c.l.b16 %v270
    %v958 = vunpack.c.h.b16 %v270
    %v959 = vunpack.c.l.b16 %v271
    %v960 = vunpack.c.h.b16 %v271
    %v961 = vunpack.c.l.b16 %v272
    %v962 = vunpack.c.h.b16 %v272
    %v963 = vunpack.c.l.b16 %v273
    %v964 = vunpack.c.h.b16 %v273
    %v965 = vunpack.c.l.b16 %v274
    %v966 = vunpack.c.h.b16 %v274
    %v967 = vunpack.c.l.b16 %v275
    %v968 = vunpack.c.h.b16 %v275
    %v969 = vunpack.c.l.b16 %v276
    %v970 = vunpack.c.h.b16 %v276
    %v971 = vunpack.c.l.b16 %v277
    %v972 = vunpack.c.h.b16 %v277
    %v973 = vunpack.c.l.b16 %v278
    %v974 = vunpack.c.h.b16 %v278
    %v975 = vunpack.c.l.b16 %v279
    %v976 = vunpack.c.h.b16 %v279
    %v977 = vunpack.c.l.b16 %v280
    %v978 = vunpack.c.h.b16 %v280
    %v979 = vunpack.c.l.b16 %v281
    %v980 = vunpack.c.h.b16 %v281
    %v981 = vunpack.c.l.b16 %v282
    %v982 = vunpack.c.h.b16 %v282
    %v983 = vunpack.c.l.b16 %v283
    %v984 = vunpack.c.h.b16 %v283
    %v985 = vunpack.c.l.b16 %v284
    %v986 = vunpack.c.h.b16 %v284
    %v987 = vunpack.c.l.b16 %v285
    %v988 = vunpack.c.h.b16 %v285
    %v989 = vunpack.c.l.b16 %v286
    %v990 = vunpack.c.h.b16 %v286
    %v991 = vunpack.c.l.b16 %v287
    %v992 = vunpack.c.h.b16 %v287
    %v993 = vunpack.c.l.b16 %v288
    %v994 = vunpack.c.h.b16 %v288
    %v995 = vunpack.c.l.b16 %v289
    %v996 = vunpack.c.h.b16 %v289
    %v997 = vunpack.c.l.b16 %v290
    %v998 = vunpack.c.h.b16 %v290
    %v999 = vunpack.c.l.b16 %v291
    %v1000 = vunpack.c.h.b16 %v291
    %v1001 = vunpack.c.l.b16 %v292
    %v1002 = vunpack.c.h.b16 %v292
    %v1003 = vunpack.c.l.b16 %v293
    %v1004 = vunpack.c.h.b16 %v293
    %v1005 = vunpack.c.l.b16 %v294
    %v1006 = vunpack.c.h.b16 %v294
    %v1007 = vunpack.c.l.b16 %v295
    %v1008 = vunpack.c.h.b16 %v295
    %v1009 = vunpack.c.l.b16 %v296
    %v1010 = vunpack.c.h.b16 %v296
    %v1011 = vunpack.c.l.b16 %v297
    %v1012 = vunpack.c.h.b16 %v297
    %v1013 = vunpack.c.l.b16 %v298
    %v1014 = vunpack.c.h.b16 %v298
    %v1015 = vunpack.c.l.b16 %v299
    %v1016 = vunpack.c.h.b16 %v299
    %v1017 = vunpack.c.l.b16 %v300
    %v1018 = vunpack.c.h.b16 %v300
    %v1019 = vunpack.c.l.b16 %v301
    %v1020 = vunpack.c.h.b16 %v301
    %v1021 = vunpack.c.l.b16 %v302
    %v1022 = vunpack.c.h.b16 %v302
    %v1023 = vunpack.c.l.b16 %v303
    %v1024 = vunpack.c.h.b16 %v303
    %v1025 = vunpack.c.l.b16 %v304
    %v1026 = vunpack.c.h.b16 %v304
    %v1027 = vunpack.c.l.b16 %v305
    %v1028 = vunpack.c.h.b16 %v305
    %v1029 = vunpack.c.l.b16 %v306
    %v1030 = vunpack.c.h.b16 %v306
    %v1031 = vunpack.c.l.b16 %v307
    %v1032 = vunpack.c.h.b16 %v307
    %v1033 = vunpack.c.l.b16 %v308
    %v1034 = vunpack.c.h.b16 %v308
    %v1035 = vunpack.c.l.b16 %v309
    %v1036 = vunpack.c.h.b16 %v309
    %v1037 = vunpack.c.l.b16 %v310
    %v1038 = vunpack.c.h.b16 %v310
    %v1039 = vunpack.c.l.b16 %v311
    %v1040 = vunpack.c.h.b16 %v311
    %v1041 = vunpack.c.l.b16 %v312
    %v1042 = vunpack.c.h.b16 %v312
    %v1043 = vunpack.c.l.b16 %v313
    %v1044 = vunpack.c.h.b16 %v313
    %v1045 = vunpack.c.l.b16 %v314
    %v1046 = vunpack.c.h.b16 %v314
    %v1047 = vunpack.c.l.b16 %v315
    %v1048 = vunpack.c.h.b16 %v315
    %v1049 = vunpack.c.l.b16 %v316
    %v1050 = vunpack.c.h.b16 %v316
    %v1051 = vunpack.c.l.b16 %v317
    %v1052 = vunpack.c.h.b16 %v317
    %v1053 = vunpack.c.l.b16 %v318
    %v1054 = vunpack.c.h.b16 %v318
    %v1055 = vunpack.c.l.b16 %v319
    %v1056 = vunpack.c.h.b16 %v319
    %v1057 = vunpack.c.l.b16 %v320
    %v1058 = vunpack.c.h.b16 %v320
    %v1059 = vunpack.c.l.b16 %v321
    %v1060 = vunpack.c.h.b16 %v321
    %v1061 = vunpack.c.l.b16 %v322
    %v1062 = vunpack.c.h.b16 %v322
    %v1063 = vunpack.c.l.b16 %v323
    %v1064 = vunpack.c.h.b16 %v323
    %v1065 = vunpack.c.l.b16 %v324
    %v1066 = vunpack.c.h.b16 %v324
    %v1067 = vunpack.c.l.b16 %v325
    %v1068 = vunpack.c.h.b16 %v325
    %v1069 = vunpack.c.l.b16 %v326
    %v1070 = vunpack.c.h.b16 %v326
    %v1071 = vunpack.c.l.b16 %v327
    %v1072 = vunpack.c.h.b16 %v327
    %v1073 = vunpack.c.l.b16 %v328
    %v1074 = vunpack.c.h.b16 %v328
    %v1075 = vunpack.c.l.b16 %v329
    %v1076 = vunpack.c.h.b16 %v329
    %v1077 = vunpack.c.l.b16 %v330
    %v1078 = vunpack.c.h.b16 %v330
    %v1079 = vunpack.c.l.b16 %v331
    %v1080 = vunpack.c.h.b16 %v331
    %v1081 = vunpack.c.l.b16 %v332
    %v1082 = vunpack.c.h.b16 %v332
    %v1083 = vunpack.c.l.b16 %v333
    %v1084 = vunpack.c.h.b16 %v333
    %v1085 = vunpack.c.l.b16 %v334
    %v1086 = vunpack.c.h.b16 %v334
    %v1087 = vunpack.c.l.b16 %v335
    %v1088 = vunpack.c.h.b16 %v335
    %v1089 = vunpack.c.l.b16 %v336
    %v1090 = vunpack.c.h.b16 %v336
    %v1091 = vunpack.c.l.b16 %v337
    %v1092 = vunpack.c.h.b16 %v337
    %v1093 = vunpack.c.l.b16 %v338
    %v1094 = vunpack.c.h.b16 %v338
    %v1095 = vunpack.c.l.b16 %v339
    %v1096 = vunpack.c.h.b16 %v339
    %v1097 = vunpack.c.l.b16 %v340
    %v1098 = vunpack.c.h.b16 %v340
    %v1099 = vunpack.c.l.b16 %v341
    %v1100 = vunpack.c.h.b16 %v341
    %v1101 = vunpack.c.l.b16 %v342
    %v1102 = vunpack.c.h.b16 %v342
    %v1103 = vunpack.c.l.b16 %v343
    %v1104 = vunpack.c.h.b16 %v343
    %v1105 = vunpack.c.l.b16 %v344
    %v1106 = vunpack.c.h.b16 %v344
    %v1107 = vunpack.c.l.b16 %v345
    %v1108 = vunpack.c.h.b16 %v345
    %v1109 = vunpack.c.l.b16 %v346
    %v1110 = vunpack.c.h.b16 %v346
    %v1111 = vunpack.c.l.b16 %v347
    %v1112 = vunpack.c.h.b16 %v347
    %v1113 = vunpack.c.l.b16 %v348
    %v1114 = vunpack.c.h.b16 %v348
    %v1115 = vunpack.c.l.b16 %v349
    %v1116 = vunpack.c.h.b16 %v349
    %v1117 = vunpack.c.l.b16 %v350
    %v1118 = vunpack.c.h.b16 %v350
    %v1119 = vunpack.c.l.b16 %v351
    %v1120 = vunpack.c.h.b16 %v351
    %v1121 = vunpack.c.l.b16 %v352
    %v1122 = vunpack.c.h.b16 %v352
    %v1123 = vunpack.c.l.b16 %v353
    %v1124 = vunpack.c.h.b16 %v353
    %v1125 = vunpack.c.l.b16 %v354
    %v1126 = vunpack.c.h.b16 %v354
    %v1127 = vunpack.c.l.b16 %v355
    %v1128 = vunpack.c.h.b16 %v355
    %v1129 = vunpack.c.l.b16 %v356
    %v1130 = vunpack.c.h.b16 %v356
    %v1131 = vunpack.c.l.b16 %v357
    %v1132 = vunpack.c.h.b16 %v357
    %v1133 = vunpack.c.l.b16 %v358
    %v1134 = vunpack.c.h.b16 %v358
    %v1135 = vunpack.c.l.b16 %v359
    %v1136 = vunpack.c.h.b16 %v359
    %v1137 = vunpack.c.l.b16 %v360
    %v1138 = vunpack.c.h.b16 %v360
    %v1139 = vpack.c.b16 %v631, %v627
    %v1140 = vpack.c.b16 %v632, %v628
    %v1141 = vpack.c.b16 %v633, %v629
    %v1142 = vpack.c.b16 %v634, %v630
    %v1143 = vpack.c.b16 %v639, %v635
    %v1144 = vpack.c.b16 %v640, %v636
    %v1145 = vpack.c.b16 %v641, %v637
    %v1146 = vpack.c.b16 %v642, %v638
    %v1147 = vpack.c.b16 %v647, %v643
    %v1148 = vpack.c.b16 %v648, %v644
    %v1149 = vpack.c.b16 %v649, %v645
    %v1150 = vpack.c.b16 %v650, %v646
    %v1151 = vpack.c.b16 %v655, %v651
    %v1152 = vpack.c.b16 %v656, %v652
    %v1153 = vpack.c.b16 %v657, %v653
    %v1154 = vpack.c.b16 %v658, %v654
    %v1155 = vpack.c.b16 %v663, %v659
    %v1156 = vpack.c.b16 %v664, %v660
    %v1157 = vpack.c.b16 %v665, %v661
    %v1158 = vpack.c.b16 %v666, %v662
    %v1159 = vpack.c.b16 %v671, %v667
    %v1160 = vpack.c.b16 %v672, %v668
    %v1161 = vpack.c.b16 %v673, %v669
    %v1162 = vpack.c.b16 %v674, %v670
    %v1163 = vpack.c.b16 %v679, %v675
    %v1164 = vpack.c.b16 %v680, %v676
    %v1165 = vpack.c.b16 %v681, %v677
    %v1166 = vpack.c.b16 %v682, %v678
    %v1167 = vpack.c.b16 %v687, %v683
    %v1168 = vpack.c.b16 %v688, %v684
    %v1169 = vpack.c.b16 %v689, %v685
    %v1170 = vpack.c.b16 %v690, %v686
    %v1171 = vpack.c.b16 %v695, %v691
    %v1172 = vpack.c.b16 %v696, %v692
    %v1173 = vpack.c.b16 %v697, %v693
    %v1174 = vpack.c.b16 %v698, %v694
    %v1175 = vpack.c.b16 %v703, %v699
    %v1176 = vpack.c.b16 %v704, %v700
    %v1177 = vpack.c.b16 %v705, %v701
    %v1178 = vpack.c.b16 %v706, %v702
    %v1179 = vpack.c.b16 %v711, %v707
    %v1180 = vpack.c.b16 %v712, %v708
    %v1181 = vpack.c.b16 %v713, %v709
    %v1182 = vpack.c.b16 %v714, %v710
    %v1183 = vpack.c.b16 %v719, %v715
    %v1184 = vpack.c.b16 %v720, %v716
    %v1185 = vpack.c.b16 %v721, %v717
    %v1186 = vpack.c.b16 %v722, %v718
    %v1187 = vpack.c.b16 %v727, %v723
    %v1188 = vpack.c.b16 %v728, %v724
    %v1189 = vpack.c.b16 %v729, %v725
    %v1190 = vpack.c.b16 %v730, %v726
    %v1191 = vpack.c.b16 %v735, %v731
    %v1192 = vpack.c.b16 %v736, %v732
    %v1193 = vpack.c.b16 %v737, %v733
    %v1194 = vpack.c.b16 %v738, %v734
    %v1195 = vpack.c.b16 %v743, %v739
    %v1196 = vpack.c.b16 %v744, %v740
    %v1197 = vpack.c.b16 %v745, %v741
    %v1198 = vpack.c.b16 %v746, %v742
    %v1199 = vpack.c.b16 %v751, %v747
    %v1200 = vpack.c.b16 %v752, %v748
    %v1201 = vpack.c.b16 %v753, %v749
    %v1202 = vpack.c.b16 %v754, %v750
    %v1203 = vpack.c.b16 %v759, %v755
    %v1204 = vpack.c.b16 %v760, %v756
    %v1205 = vpack.c.b16 %v761, %v757
    %v1206 = vpack.c.b16 %v762, %v758
    %v1207 = vpack.c.b16 %v767, %v763
    %v1208 = vpack.c.b16 %v768, %v764
    %v1209 = vpack.c.b16 %v769, %v765
    %v1210 = vpack.c.b16 %v770, %v766
    %v1211 = vpack.c.b16 %v775, %v771
    %v1212 = vpack.c.b16 %v776, %v772
    %v1213 = vpack.c.b16 %v777, %v773
    %v1214 = vpack.c.b16 %v778, %v774
    %v1215 = vpack.c.b16 %v783, %v779
    %v1216 = vpack.c.b16 %v784, %v780
    %v1217 = vpack.c.b16 %v785, %v781
    %v1218 = vpack.c.b16 %v786, %v782
    %v1219 = vpack.c.b16 %v791, %v787
    %v1220 = vpack.c.b16 %v792, %v788
    %v1221 = vpack.c.b16 %v793, %v789
    %v1222 = vpack.c.b16 %v794, %v790
    %v1223 = vpack.c.b16 %v799, %v795
    %v1224 = vpack.c.b16 %v800, %v796
    %v1225 = vpack.c.b16 %v801, %v797
    %v1226 = vpack.c.b16 %v802, %v798
    %v1227 = vpack.c.b16 %v807, %v803
    %v1228 = vpack.c.b16 %v808, %v804
    %v1229 = vpack.c.b16 %v809, %v805
    %v1230 = vpack.c.b16 %v810, %v806
    %v1231 = vpack.c.b16 %v815, %v811
    %v1232 = vpack.c.b16 %v816, %v812
    %v1233 = vpack.c.b16 %v817, %v813
    %v1234 = vpack.c.b16 %v818, %v814
    %v1235 = vpack.c.b16 %v823, %v819
    %v1236 = vpack.c.b16 %v824, %v820
    %v1237 = vpack.c.b16 %v825, %v821
    %v1238 = vpack.c.b16 %v826, %v822
    %v1239 = vpack.c.b16 %v831, %v827
    %v1240 = vpack.c.b16 %v832, %v828
    %v1241 = vpack.c.b16 %v833, %v829
    %v1242 = vpack.c.b16 %v834, %v830
    %v1243 = vpack.c.b16 %v839, %v835
    %v1244 = vpack.c.b16 %v840, %v836
    %v1245 = vpack.c.b16 %v841, %v837
    %v1246 = vpack.c.b16 %v842, %v838
    %v1247 = vpack.c.b16 %v847, %v843
    %v1248 = vpack.c.b16 %v848, %v844
    %v1249 = vpack.c.b16 %v849, %v845
    %v1250 = vpack.c.b16 %v850, %v846
    %v1251 = vpack.c.b16 %v855, %v851
    %v1252 = vpack.c.b16 %v856, %v852
    %v1253 = vpack.c.b16 %v857, %v853
    %v1254 = vpack.c.b16 %v858, %v854
    %v1255 = vpack.c.b16 %v863, %v859
    %v1256 = vpack.c.b16 %v864, %v860
    %v1257 = vpack.c.b16 %v865, %v861
    %v1258 = vpack.c.b16 %v866, %v862
    %v1259 = vpack.c.b16 %v871, %v867
    %v1260 = vpack.c.b16 %v872, %v868
    %v1261 = vpack.c.b16 %v873, %v869
    %v1262 = vpack.c.b16 %v874, %v870
    %v1263 = vpack.c.b16 %v879, %v875
    %v1264 = vpack.c.b16 %v880, %v876
    %v1265 = vpack.c.b16 %v881, %v877
    %v1266 = vpack.c.b16 %v882, %v878
    %v1267 = vpack.c.b16 %v887, %v883
    %v1268 = vpack.c.b16 %v888, %v884
    %v1269 = vpack.c.b16 %v889, %v885
    %v1270 = vpack.c.b16 %v890, %v886
    %v1271 = vpack.c.b16 %v895, %v891
    %v1272 = vpack.c.b16 %v896, %v892
    %v1273 = vpack.c.b16 %v897, %v893
    %v1274 = vpack.c.b16 %v898, %v894
    %v1275 = vpack.c.b16 %v903, %v899
    %v1276 = vpack.c.b16 %v904, %v900
    %v1277 = vpack.c.b16 %v905, %v901
    %v1278 = vpack.c.b16 %v906, %v902
    %v1279 = vpack.c.b16 %v911, %v907
    %v1280 = vpack.c.b16 %v912, %v908
    %v1281 = vpack.c.b16 %v913, %v909
    %v1282 = vpack.c.b16 %v914, %v910
    %v1283 = vpack.c.b16 %v919, %v915
    %v1284 = vpack.c.b16 %v920, %v916
    %v1285 = vpack.c.b16 %v921, %v917
    %v1286 = vpack.c.b16 %v922, %v918
    %v1287 = vpack.c.b16 %v927, %v923
    %v1288 = vpack.c.b16 %v928, %v924
    %v1289 = vpack.c.b16 %v929, %v925
    %v1290 = vpack.c.b16 %v930, %v926
    %v1291 = vpack.c.b16 %v935, %v931
    %v1292 = vpack.c.b16 %v936, %v932
    %v1293 = vpack.c.b16 %v937, %v933
    %v1294 = vpack.c.b16 %v938, %v934
    %v1295 = vpack.c.b16 %v943, %v939
    %v1296 = vpack.c.b16 %v944, %v940
    %v1297 = vpack.c.b16 %v945, %v941
    %v1298 = vpack.c.b16 %v946, %v942
    %v1299 = vpack.c.b16 %v951, %v947
    %v1300 = vpack.c.b16 %v952, %v948
    %v1301 = vpack.c.b16 %v953, %v949
    %v1302 = vpack.c.b16 %v954, %v950
    %v1303 = vpack.c.b16 %v959, %v955
    %v1304 = vpack.c.b16 %v960, %v956
    %v1305 = vpack.c.b16 %v961, %v957
    %v1306 = vpack.c.b16 %v962, %v958
    %v1307 = vpack.c.b16 %v967, %v963
    %v1308 = vpack.c.b16 %v968, %v964
    %v1309 = vpack.c.b16 %v969, %v965
    %v1310 = vpack.c.b16 %v970, %v966
    %v1311 = vpack.c.b16 %v975, %v971
    %v1312 = vpack.c.b16 %v976, %v972
    %v1313 = vpack.c.b16 %v977, %v973
    %v1314 = vpack.c.b16 %v978, %v974
    %v1315 = vpack.c.b16 %v983, %v979
    %v1316 = vpack.c.b16 %v984, %v980
    %v1317 = vpack.c.b16 %v985, %v981
    %v1318 = vpack.c.b16 %v986, %v982
    %v1319 = vpack.c.b16 %v991, %v987
    %v1320 = vpack.c.b16 %v992, %v988
    %v1321 = vpack.c.b16 %v993, %v989
    %v1322 = vpack.c.b16 %v994, %v990
    %v1323 = vpack.c.b16 %v999, %v995
    %v1324 = vpack.c.b16 %v1000, %v996
    %v1325 = vpack.c.b16 %v1001, %v997
    %v1326 = vpack.c.b16 %v1002, %v998
    %v1327 = vpack.c.b16 %v1007, %v1003
    %v1328 = vpack.c.b16 %v1008, %v1004
    %v1329 = vpack.c.b16 %v1009, %v1005
    %v1330 = vpack.c.b16 %v1010, %v1006
    %v1331 = vpack.c.b16 %v1015, %v1011
    %v1332 = vpack.c.b16 %v1016, %v1012
    %v1333 = vpack.c.b16 %v1017, %v1013
    %v1334 = vpack.c.b16 %v1018, %v1014
    %v1335 = vpack.c.b16 %v1023, %v1019
    %v1336 = vpack.c.b16 %v1024, %v1020
    %v1337 = vpack.c.b16 %v1025, %v1021
    %v1338 = vpack.c.b16 %v1026, %v1022
    %v1339 = vpack.c.b16 %v1031, %v1027
    %v1340 = vpack.c.b16 %v1032, %v1028
    %v1341 = vpack.c.b16 %v1033, %v1029
    %v1342 = vpack.c.b16 %v1034, %v1030
    %v1343 = vpack.c.b16 %v1039, %v1035
    %v1344 = vpack.c.b16 %v1040, %v1036
    %v1345 = vpack.c.b16 %v1041, %v1037
    %v1346 = vpack.c.b16 %v1042, %v1038
    %v1347 = vpack.c.b16 %v1047, %v1043
    %v1348 = vpack.c.b16 %v1048, %v1044
    %v1349 = vpack.c.b16 %v1049, %v1045
    %v1350 = vpack.c.b16 %v1050, %v1046
    %v1351 = vpack.c.b16 %v1055, %v1051
    %v1352 = vpack.c.b16 %v1056, %v1052
    %v1353 = vpack.c.b16 %v1057, %v1053
    %v1354 = vpack.c.b16 %v1058, %v1054
    %v1355 = vpack.c.b16 %v1063, %v1059
    %v1356 = vpack.c.b16 %v1064, %v1060
    %v1357 = vpack.c.b16 %v1065, %v1061
    %v1358 = vpack.c.b16 %v1066, %v1062
    %v1359 = vpack.c.b16 %v1071, %v1067
    %v1360 = vpack.c.b16 %v1072, %v1068
    %v1361 = vpack.c.b16 %v1073, %v1069
    %v1362 = vpack.c.b16 %v1074, %v1070
    %v1363 = vpack.c.b16 %v1079, %v1075
    %v1364 = vpack.c.b16 %v1080, %v1076
    %v1365 = vpack.c.b16 %v1081, %v1077
    %v1366 = vpack.c.b16 %v1082, %v1078
    %v1367 = vpack.c.b16 %v1087, %v1083
    %v1368 = vpack.c.b16 %v1088, %v1084
    %v1369 = vpack.c.b16 %v1089, %v1085
    %v1370 = vpack.c.b16 %v1090, %v1086
    %v1371 = vpack.c.b16 %v1095, %v1091
    %v1372 = vpack.c.b16 %v1096, %v1092
    %v1373 = vpack.c.b16 %v1097, %v1093
    %v1374 = vpack.c.b16 %v1098, %v1094
    %v1375 = vpack.c.b16 %v1103, %v1099
    %v1376 = vpack.c.b16 %v1104, %v1100
    %v1377 = vpack.c.b16 %v1105, %v1101
    %v1378 = vpack.c.b16 %v1106, %v1102
    %v1379 = vpack.c.b16 %v1111, %v1107
    %v1380 = vpack.c.b16 %v1112, %v1108
    %v1381 = vpack.c.b16 %v1113, %v1109
    %v1382 = vpack.c.b16 %v1114, %v1110
    %v1383 = vpack.c.b16 %v1119, %v1115
    %v1384 = vpack.c.b16 %v1120, %v1116
    %v1385 = vpack.c.b16 %v1121, %v1117
    %v1386 = vpack.c.b16 %v1122, %v1118
    %v1387 = vpack.c.b16 %v1127, %v1123
    %v1388 = vpack.c.b16 %v1128, %v1124
    %v1389 = vpack.c.b16 %v1129, %v1125
    %v1390 = vpack.c.b16 %v1130, %v1126
    %v1391 = vpack.c.b16 %v1135, %v1131
    %v1392 = vpack.c.b16 %v1136, %v1132
    %v1393 = vpack.c.b16 %v1137, %v1133
    %v1394 = vpack.c.b16 %v1138, %v1134
    %1651 = vmatpush.bf16.msra.mxu0 %v1167
    %1652 = vmatpush.bf16.msra.mxu0 %v1163
    %1653 = vmatpush.bf16.msra.mxu0 %v1159
    %1654 = vmatpush.bf16.msra.mxu0 %v1155
    %1655 = vmatpush.bf16.msra.mxu0 %v1151
    %1656 = vmatpush.bf16.msra.mxu0 %v1147
    %1657 = vmatpush.bf16.msra.mxu0 %v1143
    %1658 = vmatpush.bf16.msra.mxu0 %v1139
    %1659 = vmatmul.bf16.gmra.mxu0 %v97
    %v1660 = vpop.f32.mrf.mxu0
    %v1661 = vadd.f32 %v363, %v1660
    %v1662 = vpop.f32.mrf.mxu0
    %v1663 = vadd.f32 %v363, %v1662
    %1664 = vdwg.mxu0
    %1665 = vmatpush.bf16.msra.mxu0 %v1199
    %1666 = vmatpush.bf16.msra.mxu0 %v1195
    %1667 = vmatpush.bf16.msra.mxu0 %v1191
    %1668 = vmatpush.bf16.msra.mxu0 %v1187
    %1669 = vmatpush.bf16.msra.mxu0 %v1183
    %1670 = vmatpush.bf16.msra.mxu0 %v1179
    %1671 = vmatpush.bf16.msra.mxu0 %v1175
    %1672 = vmatpush.bf16.msra.mxu0 %v1171
    %1673 = vmatmul.bf16.gmra.mxu0 %v98
    %v1674 = vpop.f32.mrf.mxu0
    %v1675 = vadd.f32 %v1661, %v1674
    %v1676 = vpop.f32.mrf.mxu0
    %v1677 = vadd.f32 %v1663, %v1676
    %1678 = vdwg.mxu0
    %1679 = vmatpush.bf16.msra.mxu0 %v1231
    %1680 = vmatpush.bf16.msra.mxu0 %v1227
    %1681 = vmatpush.bf16.msra.mxu0 %v1223
    %1682 = vmatpush.bf16.msra.mxu0 %v1219
    %1683 = vmatpush.bf16.msra.mxu0 %v1215
    %1684 = vmatpush.bf16.msra.mxu0 %v1211
    %1685 = vmatpush.bf16.msra.mxu0 %v1207
    %1686 = vmatpush.bf16.msra.mxu0 %v1203
    %1687 = vmatmul.bf16.gmra.mxu0 %v99
    %v1688 = vpop.f32.mrf.mxu0
    %v1689 = vadd.f32 %v1675, %v1688
    %v1690 = vpop.f32.mrf.mxu0
    %v1691 = vadd.f32 %v1677, %v1690
    %1692 = vdwg.mxu0
    %1693 = vmatpush.bf16.msra.mxu0 %v1263
    %1694 = vmatpush.bf16.msra.mxu0 %v1259
    %1695 = vmatpush.bf16.msra.mxu0 %v1255
    %1696 = vmatpush.bf16.msra.mxu0 %v1251
    %1697 = vmatpush.bf16.msra.mxu0 %v1247
    %1698 = vmatpush.bf16.msra.mxu0 %v1243
    %1699 = vmatpush.bf16.msra.mxu0 %v1239
    %1700 = vmatpush.bf16.msra.mxu0 %v1235
    %1701 = vmatmul.bf16.gmra.mxu0 %v100
    %v1702 = vpop.f32.mrf.mxu0
    %v1703 = vadd.f32 %v1689, %v1702
    %v1704 = vpop.f32.mrf.mxu0
    %v1705 = vadd.f32 %v1691, %v1704
    %1706 = vdwg.mxu0
    %1707 = vmatpush.bf16.msra.mxu0 %v1295
    %1708 = vmatpush.bf16.msra.mxu0 %v1291
    %1709 = vmatpush.bf16.msra.mxu0 %v1287
    %1710 = vmatpush.bf16.msra.mxu0 %v1283
    %1711 = vmatpush.bf16.msra.mxu0 %v1279
    %1712 = vmatpush.bf16.msra.mxu0 %v1275
    %1713 = vmatpush.bf16.msra.mxu0 %v1271
    %1714 = vmatpush.bf16.msra.mxu0 %v1267
    %1715 = vmatmul.bf16.gmra.mxu0 %v101
    %v1716 = vpop.f32.mrf.mxu0
    %v1717 = vadd.f32 %v1703, %v1716
    %v1718 = vpop.f32.mrf.mxu0
    %v1719 = vadd.f32 %v1705, %v1718
    %1720 = vdwg.mxu0
    %1721 = vmatpush.bf16.msra.mxu0 %v1327
    %1722 = vmatpush.bf16.msra.mxu0 %v1323
    %1723 = vmatpush.bf16.msra.mxu0 %v1319
    %1724 = vmatpush.bf16.msra.mxu0 %v1315
    %1725 = vmatpush.bf16.msra.mxu0 %v1311
    %1726 = vmatpush.bf16.msra.mxu0 %v1307
    %1727 = vmatpush.bf16.msra.mxu0 %v1303
    %1728 = vmatpush.bf16.msra.mxu0 %v1299
    %1729 = vmatmul.bf16.gmra.mxu0 %v102
    %v1730 = vpop.f32.mrf.mxu0
    %v1731 = vadd.f32 %v1717, %v1730
    %v1732 = vpop.f32.mrf.mxu0
    %v1733 = vadd.f32 %v1719, %v1732
    %1734 = vdwg.mxu0
    %1735 = vmatpush.bf16.msra.mxu0 %v1359
    %1736 = vmatpush.bf16.msra.mxu0 %v1355
    %1737 = vmatpush.bf16.msra.mxu0 %v1351
    %1738 = vmatpush.bf16.msra.mxu0 %v1347
    %1739 = vmatpush.bf16.msra.mxu0 %v1343
    %1740 = vmatpush.bf16.msra.mxu0 %v1339
    %1741 = vmatpush.bf16.msra.mxu0 %v1335
    %1742 = vmatpush.bf16.msra.mxu0 %v1331
    %1743 = vmatmul.bf16.gmra.mxu0 %v103
    %v1744 = vpop.f32.mrf.mxu0
    %v1745 = vadd.f32 %v1731, %v1744
    %v1746 = vpop.f32.mrf.mxu0
    %v1747 = vadd.f32 %v1733, %v1746
    %1748 = vdwg.mxu0
    %1749 = vmatpush.bf16.msra.mxu0 %v1391
    %1750 = vmatpush.bf16.msra.mxu0 %v1387
    %1751 = vmatpush.bf16.msra.mxu0 %v1383
    %1752 = vmatpush.bf16.msra.mxu0 %v1379
    %1753 = vmatpush.bf16.msra.mxu0 %v1375
    %1754 = vmatpush.bf16.msra.mxu0 %v1371
    %1755 = vmatpush.bf16.msra.mxu0 %v1367
    %1756 = vmatpush.bf16.msra.mxu0 %v1363
    %1757 = vmatmul.bf16.gmra.mxu0 %v104
    %v1758 = vpop.f32.mrf.mxu0
    %v1759 = vadd.f32 %v1745, %v1758
    %v1760 = vpop.f32.mrf.mxu0
    %v1761 = vadd.f32 %v1747, %v1760
    %1762 = vdwg.mxu0
    %1763 = vmatpush.bf16.msra.mxu0 %v1168
    %1764 = vmatpush.bf16.msra.mxu0 %v1164
    %1765 = vmatpush.bf16.msra.mxu0 %v1160
    %1766 = vmatpush.bf16.msra.mxu0 %v1156
    %1767 = vmatpush.bf16.msra.mxu0 %v1152
    %1768 = vmatpush.bf16.msra.mxu0 %v1148
    %1769 = vmatpush.bf16.msra.mxu0 %v1144
    %1770 = vmatpush.bf16.msra.mxu0 %v1140
    %1771 = vmatmul.bf16.gmra.mxu0 %v97
    %v1772 = vpop.f32.mrf.mxu0
    %v1773 = vadd.f32 %v364, %v1772
    %v1774 = vpop.f32.mrf.mxu0
    %v1775 = vadd.f32 %v364, %v1774
    %1776 = vdwg.mxu0
    %1777 = vmatpush.bf16.msra.mxu0 %v1200
    %1778 = vmatpush.bf16.msra.mxu0 %v1196
    %1779 = vmatpush.bf16.msra.mxu0 %v1192
    %1780 = vmatpush.bf16.msra.mxu0 %v1188
    %1781 = vmatpush.bf16.msra.mxu0 %v1184
    %1782 = vmatpush.bf16.msra.mxu0 %v1180
    %1783 = vmatpush.bf16.msra.mxu0 %v1176
    %1784 = vmatpush.bf16.msra.mxu0 %v1172
    %1785 = vmatmul.bf16.gmra.mxu0 %v98
    %v1786 = vpop.f32.mrf.mxu0
    %v1787 = vadd.f32 %v1773, %v1786
    %v1788 = vpop.f32.mrf.mxu0
    %v1789 = vadd.f32 %v1775, %v1788
    %1790 = vdwg.mxu0
    %1791 = vmatpush.bf16.msra.mxu0 %v1232
    %1792 = vmatpush.bf16.msra.mxu0 %v1228
    %1793 = vmatpush.bf16.msra.mxu0 %v1224
    %1794 = vmatpush.bf16.msra.mxu0 %v1220
    %1795 = vmatpush.bf16.msra.mxu0 %v1216
    %1796 = vmatpush.bf16.msra.mxu0 %v1212
    %1797 = vmatpush.bf16.msra.mxu0 %v1208
    %1798 = vmatpush.bf16.msra.mxu0 %v1204
    %1799 = vmatmul.bf16.gmra.mxu0 %v99
    %v1800 = vpop.f32.mrf.mxu0
    %v1801 = vadd.f32 %v1787, %v1800
    %v1802 = vpop.f32.mrf.mxu0
    %v1803 = vadd.f32 %v1789, %v1802
    %1804 = vdwg.mxu0
    %1805 = vmatpush.bf16.msra.mxu0 %v1264
    %1806 = vmatpush.bf16.msra.mxu0 %v1260
    %1807 = vmatpush.bf16.msra.mxu0 %v1256
    %1808 = vmatpush.bf16.msra.mxu0 %v1252
    %1809 = vmatpush.bf16.msra.mxu0 %v1248
    %1810 = vmatpush.bf16.msra.mxu0 %v1244
    %1811 = vmatpush.bf16.msra.mxu0 %v1240
    %1812 = vmatpush.bf16.msra.mxu0 %v1236
    %1813 = vmatmul.bf16.gmra.mxu0 %v100
    %v1814 = vpop.f32.mrf.mxu0
    %v1815 = vadd.f32 %v1801, %v1814
    %v1816 = vpop.f32.mrf.mxu0
    %v1817 = vadd.f32 %v1803, %v1816
    %1818 = vdwg.mxu0
    %1819 = vmatpush.bf16.msra.mxu0 %v1296
    %1820 = vmatpush.bf16.msra.mxu0 %v1292
    %1821 = vmatpush.bf16.msra.mxu0 %v1288
    %1822 = vmatpush.bf16.msra.mxu0 %v1284
    %1823 = vmatpush.bf16.msra.mxu0 %v1280
    %1824 = vmatpush.bf16.msra.mxu0 %v1276
    %1825 = vmatpush.bf16.msra.mxu0 %v1272
    %1826 = vmatpush.bf16.msra.mxu0 %v1268
    %1827 = vmatmul.bf16.gmra.mxu0 %v101
    %v1828 = vpop.f32.mrf.mxu0
    %v1829 = vadd.f32 %v1815, %v1828
    %v1830 = vpop.f32.mrf.mxu0
    %v1831 = vadd.f32 %v1817, %v1830
    %1832 = vdwg.mxu0
    %1833 = vmatpush.bf16.msra.mxu0 %v1328
    %1834 = vmatpush.bf16.msra.mxu0 %v1324
    %1835 = vmatpush.bf16.msra.mxu0 %v1320
    %1836 = vmatpush.bf16.msra.mxu0 %v1316
    %1837 = vmatpush.bf16.msra.mxu0 %v1312
    %1838 = vmatpush.bf16.msra.mxu0 %v1308
    %1839 = vmatpush.bf16.msra.mxu0 %v1304
    %1840 = vmatpush.bf16.msra.mxu0 %v1300
    %1841 = vmatmul.bf16.gmra.mxu0 %v102
    %v1842 = vpop.f32.mrf.mxu0
    %v1843 = vadd.f32 %v1829, %v1842
    %v1844 = vpop.f32.mrf.mxu0
    %v1845 = vadd.f32 %v1831, %v1844
    %1846 = vdwg.mxu0
    %1847 = vmatpush.bf16.msra.mxu0 %v1360
    %1848 = vmatpush.bf16.msra.mxu0 %v1356
    %1849 = vmatpush.bf16.msra.mxu0 %v1352
    %1850 = vmatpush.bf16.msra.mxu0 %v1348
    %1851 = vmatpush.bf16.msra.mxu0 %v1344
    %1852 = vmatpush.bf16.msra.mxu0 %v1340
    %1853 = vmatpush.bf16.msra.mxu0 %v1336
    %1854 = vmatpush.bf16.msra.mxu0 %v1332
    %1855 = vmatmul.bf16.gmra.mxu0 %v103
    %v1856 = vpop.f32.mrf.mxu0
    %v1857 = vadd.f32 %v1843, %v1856
    %v1858 = vpop.f32.mrf.mxu0
    %v1859 = vadd.f32 %v1845, %v1858
    %1860 = vdwg.mxu0
    %1861 = vmatpush.bf16.msra.mxu0 %v1392
    %1862 = vmatpush.bf16.msra.mxu0 %v1388
    %1863 = vmatpush.bf16.msra.mxu0 %v1384
    %1864 = vmatpush.bf16.msra.mxu0 %v1380
    %1865 = vmatpush.bf16.msra.mxu0 %v1376
    %1866 = vmatpush.bf16.msra.mxu0 %v1372
    %1867 = vmatpush.bf16.msra.mxu0 %v1368
    %1868 = vmatpush.bf16.msra.mxu0 %v1364
    %1869 = vmatmul.bf16.gmra.mxu0 %v104
    %v1870 = vpop.f32.mrf.mxu0
    %v1871 = vadd.f32 %v1857, %v1870
    %v1872 = vpop.f32.mrf.mxu0
    %v1873 = vadd.f32 %v1859, %v1872
    %1874 = vdwg.mxu0
    %1875 = vmatpush.bf16.msra.mxu0 %v1169
    %1876 = vmatpush.bf16.msra.mxu0 %v1165
    %1877 = vmatpush.bf16.msra.mxu0 %v1161
    %1878 = vmatpush.bf16.msra.mxu0 %v1157
    %1879 = vmatpush.bf16.msra.mxu0 %v1153
    %1880 = vmatpush.bf16.msra.mxu0 %v1149
    %1881 = vmatpush.bf16.msra.mxu0 %v1145
    %1882 = vmatpush.bf16.msra.mxu0 %v1141
    %1883 = vmatmul.bf16.gmra.mxu0 %v97
    %v1884 = vpop.f32.mrf.mxu0
    %v1885 = vadd.f32 %v365, %v1884
    %v1886 = vpop.f32.mrf.mxu0
    %v1887 = vadd.f32 %v365, %v1886
    %1888 = vdwg.mxu0
    %1889 = vmatpush.bf16.msra.mxu0 %v1201
    %1890 = vmatpush.bf16.msra.mxu0 %v1197
    %1891 = vmatpush.bf16.msra.mxu0 %v1193
    %1892 = vmatpush.bf16.msra.mxu0 %v1189
    %1893 = vmatpush.bf16.msra.mxu0 %v1185
    %1894 = vmatpush.bf16.msra.mxu0 %v1181
    %1895 = vmatpush.bf16.msra.mxu0 %v1177
    %1896 = vmatpush.bf16.msra.mxu0 %v1173
    %1897 = vmatmul.bf16.gmra.mxu0 %v98
    %v1898 = vpop.f32.mrf.mxu0
    %v1899 = vadd.f32 %v1885, %v1898
    %v1900 = vpop.f32.mrf.mxu0
    %v1901 = vadd.f32 %v1887, %v1900
    %1902 = vdwg.mxu0
    %1903 = vmatpush.bf16.msra.mxu0 %v1233
    %1904 = vmatpush.bf16.msra.mxu0 %v1229
    %1905 = vmatpush.bf16.msra.mxu0 %v1225
    %1906 = vmatpush.bf16.msra.mxu0 %v1221
    %1907 = vmatpush.bf16.msra.mxu0 %v1217
    %1908 = vmatpush.bf16.msra.mxu0 %v1213
    %1909 = vmatpush.bf16.msra.mxu0 %v1209
    %1910 = vmatpush.bf16.msra.mxu0 %v1205
    %1911 = vmatmul.bf16.gmra.mxu0 %v99
    %v1912 = vpop.f32.mrf.mxu0
    %v1913 = vadd.f32 %v1899, %v1912
    %v1914 = vpop.f32.mrf.mxu0
    %v1915 = vadd.f32 %v1901, %v1914
    %1916 = vdwg.mxu0
    %1917 = vmatpush.bf16.msra.mxu0 %v1265
    %1918 = vmatpush.bf16.msra.mxu0 %v1261
    %1919 = vmatpush.bf16.msra.mxu0 %v1257
    %1920 = vmatpush.bf16.msra.mxu0 %v1253
    %1921 = vmatpush.bf16.msra.mxu0 %v1249
    %1922 = vmatpush.bf16.msra.mxu0 %v1245
    %1923 = vmatpush.bf16.msra.mxu0 %v1241
    %1924 = vmatpush.bf16.msra.mxu0 %v1237
    %1925 = vmatmul.bf16.gmra.mxu0 %v100
    %v1926 = vpop.f32.mrf.mxu0
    %v1927 = vadd.f32 %v1913, %v1926
    %v1928 = vpop.f32.mrf.mxu0
    %v1929 = vadd.f32 %v1915, %v1928
    %1930 = vdwg.mxu0
    %1931 = vmatpush.bf16.msra.mxu0 %v1297
    %1932 = vmatpush.bf16.msra.mxu0 %v1293
    %1933 = vmatpush.bf16.msra.mxu0 %v1289
    %1934 = vmatpush.bf16.msra.mxu0 %v1285
    %1935 = vmatpush.bf16.msra.mxu0 %v1281
    %1936 = vmatpush.bf16.msra.mxu0 %v1277
    %1937 = vmatpush.bf16.msra.mxu0 %v1273
    %1938 = vmatpush.bf16.msra.mxu0 %v1269
    %1939 = vmatmul.bf16.gmra.mxu0 %v101
    %v1940 = vpop.f32.mrf.mxu0
    %v1941 = vadd.f32 %v1927, %v1940
    %v1942 = vpop.f32.mrf.mxu0
    %v1943 = vadd.f32 %v1929, %v1942
    %1944 = vdwg.mxu0
    %1945 = vmatpush.bf16.msra.mxu0 %v1329
    %1946 = vmatpush.bf16.msra.mxu0 %v1325
    %1947 = vmatpush.bf16.msra.mxu0 %v1321
    %1948 = vmatpush.bf16.msra.mxu0 %v1317
    %1949 = vmatpush.bf16.msra.mxu0 %v1313
    %1950 = vmatpush.bf16.msra.mxu0 %v1309
    %1951 = vmatpush.bf16.msra.mxu0 %v1305
    %1952 = vmatpush.bf16.msra.mxu0 %v1301
    %1953 = vmatmul.bf16.gmra.mxu0 %v102
    %v1954 = vpop.f32.mrf.mxu0
    %v1955 = vadd.f32 %v1941, %v1954
    %v1956 = vpop.f32.mrf.mxu0
    %v1957 = vadd.f32 %v1943, %v1956
    %1958 = vdwg.mxu0
    %1959 = vmatpush.bf16.msra.mxu0 %v1361
    %1960 = vmatpush.bf16.msra.mxu0 %v1357
    %1961 = vmatpush.bf16.msra.mxu0 %v1353
    %1962 = vmatpush.bf16.msra.mxu0 %v1349
    %1963 = vmatpush.bf16.msra.mxu0 %v1345
    %1964 = vmatpush.bf16.msra.mxu0 %v1341
    %1965 = vmatpush.bf16.msra.mxu0 %v1337
    %1966 = vmatpush.bf16.msra.mxu0 %v1333
    %1967 = vmatmul.bf16.gmra.mxu0 %v103
    %v1968 = vpop.f32.mrf.mxu0
    %v1969 = vadd.f32 %v1955, %v1968
    %v1970 = vpop.f32.mrf.mxu0
    %v1971 = vadd.f32 %v1957, %v1970
    %1972 = vdwg.mxu0
    %1973 = vmatpush.bf16.msra.mxu0 %v1393
    %1974 = vmatpush.bf16.msra.mxu0 %v1389
    %1975 = vmatpush.bf16.msra.mxu0 %v1385
    %1976 = vmatpush.bf16.msra.mxu0 %v1381
    %1977 = vmatpush.bf16.msra.mxu0 %v1377
    %1978 = vmatpush.bf16.msra.mxu0 %v1373
    %1979 = vmatpush.bf16.msra.mxu0 %v1369
    %1980 = vmatpush.bf16.msra.mxu0 %v1365
    %1981 = vmatmul.bf16.gmra.mxu0 %v104
    %v1982 = vpop.f32.mrf.mxu0
    %v1983 = vadd.f32 %v1969, %v1982
    %v1984 = vpop.f32.mrf.mxu0
    %v1985 = vadd.f32 %v1971, %v1984
    %1986 = vdwg.mxu0
    %1987 = vmatpush.bf16.msra.mxu0 %v1170
    %1988 = vmatpush.bf16.msra.mxu0 %v1166
    %1989 = vmatpush.bf16.msra.mxu0 %v1162
    %1990 = vmatpush.bf16.msra.mxu0 %v1158
    %1991 = vmatpush.bf16.msra.mxu0 %v1154
    %1992 = vmatpush.bf16.msra.mxu0 %v1150
    %1993 = vmatpush.bf16.msra.mxu0 %v1146
    %1994 = vmatpush.bf16.msra.mxu0 %v1142
    %1995 = vmatmul.bf16.gmra.mxu0 %v97
    %v1996 = vpop.f32.mrf.mxu0
    %v1997 = vadd.f32 %v366, %v1996
    %v1998 = vpop.f32.mrf.mxu0
    %v1999 = vadd.f32 %v366, %v1998
    %2000 = vdwg.mxu0
    %2001 = vmatpush.bf16.msra.mxu0 %v1202
    %2002 = vmatpush.bf16.msra.mxu0 %v1198
    %2003 = vmatpush.bf16.msra.mxu0 %v1194
    %2004 = vmatpush.bf16.msra.mxu0 %v1190
    %2005 = vmatpush.bf16.msra.mxu0 %v1186
    %2006 = vmatpush.bf16.msra.mxu0 %v1182
    %2007 = vmatpush.bf16.msra.mxu0 %v1178
    %2008 = vmatpush.bf16.msra.mxu0 %v1174
    %2009 = vmatmul.bf16.gmra.mxu0 %v98
    %v2010 = vpop.f32.mrf.mxu0
    %v2011 = vadd.f32 %v1997, %v2010
    %v2012 = vpop.f32.mrf.mxu0
    %v2013 = vadd.f32 %v1999, %v2012
    %2014 = vdwg.mxu0
    %2015 = vmatpush.bf16.msra.mxu0 %v1234
    %2016 = vmatpush.bf16.msra.mxu0 %v1230
    %2017 = vmatpush.bf16.msra.mxu0 %v1226
    %2018 = vmatpush.bf16.msra.mxu0 %v1222
    %2019 = vmatpush.bf16.msra.mxu0 %v1218
    %2020 = vmatpush.bf16.msra.mxu0 %v1214
    %2021 = vmatpush.bf16.msra.mxu0 %v1210
    %2022 = vmatpush.bf16.msra.mxu0 %v1206
    %2023 = vmatmul.bf16.gmra.mxu0 %v99
    %v2024 = vpop.f32.mrf.mxu0
    %v2025 = vadd.f32 %v2011, %v2024
    %v2026 = vpop.f32.mrf.mxu0
    %v2027 = vadd.f32 %v2013, %v2026
    %2028 = vdwg.mxu0
    %2029 = vmatpush.bf16.msra.mxu0 %v1266
    %2030 = vmatpush.bf16.msra.mxu0 %v1262
    %2031 = vmatpush.bf16.msra.mxu0 %v1258
    %2032 = vmatpush.bf16.msra.mxu0 %v1254
    %2033 = vmatpush.bf16.msra.mxu0 %v1250
    %2034 = vmatpush.bf16.msra.mxu0 %v1246
    %2035 = vmatpush.bf16.msra.mxu0 %v1242
    %2036 = vmatpush.bf16.msra.mxu0 %v1238
    %2037 = vmatmul.bf16.gmra.mxu0 %v100
    %v2038 = vpop.f32.mrf.mxu0
    %v2039 = vadd.f32 %v2025, %v2038
    %v2040 = vpop.f32.mrf.mxu0
    %v2041 = vadd.f32 %v2027, %v2040
    %2042 = vdwg.mxu0
    %2043 = vmatpush.bf16.msra.mxu0 %v1298
    %2044 = vmatpush.bf16.msra.mxu0 %v1294
    %2045 = vmatpush.bf16.msra.mxu0 %v1290
    %2046 = vmatpush.bf16.msra.mxu0 %v1286
    %2047 = vmatpush.bf16.msra.mxu0 %v1282
    %2048 = vmatpush.bf16.msra.mxu0 %v1278
    %2049 = vmatpush.bf16.msra.mxu0 %v1274
    %2050 = vmatpush.bf16.msra.mxu0 %v1270
    %2051 = vmatmul.bf16.gmra.mxu0 %v101
    %v2052 = vpop.f32.mrf.mxu0
    %v2053 = vadd.f32 %v2039, %v2052
    %v2054 = vpop.f32.mrf.mxu0
    %v2055 = vadd.f32 %v2041, %v2054
    %2056 = vdwg.mxu0
    %2057 = vmatpush.bf16.msra.mxu0 %v1330
    %2058 = vmatpush.bf16.msra.mxu0 %v1326
    %2059 = vmatpush.bf16.msra.mxu0 %v1322
    %2060 = vmatpush.bf16.msra.mxu0 %v1318
    %2061 = vmatpush.bf16.msra.mxu0 %v1314
    %2062 = vmatpush.bf16.msra.mxu0 %v1310
    %2063 = vmatpush.bf16.msra.mxu0 %v1306
    %2064 = vmatpush.bf16.msra.mxu0 %v1302
    %2065 = vmatmul.bf16.gmra.mxu0 %v102
    %v2066 = vpop.f32.mrf.mxu0
    %v2067 = vadd.f32 %v2053, %v2066
    %v2068 = vpop.f32.mrf.mxu0
    %v2069 = vadd.f32 %v2055, %v2068
    %2070 = vdwg.mxu0
    %2071 = vmatpush.bf16.msra.mxu0 %v1362
    %2072 = vmatpush.bf16.msra.mxu0 %v1358
    %2073 = vmatpush.bf16.msra.mxu0 %v1354
    %2074 = vmatpush.bf16.msra.mxu0 %v1350
    %2075 = vmatpush.bf16.msra.mxu0 %v1346
    %2076 = vmatpush.bf16.msra.mxu0 %v1342
    %2077 = vmatpush.bf16.msra.mxu0 %v1338
    %2078 = vmatpush.bf16.msra.mxu0 %v1334
    %2079 = vmatmul.bf16.gmra.mxu0 %v103
    %v2080 = vpop.f32.mrf.mxu0
    %v2081 = vadd.f32 %v2067, %v2080
    %v2082 = vpop.f32.mrf.mxu0
    %v2083 = vadd.f32 %v2069, %v2082
    %2084 = vdwg.mxu0
    %2085 = vmatpush.bf16.msra.mxu0 %v1394
    %2086 = vmatpush.bf16.msra.mxu0 %v1390
    %2087 = vmatpush.bf16.msra.mxu0 %v1386
    %2088 = vmatpush.bf16.msra.mxu0 %v1382
    %2089 = vmatpush.bf16.msra.mxu0 %v1378
    %2090 = vmatpush.bf16.msra.mxu0 %v1374
    %2091 = vmatpush.bf16.msra.mxu0 %v1370
    %2092 = vmatpush.bf16.msra.mxu0 %v1366
    %2093 = vmatmul.bf16.gmra.mxu0 %v104
    %v2094 = vpop.f32.mrf.mxu0
    %v2095 = vadd.f32 %v2081, %v2094
    %v2096 = vpop.f32.mrf.mxu0
    %v2097 = vadd.f32 %v2083, %v2096
    %2098 = vdwg.mxu0
    %v2099 = vmax.f32 %v1759, 0.0
    %v2100 = vmax.f32 %v1871, 0.0
    %v2101 = vmax.f32 %v1983, 0.0
    %v2102 = vmax.f32 %v2095, 0.0
    %v2103 = vmax.f32 %v1761, 0.0
    %v2104 = vmax.f32 %v1873, 0.0
    %v2105 = vmax.f32 %v1985, 0.0
    %v2106 = vmax.f32 %v2097, 0.0
    %v2107 = vpack.c.bf16 %v2103, %v2099
    %v2108 = vpack.c.bf16 %v2104, %v2100
    %v2109 = vpack.c.bf16 %v2105, %v2101
    %v2110 = vpack.c.bf16 %v2106, %v2102
    %v2111 = vld [vmem:[%s3] sm:$0xf]
    %v2112 = vld [vmem:[%s3 + $0x4] sm:$0xf]
    %v2113 = vld [vmem:[%s3 + $0x8] sm:$0xf]
    %v2114 = vld [vmem:[%s3 + $0xc] sm:$0xf]
    %v2115 = vld [vmem:[%s3 + $0x10] sm:$0xf]
    %v2116 = vld [vmem:[%s3 + $0x14] sm:$0xf]
    %v2117 = vld [vmem:[%s3 + $0x18] sm:$0xf]
    %v2118 = vld [vmem:[%s3 + $0x1c] sm:$0xf]
    %v2119 = vld [vmem:[%s3 + $0x20] sm:$0xf]
    %v2120 = vld [vmem:[%s3 + $0x24] sm:$0xf]
    %v2121 = vld [vmem:[%s3 + $0x28] sm:$0xf]
    %v2122 = vld [vmem:[%s3 + $0x2c] sm:$0xf]
    %v2123 = vld [vmem:[%s3 + $0x30] sm:$0xf]
    %v2124 = vld [vmem:[%s3 + $0x34] sm:$0xf]
    %v2125 = vld [vmem:[%s3 + $0x38] sm:$0xf]
    %v2126 = vld [vmem:[%s3 + $0x3c] sm:$0xf]
    %v2127 = vld [vmem:[%s3 + $0x40] sm:$0xf]
    %v2128 = vld [vmem:[%s3 + $0x44] sm:$0xf]
    %v2129 = vld [vmem:[%s3 + $0x48] sm:$0xf]
    %v2130 = vld [vmem:[%s3 + $0x4c] sm:$0xf]
    %v2131 = vld [vmem:[%s3 + $0x50] sm:$0xf]
    %v2132 = vld [vmem:[%s3 + $0x54] sm:$0xf]
    %v2133 = vld [vmem:[%s3 + $0x58] sm:$0xf]
    %v2134 = vld [vmem:[%s3 + $0x5c] sm:$0xf]
    %v2135 = vld [vmem:[%s3 + $0x60] sm:$0xf]
    %v2136 = vld [vmem:[%s3 + $0x64] sm:$0xf]
    %v2137 = vld [vmem:[%s3 + $0x68] sm:$0xf]
    %v2138 = vld [vmem:[%s3 + $0x6c] sm:$0xf]
    %v2139 = vld [vmem:[%s3 + $0x70] sm:$0xf]
    %v2140 = vld [vmem:[%s3 + $0x74] sm:$0xf]
    %v2141 = vld [vmem:[%s3 + $0x78] sm:$0xf]
    %v2142 = vld [vmem:[%s3 + $0x7c] sm:$0xf]
    %v2143 = vld [vmem:[%s3 + $0x80] sm:$0xf]
    %v2144 = vld [vmem:[%s3 + $0x84] sm:$0xf]
    %v2145 = vld [vmem:[%s3 + $0x88] sm:$0xf]
    %v2146 = vld [vmem:[%s3 + $0x8c] sm:$0xf]
    %v2147 = vld [vmem:[%s3 + $0x90] sm:$0xf]
    %v2148 = vld [vmem:[%s3 + $0x94] sm:$0xf]
    %v2149 = vld [vmem:[%s3 + $0x98] sm:$0xf]
    %v2150 = vld [vmem:[%s3 + $0x9c] sm:$0xf]
    %v2151 = vld [vmem:[%s3 + $0xa0] sm:$0xf]
    %v2152 = vld [vmem:[%s3 + $0xa4] sm:$0xf]
    %v2153 = vld [vmem:[%s3 + $0xa8] sm:$0xf]
    %v2154 = vld [vmem:[%s3 + $0xac] sm:$0xf]
    %v2155 = vld [vmem:[%s3 + $0xb0] sm:$0xf]
    %v2156 = vld [vmem:[%s3 + $0xb4] sm:$0xf]
    %v2157 = vld [vmem:[%s3 + $0xb8] sm:$0xf]
    %v2158 = vld [vmem:[%s3 + $0xbc] sm:$0xf]
    %v2159 = vld [vmem:[%s3 + $0xc0] sm:$0xf]
    %v2160 = vld [vmem:[%s3 + $0xc4] sm:$0xf]
    %v2161 = vld [vmem:[%s3 + $0xc8] sm:$0xf]
    %v2162 = vld [vmem:[%s3 + $0xcc] sm:$0xf]
    %v2163 = vld [vmem:[%s3 + $0xd0] sm:$0xf]
    %v2164 = vld [vmem:[%s3 + $0xd4] sm:$0xf]
    %v2165 = vld [vmem:[%s3 + $0xd8] sm:$0xf]
    %v2166 = vld [vmem:[%s3 + $0xdc] sm:$0xf]
    %v2167 = vld [vmem:[%s3 + $0xe0] sm:$0xf]
    %v2168 = vld [vmem:[%s3 + $0xe4] sm:$0xf]
    %v2169 = vld [vmem:[%s3 + $0xe8] sm:$0xf]
    %v2170 = vld [vmem:[%s3 + $0xec] sm:$0xf]
    %v2171 = vld [vmem:[%s3 + $0xf0] sm:$0xf]
    %v2172 = vld [vmem:[%s3 + $0xf4] sm:$0xf]
    %v2173 = vld [vmem:[%s3 + $0xf8] sm:$0xf]
    %v2174 = vld [vmem:[%s3 + $0xfc] sm:$0xf]
    %v2175 = vld [vmem:[%s4] sm:$0x1]
    %v2177 = vperm.slane %v2175, 0
    %v2243 = vunpack.c.l.b16 %v2111
    %v2244 = vunpack.c.l.b16 %v2112
    %v2245 = vunpack.c.l.b16 %v2113
    %v2246 = vunpack.c.l.b16 %v2114
    %v2247 = vunpack.c.l.b16 %v2115
    %v2248 = vunpack.c.l.b16 %v2116
    %v2249 = vunpack.c.l.b16 %v2117
    %v2250 = vunpack.c.l.b16 %v2118
    %v2251 = vunpack.c.l.b16 %v2119
    %v2252 = vunpack.c.l.b16 %v2120
    %v2253 = vunpack.c.l.b16 %v2121
    %v2254 = vunpack.c.l.b16 %v2122
    %v2255 = vunpack.c.l.b16 %v2123
    %v2256 = vunpack.c.l.b16 %v2124
    %v2257 = vunpack.c.l.b16 %v2125
    %v2258 = vunpack.c.l.b16 %v2126
    %v2259 = vunpack.c.l.b16 %v2127
    %v2260 = vunpack.c.l.b16 %v2128
    %v2261 = vunpack.c.l.b16 %v2129
    %v2262 = vunpack.c.l.b16 %v2130
    %v2263 = vunpack.c.l.b16 %v2131
    %v2264 = vunpack.c.l.b16 %v2132
    %v2265 = vunpack.c.l.b16 %v2133
    %v2266 = vunpack.c.l.b16 %v2134
    %v2267 = vunpack.c.l.b16 %v2135
    %v2268 = vunpack.c.l.b16 %v2136
    %v2269 = vunpack.c.l.b16 %v2137
    %v2270 = vunpack.c.l.b16 %v2138
    %v2271 = vunpack.c.l.b16 %v2139
    %v2272 = vunpack.c.l.b16 %v2140
    %v2273 = vunpack.c.l.b16 %v2141
    %v2274 = vunpack.c.l.b16 %v2142
    %v2275 = vunpack.c.l.b16 %v2143
    %v2276 = vunpack.c.l.b16 %v2144
    %v2277 = vunpack.c.l.b16 %v2145
    %v2278 = vunpack.c.l.b16 %v2146
    %v2279 = vunpack.c.l.b16 %v2147
    %v2280 = vunpack.c.l.b16 %v2148
    %v2281 = vunpack.c.l.b16 %v2149
    %v2282 = vunpack.c.l.b16 %v2150
    %v2283 = vunpack.c.l.b16 %v2151
    %v2284 = vunpack.c.l.b16 %v2152
    %v2285 = vunpack.c.l.b16 %v2153
    %v2286 = vunpack.c.l.b16 %v2154
    %v2287 = vunpack.c.l.b16 %v2155
    %v2288 = vunpack.c.l.b16 %v2156
    %v2289 = vunpack.c.l.b16 %v2157
    %v2290 = vunpack.c.l.b16 %v2158
    %v2291 = vunpack.c.l.b16 %v2159
    %v2292 = vunpack.c.l.b16 %v2160
    %v2293 = vunpack.c.l.b16 %v2161
    %v2294 = vunpack.c.l.b16 %v2162
    %v2295 = vunpack.c.l.b16 %v2163
    %v2296 = vunpack.c.l.b16 %v2164
    %v2297 = vunpack.c.l.b16 %v2165
    %v2298 = vunpack.c.l.b16 %v2166
    %v2299 = vunpack.c.l.b16 %v2167
    %v2300 = vunpack.c.l.b16 %v2168
    %v2301 = vunpack.c.l.b16 %v2169
    %v2302 = vunpack.c.l.b16 %v2170
    %v2303 = vunpack.c.l.b16 %v2171
    %v2304 = vunpack.c.l.b16 %v2172
    %v2305 = vunpack.c.l.b16 %v2173
    %v2306 = vunpack.c.l.b16 %v2174
    %v2307 = vpack.c.b16 %v2244, %v2243
    %v2308 = vpack.c.b16 %v2246, %v2245
    %v2309 = vpack.c.b16 %v2248, %v2247
    %v2310 = vpack.c.b16 %v2250, %v2249
    %v2311 = vpack.c.b16 %v2252, %v2251
    %v2312 = vpack.c.b16 %v2254, %v2253
    %v2313 = vpack.c.b16 %v2256, %v2255
    %v2314 = vpack.c.b16 %v2258, %v2257
    %v2315 = vpack.c.b16 %v2260, %v2259
    %v2316 = vpack.c.b16 %v2262, %v2261
    %v2317 = vpack.c.b16 %v2264, %v2263
    %v2318 = vpack.c.b16 %v2266, %v2265
    %v2319 = vpack.c.b16 %v2268, %v2267
    %v2320 = vpack.c.b16 %v2270, %v2269
    %v2321 = vpack.c.b16 %v2272, %v2271
    %v2322 = vpack.c.b16 %v2274, %v2273
    %v2323 = vpack.c.b16 %v2276, %v2275
    %v2324 = vpack.c.b16 %v2278, %v2277
    %v2325 = vpack.c.b16 %v2280, %v2279
    %v2326 = vpack.c.b16 %v2282, %v2281
    %v2327 = vpack.c.b16 %v2284, %v2283
    %v2328 = vpack.c.b16 %v2286, %v2285
    %v2329 = vpack.c.b16 %v2288, %v2287
    %v2330 = vpack.c.b16 %v2290, %v2289
    %v2331 = vpack.c.b16 %v2292, %v2291
    %v2332 = vpack.c.b16 %v2294, %v2293
    %v2333 = vpack.c.b16 %v2296, %v2295
    %v2334 = vpack.c.b16 %v2298, %v2297
    %v2335 = vpack.c.b16 %v2300, %v2299
    %v2336 = vpack.c.b16 %v2302, %v2301
    %v2337 = vpack.c.b16 %v2304, %v2303
    %v2338 = vpack.c.b16 %v2306, %v2305
    %2371 = vmatpush.bf16.msra.mxu0 %v2314
    %2372 = vmatpush.bf16.msra.mxu0 %v2313
    %2373 = vmatpush.bf16.msra.mxu0 %v2312
    %2374 = vmatpush.bf16.msra.mxu0 %v2311
    %2375 = vmatpush.bf16.msra.mxu0 %v2310
    %2376 = vmatpush.bf16.msra.mxu0 %v2309
    %2377 = vmatpush.bf16.msra.mxu0 %v2308
    %2378 = vmatpush.bf16.msra.mxu0 %v2307
    %2379 = vmatmul.bf16.gmra.mxu0 %v2107
    %v2380 = vpop.f32.mrf.mxu0
    %v2381 = vadd.f32 %v2177, %v2380
    %v2382 = vpop.f32.mrf.mxu0
    %v2383 = vadd.f32 %v2177, %v2382
    %2384 = vdwg.mxu0
    %2385 = vmatpush.bf16.msra.mxu0 %v2322
    %2386 = vmatpush.bf16.msra.mxu0 %v2321
    %2387 = vmatpush.bf16.msra.mxu0 %v2320
    %2388 = vmatpush.bf16.msra.mxu0 %v2319
    %2389 = vmatpush.bf16.msra.mxu0 %v2318
    %2390 = vmatpush.bf16.msra.mxu0 %v2317
    %2391 = vmatpush.bf16.msra.mxu0 %v2316
    %2392 = vmatpush.bf16.msra.mxu0 %v2315
    %2393 = vmatmul.bf16.gmra.mxu0 %v2108
    %v2394 = vpop.f32.mrf.mxu0
    %v2395 = vadd.f32 %v2381, %v2394
    %v2396 = vpop.f32.mrf.mxu0
    %v2397 = vadd.f32 %v2383, %v2396
    %2398 = vdwg.mxu0
    %2399 = vmatpush.bf16.msra.mxu0 %v2330
    %2400 = vmatpush.bf16.msra.mxu0 %v2329
    %2401 = vmatpush.bf16.msra.mxu0 %v2328
    %2402 = vmatpush.bf16.msra.mxu0 %v2327
    %2403 = vmatpush.bf16.msra.mxu0 %v2326
    %2404 = vmatpush.bf16.msra.mxu0 %v2325
    %2405 = vmatpush.bf16.msra.mxu0 %v2324
    %2406 = vmatpush.bf16.msra.mxu0 %v2323
    %2407 = vmatmul.bf16.gmra.mxu0 %v2109
    %v2408 = vpop.f32.mrf.mxu0
    %v2409 = vadd.f32 %v2395, %v2408
    %v2410 = vpop.f32.mrf.mxu0
    %v2411 = vadd.f32 %v2397, %v2410
    %2412 = vdwg.mxu0
    %2413 = vmatpush.bf16.msra.mxu0 %v2338
    %2414 = vmatpush.bf16.msra.mxu0 %v2337
    %2415 = vmatpush.bf16.msra.mxu0 %v2336
    %2416 = vmatpush.bf16.msra.mxu0 %v2335
    %2417 = vmatpush.bf16.msra.mxu0 %v2334
    %2418 = vmatpush.bf16.msra.mxu0 %v2333
    %2419 = vmatpush.bf16.msra.mxu0 %v2332
    %2420 = vmatpush.bf16.msra.mxu0 %v2331
    %2421 = vmatmul.bf16.gmra.mxu0 %v2110
    %v2422 = vpop.f32.mrf.mxu0
    %v2423 = vadd.f32 %v2409, %v2422
    %v2424 = vpop.f32.mrf.mxu0
    %v2425 = vadd.f32 %v2411, %v2424
    %2426 = vdwg.mxu0
    %2427 = vst [vmem:[%s9] sm:$0xff] %v2423
    %2428 = vst [vmem:[%s9 + $0x8] sm:$0xff] %v2425
    %v2429 = vpack.c.bf16 %v2425, %v2423
    %v2430 = vld [vmem:[#allocation4] sm:$0xff]
    %v2431 = vld [vmem:[#allocation4 + $0x8] sm:$0xff]
    %v2432 = vld [vmem:[#allocation4 + $0x10] sm:$0xff]
    %v2433 = vld [vmem:[#allocation4 + $0x18] sm:$0xff]
    %v2434 = vld [vmem:[#allocation4 + $0x20] sm:$0xff]
    %v2435 = vld [vmem:[#allocation4 + $0x28] sm:$0xff]
    %v2436 = vld [vmem:[#allocation4 + $0x30] sm:$0xff]
    %v2437 = vld [vmem:[#allocation4 + $0x38] sm:$0xff]
    %v2438 = vld [vmem:[#allocation4 + $0x40] sm:$0xff]
    %v2439 = vld [vmem:[#allocation4 + $0x48] sm:$0xff]
    %v2440 = vld [vmem:[#allocation4 + $0x50] sm:$0xff]
    %v2441 = vld [vmem:[#allocation4 + $0x58] sm:$0xff]
    %v2442 = vld [vmem:[#allocation4 + $0x60] sm:$0xff]
    %v2443 = vld [vmem:[#allocation4 + $0x68] sm:$0xff]
    %v2444 = vld [vmem:[#allocation4 + $0x70] sm:$0xff]
    %v2445 = vld [vmem:[#allocation4 + $0x78] sm:$0xff]
    %v2446 = vld [vmem:[#allocation4 + $0x80] sm:$0xff]
    %v2447 = vld [vmem:[#allocation4 + $0x88] sm:$0xff]
    %v2448 = vld [vmem:[#allocation4 + $0x90] sm:$0xff]
    %v2449 = vld [vmem:[#allocation4 + $0x98] sm:$0xff]
    %v2450 = vld [vmem:[#allocation4 + $0xa0] sm:$0xff]
    %v2451 = vld [vmem:[#allocation4 + $0xa8] sm:$0xff]
    %v2452 = vld [vmem:[#allocation4 + $0xb0] sm:$0xff]
    %v2453 = vld [vmem:[#allocation4 + $0xb8] sm:$0xff]
    %v2454 = vld [vmem:[#allocation4 + $0xc0] sm:$0xff]
    %v2455 = vld [vmem:[#allocation4 + $0xc8] sm:$0xff]
    %v2456 = vld [vmem:[#allocation4 + $0xd0] sm:$0xff]
    %v2457 = vld [vmem:[#allocation4 + $0xd8] sm:$0xff]
    %v2458 = vld [vmem:[#allocation4 + $0xe0] sm:$0xff]
    %v2459 = vld [vmem:[#allocation4 + $0xe8] sm:$0xff]
    %v2460 = vld [vmem:[#allocation4 + $0xf0] sm:$0xff]
    %v2461 = vld [vmem:[#allocation4 + $0xf8] sm:$0xff]
    %v2462 = vld [vmem:[%s6] sm:$0xf]
    %v2464 = vperm.slane %v2462, 0
    %v2465 = vperm.slane %v2462, 1
    %v2466 = vperm.slane %v2462, 2
    %v2467 = vperm.slane %v2462, 3
    %v2504 = vunpack.c.l.b16 %v2430
    %v2505 = vunpack.c.h.b16 %v2430
    %v2506 = vunpack.c.l.b16 %v2431
    %v2507 = vunpack.c.h.b16 %v2431
    %v2508 = vunpack.c.l.b16 %v2432
    %v2509 = vunpack.c.h.b16 %v2432
    %v2510 = vunpack.c.l.b16 %v2433
    %v2511 = vunpack.c.h.b16 %v2433
    %v2512 = vunpack.c.l.b16 %v2434
    %v2513 = vunpack.c.h.b16 %v2434
    %v2514 = vunpack.c.l.b16 %v2435
    %v2515 = vunpack.c.h.b16 %v2435
    %v2516 = vunpack.c.l.b16 %v2436
    %v2517 = vunpack.c.h.b16 %v2436
    %v2518 = vunpack.c.l.b16 %v2437
    %v2519 = vunpack.c.h.b16 %v2437
    %v2520 = vunpack.c.l.b16 %v2438
    %v2521 = vunpack.c.h.b16 %v2438
    %v2522 = vunpack.c.l.b16 %v2439
    %v2523 = vunpack.c.h.b16 %v2439
    %v2524 = vunpack.c.l.b16 %v2440
    %v2525 = vunpack.c.h.b16 %v2440
    %v2526 = vunpack.c.l.b16 %v2441
    %v2527 = vunpack.c.h.b16 %v2441
    %v2528 = vunpack.c.l.b16 %v2442
    %v2529 = vunpack.c.h.b16 %v2442
    %v2530 = vunpack.c.l.b16 %v2443
    %v2531 = vunpack.c.h.b16 %v2443
    %v2532 = vunpack.c.l.b16 %v2444
    %v2533 = vunpack.c.h.b16 %v2444
    %v2534 = vunpack.c.l.b16 %v2445
    %v2535 = vunpack.c.h.b16 %v2445
    %v2536 = vunpack.c.l.b16 %v2446
    %v2537 = vunpack.c.h.b16 %v2446
    %v2538 = vunpack.c.l.b16 %v2447
    %v2539 = vunpack.c.h.b16 %v2447
    %v2540 = vunpack.c.l.b16 %v2448
    %v2541 = vunpack.c.h.b16 %v2448
    %v2542 = vunpack.c.l.b16 %v2449
    %v2543 = vunpack.c.h.b16 %v2449
    %v2544 = vunpack.c.l.b16 %v2450
    %v2545 = vunpack.c.h.b16 %v2450
    %v2546 = vunpack.c.l.b16 %v2451
    %v2547 = vunpack.c.h.b16 %v2451
    %v2548 = vunpack.c.l.b16 %v2452
    %v2549 = vunpack.c.h.b16 %v2452
    %v2550 = vunpack.c.l.b16 %v2453
    %v2551 = vunpack.c.h.b16 %v2453
    %v2552 = vunpack.c.l.b16 %v2454
    %v2553 = vunpack.c.h.b16 %v2454
    %v2554 = vunpack.c.l.b16 %v2455
    %v2555 = vunpack.c.h.b16 %v2455
    %v2556 = vunpack.c.l.b16 %v2456
    %v2557 = vunpack.c.h.b16 %v2456
    %v2558 = vunpack.c.l.b16 %v2457
    %v2559 = vunpack.c.h.b16 %v2457
    %v2560 = vunpack.c.l.b16 %v2458
    %v2561 = vunpack.c.h.b16 %v2458
    %v2562 = vunpack.c.l.b16 %v2459
    %v2563 = vunpack.c.h.b16 %v2459
    %v2564 = vunpack.c.l.b16 %v2460
    %v2565 = vunpack.c.h.b16 %v2460
    %v2566 = vunpack.c.l.b16 %v2461
    %v2567 = vunpack.c.h.b16 %v2461
    %v2568 = vpack.c.b16 %v2508, %v2504
    %v2569 = vpack.c.b16 %v2509, %v2505
    %v2570 = vpack.c.b16 %v2510, %v2506
    %v2571 = vpack.c.b16 %v2511, %v2507
    %v2572 = vpack.c.b16 %v2516, %v2512
    %v2573 = vpack.c.b16 %v2517, %v2513
    %v2574 = vpack.c.b16 %v2518, %v2514
    %v2575 = vpack.c.b16 %v2519, %v2515
    %v2576 = vpack.c.b16 %v2524, %v2520
    %v2577 = vpack.c.b16 %v2525, %v2521
    %v2578 = vpack.c.b16 %v2526, %v2522
    %v2579 = vpack.c.b16 %v2527, %v2523
    %v2580 = vpack.c.b16 %v2532, %v2528
    %v2581 = vpack.c.b16 %v2533, %v2529
    %v2582 = vpack.c.b16 %v2534, %v2530
    %v2583 = vpack.c.b16 %v2535, %v2531
    %v2584 = vpack.c.b16 %v2540, %v2536
    %v2585 = vpack.c.b16 %v2541, %v2537
    %v2586 = vpack.c.b16 %v2542, %v2538
    %v2587 = vpack.c.b16 %v2543, %v2539
    %v2588 = vpack.c.b16 %v2548, %v2544
    %v2589 = vpack.c.b16 %v2549, %v2545
    %v2590 = vpack.c.b16 %v2550, %v2546
    %v2591 = vpack.c.b16 %v2551, %v2547
    %v2592 = vpack.c.b16 %v2556, %v2552
    %v2593 = vpack.c.b16 %v2557, %v2553
    %v2594 = vpack.c.b16 %v2558, %v2554
    %v2595 = vpack.c.b16 %v2559, %v2555
    %v2596 = vpack.c.b16 %v2564, %v2560
    %v2597 = vpack.c.b16 %v2565, %v2561
    %v2598 = vpack.c.b16 %v2566, %v2562
    %v2599 = vpack.c.b16 %v2567, %v2563
    %2632 = vmatpush.bf16.msra.mxu0 %v2596
    %2633 = vmatpush.bf16.msra.mxu0 %v2592
    %2634 = vmatpush.bf16.msra.mxu0 %v2588
    %2635 = vmatpush.bf16.msra.mxu0 %v2584
    %2636 = vmatpush.bf16.msra.mxu0 %v2580
    %2637 = vmatpush.bf16.msra.mxu0 %v2576
    %2638 = vmatpush.bf16.msra.mxu0 %v2572
    %2639 = vmatpush.bf16.msra.mxu0 %v2568
    %2640 = vmatmul.bf16.gmra.mxu0 %v2429
    %v2641 = vpop.f32.mrf.mxu0
    %v2642 = vadd.f32 %v2464, %v2641
    %v2643 = vpop.f32.mrf.mxu0
    %v2644 = vadd.f32 %v2464, %v2643
    %2645 = vdwg.mxu0
    %2646 = vmatpush.bf16.msra.mxu0 %v2597
    %2647 = vmatpush.bf16.msra.mxu0 %v2593
    %2648 = vmatpush.bf16.msra.mxu0 %v2589
    %2649 = vmatpush.bf16.msra.mxu0 %v2585
    %2650 = vmatpush.bf16.msra.mxu0 %v2581
    %2651 = vmatpush.bf16.msra.mxu0 %v2577
    %2652 = vmatpush.bf16.msra.mxu0 %v2573
    %2653 = vmatpush.bf16.msra.mxu0 %v2569
    %2654 = vmatmul.bf16.gmra.mxu0 %v2429
    %v2655 = vpop.f32.mrf.mxu0
    %v2656 = vadd.f32 %v2465, %v2655
    %v2657 = vpop.f32.mrf.mxu0
    %v2658 = vadd.f32 %v2465, %v2657
    %2659 = vdwg.mxu0
    %2660 = vmatpush.bf16.msra.mxu0 %v2598
    %2661 = vmatpush.bf16.msra.mxu0 %v2594
    %2662 = vmatpush.bf16.msra.mxu0 %v2590
    %2663 = vmatpush.bf16.msra.mxu0 %v2586
    %2664 = vmatpush.bf16.msra.mxu0 %v2582
    %2665 = vmatpush.bf16.msra.mxu0 %v2578
    %2666 = vmatpush.bf16.msra.mxu0 %v2574
    %2667 = vmatpush.bf16.msra.mxu0 %v2570
    %2668 = vmatmul.bf16.gmra.mxu0 %v2429
    %v2669 = vpop.f32.mrf.mxu0
    %v2670 = vadd.f32 %v2466, %v2669
    %v2671 = vpop.f32.mrf.mxu0
    %v2672 = vadd.f32 %v2466, %v2671
    %2673 = vdwg.mxu0
    %2674 = vmatpush.bf16.msra.mxu0 %v2599
    %2675 = vmatpush.bf16.msra.mxu0 %v2595
    %2676 = vmatpush.bf16.msra.mxu0 %v2591
    %2677 = vmatpush.bf16.msra.mxu0 %v2587
    %2678 = vmatpush.bf16.msra.mxu0 %v2583
    %2679 = vmatpush.bf16.msra.mxu0 %v2579
    %2680 = vmatpush.bf16.msra.mxu0 %v2575
    %2681 = vmatpush.bf16.msra.mxu0 %v2571
    %2682 = vmatmul.bf16.gmra.mxu0 %v2429
    %v2683 = vpop.f32.mrf.mxu0
    %v2684 = vadd.f32 %v2467, %v2683
    %v2685 = vpop.f32.mrf.mxu0
    %v2686 = vadd.f32 %v2467, %v2685
    %2687 = vdwg.mxu0
    %v2688 = vmax.f32 %v2642, 0.0
    %v2689 = vmax.f32 %v2656, 0.0
    %v2690 = vmax.f32 %v2670, 0.0
    %v2691 = vmax.f32 %v2684, 0.0
    %v2692 = vmax.f32 %v2644, 0.0
    %v2693 = vmax.f32 %v2658, 0.0
    %v2694 = vmax.f32 %v2672, 0.0
    %v2695 = vmax.f32 %v2686, 0.0
    %v2696 = vpack.c.bf16 %v2692, %v2688
    %v2697 = vpack.c.bf16 %v2693, %v2689
    %v2698 = vpack.c.bf16 %v2694, %v2690
    %v2699 = vpack.c.bf16 %v2695, %v2691
    %v2700 = vld [vmem:[#allocation6] sm:$0xff]
    %v2701 = vld [vmem:[#allocation6 + $0x8] sm:$0xff]
    %v2702 = vld [vmem:[#allocation6 + $0x10] sm:$0xff]
    %v2703 = vld [vmem:[#allocation6 + $0x18] sm:$0xff]
    %v2704 = vld [vmem:[#allocation6 + $0x20] sm:$0xff]
    %v2705 = vld [vmem:[#allocation6 + $0x28] sm:$0xff]
    %v2706 = vld [vmem:[#allocation6 + $0x30] sm:$0xff]
    %v2707 = vld [vmem:[#allocation6 + $0x38] sm:$0xff]
    %v2708 = vld [vmem:[#allocation6 + $0x40] sm:$0xff]
    %v2709 = vld [vmem:[#allocation6 + $0x48] sm:$0xff]
    %v2710 = vld [vmem:[#allocation6 + $0x50] sm:$0xff]
    %v2711 = vld [vmem:[#allocation6 + $0x58] sm:$0xff]
    %v2712 = vld [vmem:[#allocation6 + $0x60] sm:$0xff]
    %v2713 = vld [vmem:[#allocation6 + $0x68] sm:$0xff]
    %v2714 = vld [vmem:[#allocation6 + $0x70] sm:$0xff]
    %v2715 = vld [vmem:[#allocation6 + $0x78] sm:$0xff]
    %v2716 = vld [vmem:[#allocation6 + $0x80] sm:$0xff]
    %v2717 = vld [vmem:[#allocation6 + $0x88] sm:$0xff]
    %v2718 = vld [vmem:[#allocation6 + $0x90] sm:$0xff]
    %v2719 = vld [vmem:[#allocation6 + $0x98] sm:$0xff]
    %v2720 = vld [vmem:[#allocation6 + $0xa0] sm:$0xff]
    %v2721 = vld [vmem:[#allocation6 + $0xa8] sm:$0xff]
    %v2722 = vld [vmem:[#allocation6 + $0xb0] sm:$0xff]
    %v2723 = vld [vmem:[#allocation6 + $0xb8] sm:$0xff]
    %v2724 = vld [vmem:[#allocation6 + $0xc0] sm:$0xff]
    %v2725 = vld [vmem:[#allocation6 + $0xc8] sm:$0xff]
    %v2726 = vld [vmem:[#allocation6 + $0xd0] sm:$0xff]
    %v2727 = vld [vmem:[#allocation6 + $0xd8] sm:$0xff]
    %v2728 = vld [vmem:[#allocation6 + $0xe0] sm:$0xff]
    %v2729 = vld [vmem:[#allocation6 + $0xe8] sm:$0xff]
    %v2730 = vld [vmem:[#allocation6 + $0xf0] sm:$0xff]
    %v2731 = vld [vmem:[#allocation6 + $0xf8] sm:$0xff]
    %v2732 = vld [vmem:[#allocation6 + $0x100] sm:$0xff]
    %v2733 = vld [vmem:[#allocation6 + $0x108] sm:$0xff]
    %v2734 = vld [vmem:[#allocation6 + $0x110] sm:$0xff]
    %v2735 = vld [vmem:[#allocation6 + $0x118] sm:$0xff]
    %v2736 = vld [vmem:[#allocation6 + $0x120] sm:$0xff]
    %v2737 = vld [vmem:[#allocation6 + $0x128] sm:$0xff]
    %v2738 = vld [vmem:[#allocation6 + $0x130] sm:$0xff]
    %v2739 = vld [vmem:[#allocation6 + $0x138] sm:$0xff]
    %v2740 = vld [vmem:[#allocation6 + $0x140] sm:$0xff]
    %v2741 = vld [vmem:[#allocation6 + $0x148] sm:$0xff]
    %v2742 = vld [vmem:[#allocation6 + $0x150] sm:$0xff]
    %v2743 = vld [vmem:[#allocation6 + $0x158] sm:$0xff]
    %v2744 = vld [vmem:[#allocation6 + $0x160] sm:$0xff]
    %v2745 = vld [vmem:[#allocation6 + $0x168] sm:$0xff]
    %v2746 = vld [vmem:[#allocation6 + $0x170] sm:$0xff]
    %v2747 = vld [vmem:[#allocation6 + $0x178] sm:$0xff]
    %v2748 = vld [vmem:[#allocation6 + $0x180] sm:$0xff]
    %v2749 = vld [vmem:[#allocation6 + $0x188] sm:$0xff]
    %v2750 = vld [vmem:[#allocation6 + $0x190] sm:$0xff]
    %v2751 = vld [vmem:[#allocation6 + $0x198] sm:$0xff]
    %v2752 = vld [vmem:[#allocation6 + $0x1a0] sm:$0xff]
    %v2753 = vld [vmem:[#allocation6 + $0x1a8] sm:$0xff]
    %v2754 = vld [vmem:[#allocation6 + $0x1b0] sm:$0xff]
    %v2755 = vld [vmem:[#allocation6 + $0x1b8] sm:$0xff]
    %v2756 = vld [vmem:[#allocation6 + $0x1c0] sm:$0xff]
    %v2757 = vld [vmem:[#allocation6 + $0x1c8] sm:$0xff]
    %v2758 = vld [vmem:[#allocation6 + $0x1d0] sm:$0xff]
    %v2759 = vld [vmem:[#allocation6 + $0x1d8] sm:$0xff]
    %v2760 = vld [vmem:[#allocation6 + $0x1e0] sm:$0xff]
    %v2761 = vld [vmem:[#allocation6 + $0x1e8] sm:$0xff]
    %v2762 = vld [vmem:[#allocation6 + $0x1f0] sm:$0xff]
    %v2763 = vld [vmem:[#allocation6 + $0x1f8] sm:$0xff]
    %v2764 = vld [vmem:[#allocation6 + $0x200] sm:$0xff]
    %v2765 = vld [vmem:[#allocation6 + $0x208] sm:$0xff]
    %v2766 = vld [vmem:[#allocation6 + $0x210] sm:$0xff]
    %v2767 = vld [vmem:[#allocation6 + $0x218] sm:$0xff]
    %v2768 = vld [vmem:[#allocation6 + $0x220] sm:$0xff]
    %v2769 = vld [vmem:[#allocation6 + $0x228] sm:$0xff]
    %v2770 = vld [vmem:[#allocation6 + $0x230] sm:$0xff]
    %v2771 = vld [vmem:[#allocation6 + $0x238] sm:$0xff]
    %v2772 = vld [vmem:[#allocation6 + $0x240] sm:$0xff]
    %v2773 = vld [vmem:[#allocation6 + $0x248] sm:$0xff]
    %v2774 = vld [vmem:[#allocation6 + $0x250] sm:$0xff]
    %v2775 = vld [vmem:[#allocation6 + $0x258] sm:$0xff]
    %v2776 = vld [vmem:[#allocation6 + $0x260] sm:$0xff]
    %v2777 = vld [vmem:[#allocation6 + $0x268] sm:$0xff]
    %v2778 = vld [vmem:[#allocation6 + $0x270] sm:$0xff]
    %v2779 = vld [vmem:[#allocation6 + $0x278] sm:$0xff]
    %v2780 = vld [vmem:[#allocation6 + $0x280] sm:$0xff]
    %v2781 = vld [vmem:[#allocation6 + $0x288] sm:$0xff]
    %v2782 = vld [vmem:[#allocation6 + $0x290] sm:$0xff]
    %v2783 = vld [vmem:[#allocation6 + $0x298] sm:$0xff]
    %v2784 = vld [vmem:[#allocation6 + $0x2a0] sm:$0xff]
    %v2785 = vld [vmem:[#allocation6 + $0x2a8] sm:$0xff]
    %v2786 = vld [vmem:[#allocation6 + $0x2b0] sm:$0xff]
    %v2787 = vld [vmem:[#allocation6 + $0x2b8] sm:$0xff]
    %v2788 = vld [vmem:[#allocation6 + $0x2c0] sm:$0xff]
    %v2789 = vld [vmem:[#allocation6 + $0x2c8] sm:$0xff]
    %v2790 = vld [vmem:[#allocation6 + $0x2d0] sm:$0xff]
    %v2791 = vld [vmem:[#allocation6 + $0x2d8] sm:$0xff]
    %v2792 = vld [vmem:[#allocation6 + $0x2e0] sm:$0xff]
    %v2793 = vld [vmem:[#allocation6 + $0x2e8] sm:$0xff]
    %v2794 = vld [vmem:[#allocation6 + $0x2f0] sm:$0xff]
    %v2795 = vld [vmem:[#allocation6 + $0x2f8] sm:$0xff]
    %v2796 = vld [vmem:[#allocation6 + $0x300] sm:$0xff]
    %v2797 = vld [vmem:[#allocation6 + $0x308] sm:$0xff]
    %v2798 = vld [vmem:[#allocation6 + $0x310] sm:$0xff]
    %v2799 = vld [vmem:[#allocation6 + $0x318] sm:$0xff]
    %v2800 = vld [vmem:[#allocation6 + $0x320] sm:$0xff]
    %v2801 = vld [vmem:[#allocation6 + $0x328] sm:$0xff]
    %v2802 = vld [vmem:[#allocation6 + $0x330] sm:$0xff]
    %v2803 = vld [vmem:[#allocation6 + $0x338] sm:$0xff]
    %v2804 = vld [vmem:[#allocation6 + $0x340] sm:$0xff]
    %v2805 = vld [vmem:[#allocation6 + $0x348] sm:$0xff]
    %v2806 = vld [vmem:[#allocation6 + $0x350] sm:$0xff]
    %v2807 = vld [vmem:[#allocation6 + $0x358] sm:$0xff]
    %v2808 = vld [vmem:[#allocation6 + $0x360] sm:$0xff]
    %v2809 = vld [vmem:[#allocation6 + $0x368] sm:$0xff]
    %v2810 = vld [vmem:[#allocation6 + $0x370] sm:$0xff]
    %v2811 = vld [vmem:[#allocation6 + $0x378] sm:$0xff]
    %v2812 = vld [vmem:[#allocation6 + $0x380] sm:$0xff]
    %v2813 = vld [vmem:[#allocation6 + $0x388] sm:$0xff]
    %v2814 = vld [vmem:[#allocation6 + $0x390] sm:$0xff]
    %v2815 = vld [vmem:[#allocation6 + $0x398] sm:$0xff]
    %v2816 = vld [vmem:[#allocation6 + $0x3a0] sm:$0xff]
    %v2817 = vld [vmem:[#allocation6 + $0x3a8] sm:$0xff]
    %v2818 = vld [vmem:[#allocation6 + $0x3b0] sm:$0xff]
    %v2819 = vld [vmem:[#allocation6 + $0x3b8] sm:$0xff]
    %v2820 = vld [vmem:[#allocation6 + $0x3c0] sm:$0xff]
    %v2821 = vld [vmem:[#allocation6 + $0x3c8] sm:$0xff]
    %v2822 = vld [vmem:[#allocation6 + $0x3d0] sm:$0xff]
    %v2823 = vld [vmem:[#allocation6 + $0x3d8] sm:$0xff]
    %v2824 = vld [vmem:[#allocation6 + $0x3e0] sm:$0xff]
    %v2825 = vld [vmem:[#allocation6 + $0x3e8] sm:$0xff]
    %v2826 = vld [vmem:[#allocation6 + $0x3f0] sm:$0xff]
    %v2827 = vld [vmem:[#allocation6 + $0x3f8] sm:$0xff]
    %v2828 = vld [vmem:[#allocation6 + $0x400] sm:$0xff]
    %v2829 = vld [vmem:[#allocation6 + $0x408] sm:$0xff]
    %v2830 = vld [vmem:[#allocation6 + $0x410] sm:$0xff]
    %v2831 = vld [vmem:[#allocation6 + $0x418] sm:$0xff]
    %v2832 = vld [vmem:[#allocation6 + $0x420] sm:$0xff]
    %v2833 = vld [vmem:[#allocation6 + $0x428] sm:$0xff]
    %v2834 = vld [vmem:[#allocation6 + $0x430] sm:$0xff]
    %v2835 = vld [vmem:[#allocation6 + $0x438] sm:$0xff]
    %v2836 = vld [vmem:[#allocation6 + $0x440] sm:$0xff]
    %v2837 = vld [vmem:[#allocation6 + $0x448] sm:$0xff]
    %v2838 = vld [vmem:[#allocation6 + $0x450] sm:$0xff]
    %v2839 = vld [vmem:[#allocation6 + $0x458] sm:$0xff]
    %v2840 = vld [vmem:[#allocation6 + $0x460] sm:$0xff]
    %v2841 = vld [vmem:[#allocation6 + $0x468] sm:$0xff]
    %v2842 = vld [vmem:[#allocation6 + $0x470] sm:$0xff]
    %v2843 = vld [vmem:[#allocation6 + $0x478] sm:$0xff]
    %v2844 = vld [vmem:[#allocation6 + $0x480] sm:$0xff]
    %v2845 = vld [vmem:[#allocation6 + $0x488] sm:$0xff]
    %v2846 = vld [vmem:[#allocation6 + $0x490] sm:$0xff]
    %v2847 = vld [vmem:[#allocation6 + $0x498] sm:$0xff]
    %v2848 = vld [vmem:[#allocation6 + $0x4a0] sm:$0xff]
    %v2849 = vld [vmem:[#allocation6 + $0x4a8] sm:$0xff]
    %v2850 = vld [vmem:[#allocation6 + $0x4b0] sm:$0xff]
    %v2851 = vld [vmem:[#allocation6 + $0x4b8] sm:$0xff]
    %v2852 = vld [vmem:[#allocation6 + $0x4c0] sm:$0xff]
    %v2853 = vld [vmem:[#allocation6 + $0x4c8] sm:$0xff]
    %v2854 = vld [vmem:[#allocation6 + $0x4d0] sm:$0xff]
    %v2855 = vld [vmem:[#allocation6 + $0x4d8] sm:$0xff]
    %v2856 = vld [vmem:[#allocation6 + $0x4e0] sm:$0xff]
    %v2857 = vld [vmem:[#allocation6 + $0x4e8] sm:$0xff]
    %v2858 = vld [vmem:[#allocation6 + $0x4f0] sm:$0xff]
    %v2859 = vld [vmem:[#allocation6 + $0x4f8] sm:$0xff]
    %v2860 = vld [vmem:[#allocation6 + $0x500] sm:$0xff]
    %v2861 = vld [vmem:[#allocation6 + $0x508] sm:$0xff]
    %v2862 = vld [vmem:[#allocation6 + $0x510] sm:$0xff]
    %v2863 = vld [vmem:[#allocation6 + $0x518] sm:$0xff]
    %v2864 = vld [vmem:[#allocation6 + $0x520] sm:$0xff]
    %v2865 = vld [vmem:[#allocation6 + $0x528] sm:$0xff]
    %v2866 = vld [vmem:[#allocation6 + $0x530] sm:$0xff]
    %v2867 = vld [vmem:[#allocation6 + $0x538] sm:$0xff]
    %v2868 = vld [vmem:[#allocation6 + $0x540] sm:$0xff]
    %v2869 = vld [vmem:[#allocation6 + $0x548] sm:$0xff]
    %v2870 = vld [vmem:[#allocation6 + $0x550] sm:$0xff]
    %v2871 = vld [vmem:[#allocation6 + $0x558] sm:$0xff]
    %v2872 = vld [vmem:[#allocation6 + $0x560] sm:$0xff]
    %v2873 = vld [vmem:[#allocation6 + $0x568] sm:$0xff]
    %v2874 = vld [vmem:[#allocation6 + $0x570] sm:$0xff]
    %v2875 = vld [vmem:[#allocation6 + $0x578] sm:$0xff]
    %v2876 = vld [vmem:[#allocation6 + $0x580] sm:$0xff]
    %v2877 = vld [vmem:[#allocation6 + $0x588] sm:$0xff]
    %v2878 = vld [vmem:[#allocation6 + $0x590] sm:$0xff]
    %v2879 = vld [vmem:[#allocation6 + $0x598] sm:$0xff]
    %v2880 = vld [vmem:[#allocation6 + $0x5a0] sm:$0xff]
    %v2881 = vld [vmem:[#allocation6 + $0x5a8] sm:$0xff]
    %v2882 = vld [vmem:[#allocation6 + $0x5b0] sm:$0xff]
    %v2883 = vld [vmem:[#allocation6 + $0x5b8] sm:$0xff]
    %v2884 = vld [vmem:[#allocation6 + $0x5c0] sm:$0xff]
    %v2885 = vld [vmem:[#allocation6 + $0x5c8] sm:$0xff]
    %v2886 = vld [vmem:[#allocation6 + $0x5d0] sm:$0xff]
    %v2887 = vld [vmem:[#allocation6 + $0x5d8] sm:$0xff]
    %v2888 = vld [vmem:[#allocation6 + $0x5e0] sm:$0xff]
    %v2889 = vld [vmem:[#allocation6 + $0x5e8] sm:$0xff]
    %v2890 = vld [vmem:[#allocation6 + $0x5f0] sm:$0xff]
    %v2891 = vld [vmem:[#allocation6 + $0x5f8] sm:$0xff]
    %v2892 = vld [vmem:[#allocation6 + $0x600] sm:$0xff]
    %v2893 = vld [vmem:[#allocation6 + $0x608] sm:$0xff]
    %v2894 = vld [vmem:[#allocation6 + $0x610] sm:$0xff]
    %v2895 = vld [vmem:[#allocation6 + $0x618] sm:$0xff]
    %v2896 = vld [vmem:[#allocation6 + $0x620] sm:$0xff]
    %v2897 = vld [vmem:[#allocation6 + $0x628] sm:$0xff]
    %v2898 = vld [vmem:[#allocation6 + $0x630] sm:$0xff]
    %v2899 = vld [vmem:[#allocation6 + $0x638] sm:$0xff]
    %v2900 = vld [vmem:[#allocation6 + $0x640] sm:$0xff]
    %v2901 = vld [vmem:[#allocation6 + $0x648] sm:$0xff]
    %v2902 = vld [vmem:[#allocation6 + $0x650] sm:$0xff]
    %v2903 = vld [vmem:[#allocation6 + $0x658] sm:$0xff]
    %v2904 = vld [vmem:[#allocation6 + $0x660] sm:$0xff]
    %v2905 = vld [vmem:[#allocation6 + $0x668] sm:$0xff]
    %v2906 = vld [vmem:[#allocation6 + $0x670] sm:$0xff]
    %v2907 = vld [vmem:[#allocation6 + $0x678] sm:$0xff]
    %v2908 = vld [vmem:[#allocation6 + $0x680] sm:$0xff]
    %v2909 = vld [vmem:[#allocation6 + $0x688] sm:$0xff]
    %v2910 = vld [vmem:[#allocation6 + $0x690] sm:$0xff]
    %v2911 = vld [vmem:[#allocation6 + $0x698] sm:$0xff]
    %v2912 = vld [vmem:[#allocation6 + $0x6a0] sm:$0xff]
    %v2913 = vld [vmem:[#allocation6 + $0x6a8] sm:$0xff]
    %v2914 = vld [vmem:[#allocation6 + $0x6b0] sm:$0xff]
    %v2915 = vld [vmem:[#allocation6 + $0x6b8] sm:$0xff]
    %v2916 = vld [vmem:[#allocation6 + $0x6c0] sm:$0xff]
    %v2917 = vld [vmem:[#allocation6 + $0x6c8] sm:$0xff]
    %v2918 = vld [vmem:[#allocation6 + $0x6d0] sm:$0xff]
    %v2919 = vld [vmem:[#allocation6 + $0x6d8] sm:$0xff]
    %v2920 = vld [vmem:[#allocation6 + $0x6e0] sm:$0xff]
    %v2921 = vld [vmem:[#allocation6 + $0x6e8] sm:$0xff]
    %v2922 = vld [vmem:[#allocation6 + $0x6f0] sm:$0xff]
    %v2923 = vld [vmem:[#allocation6 + $0x6f8] sm:$0xff]
    %v2924 = vld [vmem:[#allocation6 + $0x700] sm:$0xff]
    %v2925 = vld [vmem:[#allocation6 + $0x708] sm:$0xff]
    %v2926 = vld [vmem:[#allocation6 + $0x710] sm:$0xff]
    %v2927 = vld [vmem:[#allocation6 + $0x718] sm:$0xff]
    %v2928 = vld [vmem:[#allocation6 + $0x720] sm:$0xff]
    %v2929 = vld [vmem:[#allocation6 + $0x728] sm:$0xff]
    %v2930 = vld [vmem:[#allocation6 + $0x730] sm:$0xff]
    %v2931 = vld [vmem:[#allocation6 + $0x738] sm:$0xff]
    %v2932 = vld [vmem:[#allocation6 + $0x740] sm:$0xff]
    %v2933 = vld [vmem:[#allocation6 + $0x748] sm:$0xff]
    %v2934 = vld [vmem:[#allocation6 + $0x750] sm:$0xff]
    %v2935 = vld [vmem:[#allocation6 + $0x758] sm:$0xff]
    %v2936 = vld [vmem:[#allocation6 + $0x760] sm:$0xff]
    %v2937 = vld [vmem:[#allocation6 + $0x768] sm:$0xff]
    %v2938 = vld [vmem:[#allocation6 + $0x770] sm:$0xff]
    %v2939 = vld [vmem:[#allocation6 + $0x778] sm:$0xff]
    %v2940 = vld [vmem:[#allocation6 + $0x780] sm:$0xff]
    %v2941 = vld [vmem:[#allocation6 + $0x788] sm:$0xff]
    %v2942 = vld [vmem:[#allocation6 + $0x790] sm:$0xff]
    %v2943 = vld [vmem:[#allocation6 + $0x798] sm:$0xff]
    %v2944 = vld [vmem:[#allocation6 + $0x7a0] sm:$0xff]
    %v2945 = vld [vmem:[#allocation6 + $0x7a8] sm:$0xff]
    %v2946 = vld [vmem:[#allocation6 + $0x7b0] sm:$0xff]
    %v2947 = vld [vmem:[#allocation6 + $0x7b8] sm:$0xff]
    %v2948 = vld [vmem:[#allocation6 + $0x7c0] sm:$0xff]
    %v2949 = vld [vmem:[#allocation6 + $0x7c8] sm:$0xff]
    %v2950 = vld [vmem:[#allocation6 + $0x7d0] sm:$0xff]
    %v2951 = vld [vmem:[#allocation6 + $0x7d8] sm:$0xff]
    %v2952 = vld [vmem:[#allocation6 + $0x7e0] sm:$0xff]
    %v2953 = vld [vmem:[#allocation6 + $0x7e8] sm:$0xff]
    %v2954 = vld [vmem:[#allocation6 + $0x7f0] sm:$0xff]
    %v2955 = vld [vmem:[#allocation6 + $0x7f8] sm:$0xff]
    %v2956 = vld [vmem:[%s8] sm:$0xff]
    %v2958 = vperm.slane %v2956, 0
    %v2959 = vperm.slane %v2956, 1
    %v2960 = vperm.slane %v2956, 2
    %v2961 = vperm.slane %v2956, 3
    %v2962 = vperm.slane %v2956, 4
    %v2963 = vperm.slane %v2956, 5
    %v2964 = vperm.slane %v2956, 6
    %v2965 = vperm.slane %v2956, 7
    %v3230 = vunpack.c.l.b16 %v2700
    %v3231 = vunpack.c.h.b16 %v2700
    %v3232 = vunpack.c.l.b16 %v2701
    %v3233 = vunpack.c.h.b16 %v2701
    %v3234 = vunpack.c.l.b16 %v2702
    %v3235 = vunpack.c.h.b16 %v2702
    %v3236 = vunpack.c.l.b16 %v2703
    %v3237 = vunpack.c.h.b16 %v2703
    %v3238 = vunpack.c.l.b16 %v2704
    %v3239 = vunpack.c.h.b16 %v2704
    %v3240 = vunpack.c.l.b16 %v2705
    %v3241 = vunpack.c.h.b16 %v2705
    %v3242 = vunpack.c.l.b16 %v2706
    %v3243 = vunpack.c.h.b16 %v2706
    %v3244 = vunpack.c.l.b16 %v2707
    %v3245 = vunpack.c.h.b16 %v2707
    %v3246 = vunpack.c.l.b16 %v2708
    %v3247 = vunpack.c.h.b16 %v2708
    %v3248 = vunpack.c.l.b16 %v2709
    %v3249 = vunpack.c.h.b16 %v2709
    %v3250 = vunpack.c.l.b16 %v2710
    %v3251 = vunpack.c.h.b16 %v2710
    %v3252 = vunpack.c.l.b16 %v2711
    %v3253 = vunpack.c.h.b16 %v2711
    %v3254 = vunpack.c.l.b16 %v2712
    %v3255 = vunpack.c.h.b16 %v2712
    %v3256 = vunpack.c.l.b16 %v2713
    %v3257 = vunpack.c.h.b16 %v2713
    %v3258 = vunpack.c.l.b16 %v2714
    %v3259 = vunpack.c.h.b16 %v2714
    %v3260 = vunpack.c.l.b16 %v2715
    %v3261 = vunpack.c.h.b16 %v2715
    %v3262 = vunpack.c.l.b16 %v2716
    %v3263 = vunpack.c.h.b16 %v2716
    %v3264 = vunpack.c.l.b16 %v2717
    %v3265 = vunpack.c.h.b16 %v2717
    %v3266 = vunpack.c.l.b16 %v2718
    %v3267 = vunpack.c.h.b16 %v2718
    %v3268 = vunpack.c.l.b16 %v2719
    %v3269 = vunpack.c.h.b16 %v2719
    %v3270 = vunpack.c.l.b16 %v2720
    %v3271 = vunpack.c.h.b16 %v2720
    %v3272 = vunpack.c.l.b16 %v2721
    %v3273 = vunpack.c.h.b16 %v2721
    %v3274 = vunpack.c.l.b16 %v2722
    %v3275 = vunpack.c.h.b16 %v2722
    %v3276 = vunpack.c.l.b16 %v2723
    %v3277 = vunpack.c.h.b16 %v2723
    %v3278 = vunpack.c.l.b16 %v2724
    %v3279 = vunpack.c.h.b16 %v2724
    %v3280 = vunpack.c.l.b16 %v2725
    %v3281 = vunpack.c.h.b16 %v2725
    %v3282 = vunpack.c.l.b16 %v2726
    %v3283 = vunpack.c.h.b16 %v2726
    %v3284 = vunpack.c.l.b16 %v2727
    %v3285 = vunpack.c.h.b16 %v2727
    %v3286 = vunpack.c.l.b16 %v2728
    %v3287 = vunpack.c.h.b16 %v2728
    %v3288 = vunpack.c.l.b16 %v2729
    %v3289 = vunpack.c.h.b16 %v2729
    %v3290 = vunpack.c.l.b16 %v2730
    %v3291 = vunpack.c.h.b16 %v2730
    %v3292 = vunpack.c.l.b16 %v2731
    %v3293 = vunpack.c.h.b16 %v2731
    %v3294 = vunpack.c.l.b16 %v2732
    %v3295 = vunpack.c.h.b16 %v2732
    %v3296 = vunpack.c.l.b16 %v2733
    %v3297 = vunpack.c.h.b16 %v2733
    %v3298 = vunpack.c.l.b16 %v2734
    %v3299 = vunpack.c.h.b16 %v2734
    %v3300 = vunpack.c.l.b16 %v2735
    %v3301 = vunpack.c.h.b16 %v2735
    %v3302 = vunpack.c.l.b16 %v2736
    %v3303 = vunpack.c.h.b16 %v2736
    %v3304 = vunpack.c.l.b16 %v2737
    %v3305 = vunpack.c.h.b16 %v2737
    %v3306 = vunpack.c.l.b16 %v2738
    %v3307 = vunpack.c.h.b16 %v2738
    %v3308 = vunpack.c.l.b16 %v2739
    %v3309 = vunpack.c.h.b16 %v2739
    %v3310 = vunpack.c.l.b16 %v2740
    %v3311 = vunpack.c.h.b16 %v2740
    %v3312 = vunpack.c.l.b16 %v2741
    %v3313 = vunpack.c.h.b16 %v2741
    %v3314 = vunpack.c.l.b16 %v2742
    %v3315 = vunpack.c.h.b16 %v2742
    %v3316 = vunpack.c.l.b16 %v2743
    %v3317 = vunpack.c.h.b16 %v2743
    %v3318 = vunpack.c.l.b16 %v2744
    %v3319 = vunpack.c.h.b16 %v2744
    %v3320 = vunpack.c.l.b16 %v2745
    %v3321 = vunpack.c.h.b16 %v2745
    %v3322 = vunpack.c.l.b16 %v2746
    %v3323 = vunpack.c.h.b16 %v2746
    %v3324 = vunpack.c.l.b16 %v2747
    %v3325 = vunpack.c.h.b16 %v2747
    %v3326 = vunpack.c.l.b16 %v2748
    %v3327 = vunpack.c.h.b16 %v2748
    %v3328 = vunpack.c.l.b16 %v2749
    %v3329 = vunpack.c.h.b16 %v2749
    %v3330 = vunpack.c.l.b16 %v2750
    %v3331 = vunpack.c.h.b16 %v2750
    %v3332 = vunpack.c.l.b16 %v2751
    %v3333 = vunpack.c.h.b16 %v2751
    %v3334 = vunpack.c.l.b16 %v2752
    %v3335 = vunpack.c.h.b16 %v2752
    %v3336 = vunpack.c.l.b16 %v2753
    %v3337 = vunpack.c.h.b16 %v2753
    %v3338 = vunpack.c.l.b16 %v2754
    %v3339 = vunpack.c.h.b16 %v2754
    %v3340 = vunpack.c.l.b16 %v2755
    %v3341 = vunpack.c.h.b16 %v2755
    %v3342 = vunpack.c.l.b16 %v2756
    %v3343 = vunpack.c.h.b16 %v2756
    %v3344 = vunpack.c.l.b16 %v2757
    %v3345 = vunpack.c.h.b16 %v2757
    %v3346 = vunpack.c.l.b16 %v2758
    %v3347 = vunpack.c.h.b16 %v2758
    %v3348 = vunpack.c.l.b16 %v2759
    %v3349 = vunpack.c.h.b16 %v2759
    %v3350 = vunpack.c.l.b16 %v2760
    %v3351 = vunpack.c.h.b16 %v2760
    %v3352 = vunpack.c.l.b16 %v2761
    %v3353 = vunpack.c.h.b16 %v2761
    %v3354 = vunpack.c.l.b16 %v2762
    %v3355 = vunpack.c.h.b16 %v2762
    %v3356 = vunpack.c.l.b16 %v2763
    %v3357 = vunpack.c.h.b16 %v2763
    %v3358 = vunpack.c.l.b16 %v2764
    %v3359 = vunpack.c.h.b16 %v2764
    %v3360 = vunpack.c.l.b16 %v2765
    %v3361 = vunpack.c.h.b16 %v2765
    %v3362 = vunpack.c.l.b16 %v2766
    %v3363 = vunpack.c.h.b16 %v2766
    %v3364 = vunpack.c.l.b16 %v2767
    %v3365 = vunpack.c.h.b16 %v2767
    %v3366 = vunpack.c.l.b16 %v2768
    %v3367 = vunpack.c.h.b16 %v2768
    %v3368 = vunpack.c.l.b16 %v2769
    %v3369 = vunpack.c.h.b16 %v2769
    %v3370 = vunpack.c.l.b16 %v2770
    %v3371 = vunpack.c.h.b16 %v2770
    %v3372 = vunpack.c.l.b16 %v2771
    %v3373 = vunpack.c.h.b16 %v2771
    %v3374 = vunpack.c.l.b16 %v2772
    %v3375 = vunpack.c.h.b16 %v2772
    %v3376 = vunpack.c.l.b16 %v2773
    %v3377 = vunpack.c.h.b16 %v2773
    %v3378 = vunpack.c.l.b16 %v2774
    %v3379 = vunpack.c.h.b16 %v2774
    %v3380 = vunpack.c.l.b16 %v2775
    %v3381 = vunpack.c.h.b16 %v2775
    %v3382 = vunpack.c.l.b16 %v2776
    %v3383 = vunpack.c.h.b16 %v2776
    %v3384 = vunpack.c.l.b16 %v2777
    %v3385 = vunpack.c.h.b16 %v2777
    %v3386 = vunpack.c.l.b16 %v2778
    %v3387 = vunpack.c.h.b16 %v2778
    %v3388 = vunpack.c.l.b16 %v2779
    %v3389 = vunpack.c.h.b16 %v2779
    %v3390 = vunpack.c.l.b16 %v2780
    %v3391 = vunpack.c.h.b16 %v2780
    %v3392 = vunpack.c.l.b16 %v2781
    %v3393 = vunpack.c.h.b16 %v2781
    %v3394 = vunpack.c.l.b16 %v2782
    %v3395 = vunpack.c.h.b16 %v2782
    %v3396 = vunpack.c.l.b16 %v2783
    %v3397 = vunpack.c.h.b16 %v2783
    %v3398 = vunpack.c.l.b16 %v2784
    %v3399 = vunpack.c.h.b16 %v2784
    %v3400 = vunpack.c.l.b16 %v2785
    %v3401 = vunpack.c.h.b16 %v2785
    %v3402 = vunpack.c.l.b16 %v2786
    %v3403 = vunpack.c.h.b16 %v2786
    %v3404 = vunpack.c.l.b16 %v2787
    %v3405 = vunpack.c.h.b16 %v2787
    %v3406 = vunpack.c.l.b16 %v2788
    %v3407 = vunpack.c.h.b16 %v2788
    %v3408 = vunpack.c.l.b16 %v2789
    %v3409 = vunpack.c.h.b16 %v2789
    %v3410 = vunpack.c.l.b16 %v2790
    %v3411 = vunpack.c.h.b16 %v2790
    %v3412 = vunpack.c.l.b16 %v2791
    %v3413 = vunpack.c.h.b16 %v2791
    %v3414 = vunpack.c.l.b16 %v2792
    %v3415 = vunpack.c.h.b16 %v2792
    %v3416 = vunpack.c.l.b16 %v2793
    %v3417 = vunpack.c.h.b16 %v2793
    %v3418 = vunpack.c.l.b16 %v2794
    %v3419 = vunpack.c.h.b16 %v2794
    %v3420 = vunpack.c.l.b16 %v2795
    %v3421 = vunpack.c.h.b16 %v2795
    %v3422 = vunpack.c.l.b16 %v2796
    %v3423 = vunpack.c.h.b16 %v2796
    %v3424 = vunpack.c.l.b16 %v2797
    %v3425 = vunpack.c.h.b16 %v2797
    %v3426 = vunpack.c.l.b16 %v2798
    %v3427 = vunpack.c.h.b16 %v2798
    %v3428 = vunpack.c.l.b16 %v2799
    %v3429 = vunpack.c.h.b16 %v2799
    %v3430 = vunpack.c.l.b16 %v2800
    %v3431 = vunpack.c.h.b16 %v2800
    %v3432 = vunpack.c.l.b16 %v2801
    %v3433 = vunpack.c.h.b16 %v2801
    %v3434 = vunpack.c.l.b16 %v2802
    %v3435 = vunpack.c.h.b16 %v2802
    %v3436 = vunpack.c.l.b16 %v2803
    %v3437 = vunpack.c.h.b16 %v2803
    %v3438 = vunpack.c.l.b16 %v2804
    %v3439 = vunpack.c.h.b16 %v2804
    %v3440 = vunpack.c.l.b16 %v2805
    %v3441 = vunpack.c.h.b16 %v2805
    %v3442 = vunpack.c.l.b16 %v2806
    %v3443 = vunpack.c.h.b16 %v2806
    %v3444 = vunpack.c.l.b16 %v2807
    %v3445 = vunpack.c.h.b16 %v2807
    %v3446 = vunpack.c.l.b16 %v2808
    %v3447 = vunpack.c.h.b16 %v2808
    %v3448 = vunpack.c.l.b16 %v2809
    %v3449 = vunpack.c.h.b16 %v2809
    %v3450 = vunpack.c.l.b16 %v2810
    %v3451 = vunpack.c.h.b16 %v2810
    %v3452 = vunpack.c.l.b16 %v2811
    %v3453 = vunpack.c.h.b16 %v2811
    %v3454 = vunpack.c.l.b16 %v2812
    %v3455 = vunpack.c.h.b16 %v2812
    %v3456 = vunpack.c.l.b16 %v2813
    %v3457 = vunpack.c.h.b16 %v2813
    %v3458 = vunpack.c.l.b16 %v2814
    %v3459 = vunpack.c.h.b16 %v2814
    %v3460 = vunpack.c.l.b16 %v2815
    %v3461 = vunpack.c.h.b16 %v2815
    %v3462 = vunpack.c.l.b16 %v2816
    %v3463 = vunpack.c.h.b16 %v2816
    %v3464 = vunpack.c.l.b16 %v2817
    %v3465 = vunpack.c.h.b16 %v2817
    %v3466 = vunpack.c.l.b16 %v2818
    %v3467 = vunpack.c.h.b16 %v2818
    %v3468 = vunpack.c.l.b16 %v2819
    %v3469 = vunpack.c.h.b16 %v2819
    %v3470 = vunpack.c.l.b16 %v2820
    %v3471 = vunpack.c.h.b16 %v2820
    %v3472 = vunpack.c.l.b16 %v2821
    %v3473 = vunpack.c.h.b16 %v2821
    %v3474 = vunpack.c.l.b16 %v2822
    %v3475 = vunpack.c.h.b16 %v2822
    %v3476 = vunpack.c.l.b16 %v2823
    %v3477 = vunpack.c.h.b16 %v2823
    %v3478 = vunpack.c.l.b16 %v2824
    %v3479 = vunpack.c.h.b16 %v2824
    %v3480 = vunpack.c.l.b16 %v2825
    %v3481 = vunpack.c.h.b16 %v2825
    %v3482 = vunpack.c.l.b16 %v2826
    %v3483 = vunpack.c.h.b16 %v2826
    %v3484 = vunpack.c.l.b16 %v2827
    %v3485 = vunpack.c.h.b16 %v2827
    %v3486 = vunpack.c.l.b16 %v2828
    %v3487 = vunpack.c.h.b16 %v2828
    %v3488 = vunpack.c.l.b16 %v2829
    %v3489 = vunpack.c.h.b16 %v2829
    %v3490 = vunpack.c.l.b16 %v2830
    %v3491 = vunpack.c.h.b16 %v2830
    %v3492 = vunpack.c.l.b16 %v2831
    %v3493 = vunpack.c.h.b16 %v2831
    %v3494 = vunpack.c.l.b16 %v2832
    %v3495 = vunpack.c.h.b16 %v2832
    %v3496 = vunpack.c.l.b16 %v2833
    %v3497 = vunpack.c.h.b16 %v2833
    %v3498 = vunpack.c.l.b16 %v2834
    %v3499 = vunpack.c.h.b16 %v2834
    %v3500 = vunpack.c.l.b16 %v2835
    %v3501 = vunpack.c.h.b16 %v2835
    %v3502 = vunpack.c.l.b16 %v2836
    %v3503 = vunpack.c.h.b16 %v2836
    %v3504 = vunpack.c.l.b16 %v2837
    %v3505 = vunpack.c.h.b16 %v2837
    %v3506 = vunpack.c.l.b16 %v2838
    %v3507 = vunpack.c.h.b16 %v2838
    %v3508 = vunpack.c.l.b16 %v2839
    %v3509 = vunpack.c.h.b16 %v2839
    %v3510 = vunpack.c.l.b16 %v2840
    %v3511 = vunpack.c.h.b16 %v2840
    %v3512 = vunpack.c.l.b16 %v2841
    %v3513 = vunpack.c.h.b16 %v2841
    %v3514 = vunpack.c.l.b16 %v2842
    %v3515 = vunpack.c.h.b16 %v2842
    %v3516 = vunpack.c.l.b16 %v2843
    %v3517 = vunpack.c.h.b16 %v2843
    %v3518 = vunpack.c.l.b16 %v2844
    %v3519 = vunpack.c.h.b16 %v2844
    %v3520 = vunpack.c.l.b16 %v2845
    %v3521 = vunpack.c.h.b16 %v2845
    %v3522 = vunpack.c.l.b16 %v2846
    %v3523 = vunpack.c.h.b16 %v2846
    %v3524 = vunpack.c.l.b16 %v2847
    %v3525 = vunpack.c.h.b16 %v2847
    %v3526 = vunpack.c.l.b16 %v2848
    %v3527 = vunpack.c.h.b16 %v2848
    %v3528 = vunpack.c.l.b16 %v2849
    %v3529 = vunpack.c.h.b16 %v2849
    %v3530 = vunpack.c.l.b16 %v2850
    %v3531 = vunpack.c.h.b16 %v2850
    %v3532 = vunpack.c.l.b16 %v2851
    %v3533 = vunpack.c.h.b16 %v2851
    %v3534 = vunpack.c.l.b16 %v2852
    %v3535 = vunpack.c.h.b16 %v2852
    %v3536 = vunpack.c.l.b16 %v2853
    %v3537 = vunpack.c.h.b16 %v2853
    %v3538 = vunpack.c.l.b16 %v2854
    %v3539 = vunpack.c.h.b16 %v2854
    %v3540 = vunpack.c.l.b16 %v2855
    %v3541 = vunpack.c.h.b16 %v2855
    %v3542 = vunpack.c.l.b16 %v2856
    %v3543 = vunpack.c.h.b16 %v2856
    %v3544 = vunpack.c.l.b16 %v2857
    %v3545 = vunpack.c.h.b16 %v2857
    %v3546 = vunpack.c.l.b16 %v2858
    %v3547 = vunpack.c.h.b16 %v2858
    %v3548 = vunpack.c.l.b16 %v2859
    %v3549 = vunpack.c.h.b16 %v2859
    %v3550 = vunpack.c.l.b16 %v2860
    %v3551 = vunpack.c.h.b16 %v2860
    %v3552 = vunpack.c.l.b16 %v2861
    %v3553 = vunpack.c.h.b16 %v2861
    %v3554 = vunpack.c.l.b16 %v2862
    %v3555 = vunpack.c.h.b16 %v2862
    %v3556 = vunpack.c.l.b16 %v2863
    %v3557 = vunpack.c.h.b16 %v2863
    %v3558 = vunpack.c.l.b16 %v2864
    %v3559 = vunpack.c.h.b16 %v2864
    %v3560 = vunpack.c.l.b16 %v2865
    %v3561 = vunpack.c.h.b16 %v2865
    %v3562 = vunpack.c.l.b16 %v2866
    %v3563 = vunpack.c.h.b16 %v2866
    %v3564 = vunpack.c.l.b16 %v2867
    %v3565 = vunpack.c.h.b16 %v2867
    %v3566 = vunpack.c.l.b16 %v2868
    %v3567 = vunpack.c.h.b16 %v2868
    %v3568 = vunpack.c.l.b16 %v2869
    %v3569 = vunpack.c.h.b16 %v2869
    %v3570 = vunpack.c.l.b16 %v2870
    %v3571 = vunpack.c.h.b16 %v2870
    %v3572 = vunpack.c.l.b16 %v2871
    %v3573 = vunpack.c.h.b16 %v2871
    %v3574 = vunpack.c.l.b16 %v2872
    %v3575 = vunpack.c.h.b16 %v2872
    %v3576 = vunpack.c.l.b16 %v2873
    %v3577 = vunpack.c.h.b16 %v2873
    %v3578 = vunpack.c.l.b16 %v2874
    %v3579 = vunpack.c.h.b16 %v2874
    %v3580 = vunpack.c.l.b16 %v2875
    %v3581 = vunpack.c.h.b16 %v2875
    %v3582 = vunpack.c.l.b16 %v2876
    %v3583 = vunpack.c.h.b16 %v2876
    %v3584 = vunpack.c.l.b16 %v2877
    %v3585 = vunpack.c.h.b16 %v2877
    %v3586 = vunpack.c.l.b16 %v2878
    %v3587 = vunpack.c.h.b16 %v2878
    %v3588 = vunpack.c.l.b16 %v2879
    %v3589 = vunpack.c.h.b16 %v2879
    %v3590 = vunpack.c.l.b16 %v2880
    %v3591 = vunpack.c.h.b16 %v2880
    %v3592 = vunpack.c.l.b16 %v2881
    %v3593 = vunpack.c.h.b16 %v2881
    %v3594 = vunpack.c.l.b16 %v2882
    %v3595 = vunpack.c.h.b16 %v2882
    %v3596 = vunpack.c.l.b16 %v2883
    %v3597 = vunpack.c.h.b16 %v2883
    %v3598 = vunpack.c.l.b16 %v2884
    %v3599 = vunpack.c.h.b16 %v2884
    %v3600 = vunpack.c.l.b16 %v2885
    %v3601 = vunpack.c.h.b16 %v2885
    %v3602 = vunpack.c.l.b16 %v2886
    %v3603 = vunpack.c.h.b16 %v2886
    %v3604 = vunpack.c.l.b16 %v2887
    %v3605 = vunpack.c.h.b16 %v2887
    %v3606 = vunpack.c.l.b16 %v2888
    %v3607 = vunpack.c.h.b16 %v2888
    %v3608 = vunpack.c.l.b16 %v2889
    %v3609 = vunpack.c.h.b16 %v2889
    %v3610 = vunpack.c.l.b16 %v2890
    %v3611 = vunpack.c.h.b16 %v2890
    %v3612 = vunpack.c.l.b16 %v2891
    %v3613 = vunpack.c.h.b16 %v2891
    %v3614 = vunpack.c.l.b16 %v2892
    %v3615 = vunpack.c.h.b16 %v2892
    %v3616 = vunpack.c.l.b16 %v2893
    %v3617 = vunpack.c.h.b16 %v2893
    %v3618 = vunpack.c.l.b16 %v2894
    %v3619 = vunpack.c.h.b16 %v2894
    %v3620 = vunpack.c.l.b16 %v2895
    %v3621 = vunpack.c.h.b16 %v2895
    %v3622 = vunpack.c.l.b16 %v2896
    %v3623 = vunpack.c.h.b16 %v2896
    %v3624 = vunpack.c.l.b16 %v2897
    %v3625 = vunpack.c.h.b16 %v2897
    %v3626 = vunpack.c.l.b16 %v2898
    %v3627 = vunpack.c.h.b16 %v2898
    %v3628 = vunpack.c.l.b16 %v2899
    %v3629 = vunpack.c.h.b16 %v2899
    %v3630 = vunpack.c.l.b16 %v2900
    %v3631 = vunpack.c.h.b16 %v2900
    %v3632 = vunpack.c.l.b16 %v2901
    %v3633 = vunpack.c.h.b16 %v2901
    %v3634 = vunpack.c.l.b16 %v2902
    %v3635 = vunpack.c.h.b16 %v2902
    %v3636 = vunpack.c.l.b16 %v2903
    %v3637 = vunpack.c.h.b16 %v2903
    %v3638 = vunpack.c.l.b16 %v2904
    %v3639 = vunpack.c.h.b16 %v2904
    %v3640 = vunpack.c.l.b16 %v2905
    %v3641 = vunpack.c.h.b16 %v2905
    %v3642 = vunpack.c.l.b16 %v2906
    %v3643 = vunpack.c.h.b16 %v2906
    %v3644 = vunpack.c.l.b16 %v2907
    %v3645 = vunpack.c.h.b16 %v2907
    %v3646 = vunpack.c.l.b16 %v2908
    %v3647 = vunpack.c.h.b16 %v2908
    %v3648 = vunpack.c.l.b16 %v2909
    %v3649 = vunpack.c.h.b16 %v2909
    %v3650 = vunpack.c.l.b16 %v2910
    %v3651 = vunpack.c.h.b16 %v2910
    %v3652 = vunpack.c.l.b16 %v2911
    %v3653 = vunpack.c.h.b16 %v2911
    %v3654 = vunpack.c.l.b16 %v2912
    %v3655 = vunpack.c.h.b16 %v2912
    %v3656 = vunpack.c.l.b16 %v2913
    %v3657 = vunpack.c.h.b16 %v2913
    %v3658 = vunpack.c.l.b16 %v2914
    %v3659 = vunpack.c.h.b16 %v2914
    %v3660 = vunpack.c.l.b16 %v2915
    %v3661 = vunpack.c.h.b16 %v2915
    %v3662 = vunpack.c.l.b16 %v2916
    %v3663 = vunpack.c.h.b16 %v2916
    %v3664 = vunpack.c.l.b16 %v2917
    %v3665 = vunpack.c.h.b16 %v2917
    %v3666 = vunpack.c.l.b16 %v2918
    %v3667 = vunpack.c.h.b16 %v2918
    %v3668 = vunpack.c.l.b16 %v2919
    %v3669 = vunpack.c.h.b16 %v2919
    %v3670 = vunpack.c.l.b16 %v2920
    %v3671 = vunpack.c.h.b16 %v2920
    %v3672 = vunpack.c.l.b16 %v2921
    %v3673 = vunpack.c.h.b16 %v2921
    %v3674 = vunpack.c.l.b16 %v2922
    %v3675 = vunpack.c.h.b16 %v2922
    %v3676 = vunpack.c.l.b16 %v2923
    %v3677 = vunpack.c.h.b16 %v2923
    %v3678 = vunpack.c.l.b16 %v2924
    %v3679 = vunpack.c.h.b16 %v2924
    %v3680 = vunpack.c.l.b16 %v2925
    %v3681 = vunpack.c.h.b16 %v2925
    %v3682 = vunpack.c.l.b16 %v2926
    %v3683 = vunpack.c.h.b16 %v2926
    %v3684 = vunpack.c.l.b16 %v2927
    %v3685 = vunpack.c.h.b16 %v2927
    %v3686 = vunpack.c.l.b16 %v2928
    %v3687 = vunpack.c.h.b16 %v2928
    %v3688 = vunpack.c.l.b16 %v2929
    %v3689 = vunpack.c.h.b16 %v2929
    %v3690 = vunpack.c.l.b16 %v2930
    %v3691 = vunpack.c.h.b16 %v2930
    %v3692 = vunpack.c.l.b16 %v2931
    %v3693 = vunpack.c.h.b16 %v2931
    %v3694 = vunpack.c.l.b16 %v2932
    %v3695 = vunpack.c.h.b16 %v2932
    %v3696 = vunpack.c.l.b16 %v2933
    %v3697 = vunpack.c.h.b16 %v2933
    %v3698 = vunpack.c.l.b16 %v2934
    %v3699 = vunpack.c.h.b16 %v2934
    %v3700 = vunpack.c.l.b16 %v2935
    %v3701 = vunpack.c.h.b16 %v2935
    %v3702 = vunpack.c.l.b16 %v2936
    %v3703 = vunpack.c.h.b16 %v2936
    %v3704 = vunpack.c.l.b16 %v2937
    %v3705 = vunpack.c.h.b16 %v2937
    %v3706 = vunpack.c.l.b16 %v2938
    %v3707 = vunpack.c.h.b16 %v2938
    %v3708 = vunpack.c.l.b16 %v2939
    %v3709 = vunpack.c.h.b16 %v2939
    %v3710 = vunpack.c.l.b16 %v2940
    %v3711 = vunpack.c.h.b16 %v2940
    %v3712 = vunpack.c.l.b16 %v2941
    %v3713 = vunpack.c.h.b16 %v2941
    %v3714 = vunpack.c.l.b16 %v2942
    %v3715 = vunpack.c.h.b16 %v2942
    %v3716 = vunpack.c.l.b16 %v2943
    %v3717 = vunpack.c.h.b16 %v2943
    %v3718 = vunpack.c.l.b16 %v2944
    %v3719 = vunpack.c.h.b16 %v2944
    %v3720 = vunpack.c.l.b16 %v2945
    %v3721 = vunpack.c.h.b16 %v2945
    %v3722 = vunpack.c.l.b16 %v2946
    %v3723 = vunpack.c.h.b16 %v2946
    %v3724 = vunpack.c.l.b16 %v2947
    %v3725 = vunpack.c.h.b16 %v2947
    %v3726 = vunpack.c.l.b16 %v2948
    %v3727 = vunpack.c.h.b16 %v2948
    %v3728 = vunpack.c.l.b16 %v2949
    %v3729 = vunpack.c.h.b16 %v2949
    %v3730 = vunpack.c.l.b16 %v2950
    %v3731 = vunpack.c.h.b16 %v2950
    %v3732 = vunpack.c.l.b16 %v2951
    %v3733 = vunpack.c.h.b16 %v2951
    %v3734 = vunpack.c.l.b16 %v2952
    %v3735 = vunpack.c.h.b16 %v2952
    %v3736 = vunpack.c.l.b16 %v2953
    %v3737 = vunpack.c.h.b16 %v2953
    %v3738 = vunpack.c.l.b16 %v2954
    %v3739 = vunpack.c.h.b16 %v2954
    %v3740 = vunpack.c.l.b16 %v2955
    %v3741 = vunpack.c.h.b16 %v2955
    %v3742 = vpack.c.b16 %v3238, %v3230
    %v3743 = vpack.c.b16 %v3239, %v3231
    %v3744 = vpack.c.b16 %v3240, %v3232
    %v3745 = vpack.c.b16 %v3241, %v3233
    %v3746 = vpack.c.b16 %v3242, %v3234
    %v3747 = vpack.c.b16 %v3243, %v3235
    %v3748 = vpack.c.b16 %v3244, %v3236
    %v3749 = vpack.c.b16 %v3245, %v3237
    %v3750 = vpack.c.b16 %v3254, %v3246
    %v3751 = vpack.c.b16 %v3255, %v3247
    %v3752 = vpack.c.b16 %v3256, %v3248
    %v3753 = vpack.c.b16 %v3257, %v3249
    %v3754 = vpack.c.b16 %v3258, %v3250
    %v3755 = vpack.c.b16 %v3259, %v3251
    %v3756 = vpack.c.b16 %v3260, %v3252
    %v3757 = vpack.c.b16 %v3261, %v3253
    %v3758 = vpack.c.b16 %v3270, %v3262
    %v3759 = vpack.c.b16 %v3271, %v3263
    %v3760 = vpack.c.b16 %v3272, %v3264
    %v3761 = vpack.c.b16 %v3273, %v3265
    %v3762 = vpack.c.b16 %v3274, %v3266
    %v3763 = vpack.c.b16 %v3275, %v3267
    %v3764 = vpack.c.b16 %v3276, %v3268
    %v3765 = vpack.c.b16 %v3277, %v3269
    %v3766 = vpack.c.b16 %v3286, %v3278
    %v3767 = vpack.c.b16 %v3287, %v3279
    %v3768 = vpack.c.b16 %v3288, %v3280
    %v3769 = vpack.c.b16 %v3289, %v3281
    %v3770 = vpack.c.b16 %v3290, %v3282
    %v3771 = vpack.c.b16 %v3291, %v3283
    %v3772 = vpack.c.b16 %v3292, %v3284
    %v3773 = vpack.c.b16 %v3293, %v3285
    %v3774 = vpack.c.b16 %v3302, %v3294
    %v3775 = vpack.c.b16 %v3303, %v3295
    %v3776 = vpack.c.b16 %v3304, %v3296
    %v3777 = vpack.c.b16 %v3305, %v3297
    %v3778 = vpack.c.b16 %v3306, %v3298
    %v3779 = vpack.c.b16 %v3307, %v3299
    %v3780 = vpack.c.b16 %v3308, %v3300
    %v3781 = vpack.c.b16 %v3309, %v3301
    %v3782 = vpack.c.b16 %v3318, %v3310
    %v3783 = vpack.c.b16 %v3319, %v3311
    %v3784 = vpack.c.b16 %v3320, %v3312
    %v3785 = vpack.c.b16 %v3321, %v3313
    %v3786 = vpack.c.b16 %v3322, %v3314
    %v3787 = vpack.c.b16 %v3323, %v3315
    %v3788 = vpack.c.b16 %v3324, %v3316
    %v3789 = vpack.c.b16 %v3325, %v3317
    %v3790 = vpack.c.b16 %v3334, %v3326
    %v3791 = vpack.c.b16 %v3335, %v3327
    %v3792 = vpack.c.b16 %v3336, %v3328
    %v3793 = vpack.c.b16 %v3337, %v3329
    %v3794 = vpack.c.b16 %v3338, %v3330
    %v3795 = vpack.c.b16 %v3339, %v3331
    %v3796 = vpack.c.b16 %v3340, %v3332
    %v3797 = vpack.c.b16 %v3341, %v3333
    %v3798 = vpack.c.b16 %v3350, %v3342
    %v3799 = vpack.c.b16 %v3351, %v3343
    %v3800 = vpack.c.b16 %v3352, %v3344
    %v3801 = vpack.c.b16 %v3353, %v3345
    %v3802 = vpack.c.b16 %v3354, %v3346
    %v3803 = vpack.c.b16 %v3355, %v3347
    %v3804 = vpack.c.b16 %v3356, %v3348
    %v3805 = vpack.c.b16 %v3357, %v3349
    %v3806 = vpack.c.b16 %v3366, %v3358
    %v3807 = vpack.c.b16 %v3367, %v3359
    %v3808 = vpack.c.b16 %v3368, %v3360
    %v3809 = vpack.c.b16 %v3369, %v3361
    %v3810 = vpack.c.b16 %v3370, %v3362
    %v3811 = vpack.c.b16 %v3371, %v3363
    %v3812 = vpack.c.b16 %v3372, %v3364
    %v3813 = vpack.c.b16 %v3373, %v3365
    %v3814 = vpack.c.b16 %v3382, %v3374
    %v3815 = vpack.c.b16 %v3383, %v3375
    %v3816 = vpack.c.b16 %v3384, %v3376
    %v3817 = vpack.c.b16 %v3385, %v3377
    %v3818 = vpack.c.b16 %v3386, %v3378
    %v3819 = vpack.c.b16 %v3387, %v3379
    %v3820 = vpack.c.b16 %v3388, %v3380
    %v3821 = vpack.c.b16 %v3389, %v3381
    %v3822 = vpack.c.b16 %v3398, %v3390
    %v3823 = vpack.c.b16 %v3399, %v3391
    %v3824 = vpack.c.b16 %v3400, %v3392
    %v3825 = vpack.c.b16 %v3401, %v3393
    %v3826 = vpack.c.b16 %v3402, %v3394
    %v3827 = vpack.c.b16 %v3403, %v3395
    %v3828 = vpack.c.b16 %v3404, %v3396
    %v3829 = vpack.c.b16 %v3405, %v3397
    %v3830 = vpack.c.b16 %v3414, %v3406
    %v3831 = vpack.c.b16 %v3415, %v3407
    %v3832 = vpack.c.b16 %v3416, %v3408
    %v3833 = vpack.c.b16 %v3417, %v3409
    %v3834 = vpack.c.b16 %v3418, %v3410
    %v3835 = vpack.c.b16 %v3419, %v3411
    %v3836 = vpack.c.b16 %v3420, %v3412
    %v3837 = vpack.c.b16 %v3421, %v3413
    %v3838 = vpack.c.b16 %v3430, %v3422
    %v3839 = vpack.c.b16 %v3431, %v3423
    %v3840 = vpack.c.b16 %v3432, %v3424
    %v3841 = vpack.c.b16 %v3433, %v3425
    %v3842 = vpack.c.b16 %v3434, %v3426
    %v3843 = vpack.c.b16 %v3435, %v3427
    %v3844 = vpack.c.b16 %v3436, %v3428
    %v3845 = vpack.c.b16 %v3437, %v3429
    %v3846 = vpack.c.b16 %v3446, %v3438
    %v3847 = vpack.c.b16 %v3447, %v3439
    %v3848 = vpack.c.b16 %v3448, %v3440
    %v3849 = vpack.c.b16 %v3449, %v3441
    %v3850 = vpack.c.b16 %v3450, %v3442
    %v3851 = vpack.c.b16 %v3451, %v3443
    %v3852 = vpack.c.b16 %v3452, %v3444
    %v3853 = vpack.c.b16 %v3453, %v3445
    %v3854 = vpack.c.b16 %v3462, %v3454
    %v3855 = vpack.c.b16 %v3463, %v3455
    %v3856 = vpack.c.b16 %v3464, %v3456
    %v3857 = vpack.c.b16 %v3465, %v3457
    %v3858 = vpack.c.b16 %v3466, %v3458
    %v3859 = vpack.c.b16 %v3467, %v3459
    %v3860 = vpack.c.b16 %v3468, %v3460
    %v3861 = vpack.c.b16 %v3469, %v3461
    %v3862 = vpack.c.b16 %v3478, %v3470
    %v3863 = vpack.c.b16 %v3479, %v3471
    %v3864 = vpack.c.b16 %v3480, %v3472
    %v3865 = vpack.c.b16 %v3481, %v3473
    %v3866 = vpack.c.b16 %v3482, %v3474
    %v3867 = vpack.c.b16 %v3483, %v3475
    %v3868 = vpack.c.b16 %v3484, %v3476
    %v3869 = vpack.c.b16 %v3485, %v3477
    %v3870 = vpack.c.b16 %v3494, %v3486
    %v3871 = vpack.c.b16 %v3495, %v3487
    %v3872 = vpack.c.b16 %v3496, %v3488
    %v3873 = vpack.c.b16 %v3497, %v3489
    %v3874 = vpack.c.b16 %v3498, %v3490
    %v3875 = vpack.c.b16 %v3499, %v3491
    %v3876 = vpack.c.b16 %v3500, %v3492
    %v3877 = vpack.c.b16 %v3501, %v3493
    %v3878 = vpack.c.b16 %v3510, %v3502
    %v3879 = vpack.c.b16 %v3511, %v3503
    %v3880 = vpack.c.b16 %v3512, %v3504
    %v3881 = vpack.c.b16 %v3513, %v3505
    %v3882 = vpack.c.b16 %v3514, %v3506
    %v3883 = vpack.c.b16 %v3515, %v3507
    %v3884 = vpack.c.b16 %v3516, %v3508
    %v3885 = vpack.c.b16 %v3517, %v3509
    %v3886 = vpack.c.b16 %v3526, %v3518
    %v3887 = vpack.c.b16 %v3527, %v3519
    %v3888 = vpack.c.b16 %v3528, %v3520
    %v3889 = vpack.c.b16 %v3529, %v3521
    %v3890 = vpack.c.b16 %v3530, %v3522
    %v3891 = vpack.c.b16 %v3531, %v3523
    %v3892 = vpack.c.b16 %v3532, %v3524
    %v3893 = vpack.c.b16 %v3533, %v3525
    %v3894 = vpack.c.b16 %v3542, %v3534
    %v3895 = vpack.c.b16 %v3543, %v3535
    %v3896 = vpack.c.b16 %v3544, %v3536
    %v3897 = vpack.c.b16 %v3545, %v3537
    %v3898 = vpack.c.b16 %v3546, %v3538
    %v3899 = vpack.c.b16 %v3547, %v3539
    %v3900 = vpack.c.b16 %v3548, %v3540
    %v3901 = vpack.c.b16 %v3549, %v3541
    %v3902 = vpack.c.b16 %v3558, %v3550
    %v3903 = vpack.c.b16 %v3559, %v3551
    %v3904 = vpack.c.b16 %v3560, %v3552
    %v3905 = vpack.c.b16 %v3561, %v3553
    %v3906 = vpack.c.b16 %v3562, %v3554
    %v3907 = vpack.c.b16 %v3563, %v3555
    %v3908 = vpack.c.b16 %v3564, %v3556
    %v3909 = vpack.c.b16 %v3565, %v3557
    %v3910 = vpack.c.b16 %v3574, %v3566
    %v3911 = vpack.c.b16 %v3575, %v3567
    %v3912 = vpack.c.b16 %v3576, %v3568
    %v3913 = vpack.c.b16 %v3577, %v3569
    %v3914 = vpack.c.b16 %v3578, %v3570
    %v3915 = vpack.c.b16 %v3579, %v3571
    %v3916 = vpack.c.b16 %v3580, %v3572
    %v3917 = vpack.c.b16 %v3581, %v3573
    %v3918 = vpack.c.b16 %v3590, %v3582
    %v3919 = vpack.c.b16 %v3591, %v3583
    %v3920 = vpack.c.b16 %v3592, %v3584
    %v3921 = vpack.c.b16 %v3593, %v3585
    %v3922 = vpack.c.b16 %v3594, %v3586
    %v3923 = vpack.c.b16 %v3595, %v3587
    %v3924 = vpack.c.b16 %v3596, %v3588
    %v3925 = vpack.c.b16 %v3597, %v3589
    %v3926 = vpack.c.b16 %v3606, %v3598
    %v3927 = vpack.c.b16 %v3607, %v3599
    %v3928 = vpack.c.b16 %v3608, %v3600
    %v3929 = vpack.c.b16 %v3609, %v3601
    %v3930 = vpack.c.b16 %v3610, %v3602
    %v3931 = vpack.c.b16 %v3611, %v3603
    %v3932 = vpack.c.b16 %v3612, %v3604
    %v3933 = vpack.c.b16 %v3613, %v3605
    %v3934 = vpack.c.b16 %v3622, %v3614
    %v3935 = vpack.c.b16 %v3623, %v3615
    %v3936 = vpack.c.b16 %v3624, %v3616
    %v3937 = vpack.c.b16 %v3625, %v3617
    %v3938 = vpack.c.b16 %v3626, %v3618
    %v3939 = vpack.c.b16 %v3627, %v3619
    %v3940 = vpack.c.b16 %v3628, %v3620
    %v3941 = vpack.c.b16 %v3629, %v3621
    %v3942 = vpack.c.b16 %v3638, %v3630
    %v3943 = vpack.c.b16 %v3639, %v3631
    %v3944 = vpack.c.b16 %v3640, %v3632
    %v3945 = vpack.c.b16 %v3641, %v3633
    %v3946 = vpack.c.b16 %v3642, %v3634
    %v3947 = vpack.c.b16 %v3643, %v3635
    %v3948 = vpack.c.b16 %v3644, %v3636
    %v3949 = vpack.c.b16 %v3645, %v3637
    %v3950 = vpack.c.b16 %v3654, %v3646
    %v3951 = vpack.c.b16 %v3655, %v3647
    %v3952 = vpack.c.b16 %v3656, %v3648
    %v3953 = vpack.c.b16 %v3657, %v3649
    %v3954 = vpack.c.b16 %v3658, %v3650
    %v3955 = vpack.c.b16 %v3659, %v3651
    %v3956 = vpack.c.b16 %v3660, %v3652
    %v3957 = vpack.c.b16 %v3661, %v3653
    %v3958 = vpack.c.b16 %v3670, %v3662
    %v3959 = vpack.c.b16 %v3671, %v3663
    %v3960 = vpack.c.b16 %v3672, %v3664
    %v3961 = vpack.c.b16 %v3673, %v3665
    %v3962 = vpack.c.b16 %v3674, %v3666
    %v3963 = vpack.c.b16 %v3675, %v3667
    %v3964 = vpack.c.b16 %v3676, %v3668
    %v3965 = vpack.c.b16 %v3677, %v3669
    %v3966 = vpack.c.b16 %v3686, %v3678
    %v3967 = vpack.c.b16 %v3687, %v3679
    %v3968 = vpack.c.b16 %v3688, %v3680
    %v3969 = vpack.c.b16 %v3689, %v3681
    %v3970 = vpack.c.b16 %v3690, %v3682
    %v3971 = vpack.c.b16 %v3691, %v3683
    %v3972 = vpack.c.b16 %v3692, %v3684
    %v3973 = vpack.c.b16 %v3693, %v3685
    %v3974 = vpack.c.b16 %v3702, %v3694
    %v3975 = vpack.c.b16 %v3703, %v3695
    %v3976 = vpack.c.b16 %v3704, %v3696
    %v3977 = vpack.c.b16 %v3705, %v3697
    %v3978 = vpack.c.b16 %v3706, %v3698
    %v3979 = vpack.c.b16 %v3707, %v3699
    %v3980 = vpack.c.b16 %v3708, %v3700
    %v3981 = vpack.c.b16 %v3709, %v3701
    %v3982 = vpack.c.b16 %v3718, %v3710
    %v3983 = vpack.c.b16 %v3719, %v3711
    %v3984 = vpack.c.b16 %v3720, %v3712
    %v3985 = vpack.c.b16 %v3721, %v3713
    %v3986 = vpack.c.b16 %v3722, %v3714
    %v3987 = vpack.c.b16 %v3723, %v3715
    %v3988 = vpack.c.b16 %v3724, %v3716
    %v3989 = vpack.c.b16 %v3725, %v3717
    %v3990 = vpack.c.b16 %v3734, %v3726
    %v3991 = vpack.c.b16 %v3735, %v3727
    %v3992 = vpack.c.b16 %v3736, %v3728
    %v3993 = vpack.c.b16 %v3737, %v3729
    %v3994 = vpack.c.b16 %v3738, %v3730
    %v3995 = vpack.c.b16 %v3739, %v3731
    %v3996 = vpack.c.b16 %v3740, %v3732
    %v3997 = vpack.c.b16 %v3741, %v3733
    %4254 = vmatpush.bf16.msra.mxu0 %v3798
    %4255 = vmatpush.bf16.msra.mxu0 %v3790
    %4256 = vmatpush.bf16.msra.mxu0 %v3782
    %4257 = vmatpush.bf16.msra.mxu0 %v3774
    %4258 = vmatpush.bf16.msra.mxu0 %v3766
    %4259 = vmatpush.bf16.msra.mxu0 %v3758
    %4260 = vmatpush.bf16.msra.mxu0 %v3750
    %4261 = vmatpush.bf16.msra.mxu0 %v3742
    %4262 = vmatmul.bf16.gmra.mxu0 %v2696
    %v4263 = vpop.f32.mrf.mxu0
    %v4264 = vadd.f32 %v2958, %v4263
    %v4265 = vpop.f32.mrf.mxu0
    %v4266 = vadd.f32 %v2958, %v4265
    %4267 = vdwg.mxu0
    %4268 = vmatpush.bf16.msra.mxu0 %v3862
    %4269 = vmatpush.bf16.msra.mxu0 %v3854
    %4270 = vmatpush.bf16.msra.mxu0 %v3846
    %4271 = vmatpush.bf16.msra.mxu0 %v3838
    %4272 = vmatpush.bf16.msra.mxu0 %v3830
    %4273 = vmatpush.bf16.msra.mxu0 %v3822
    %4274 = vmatpush.bf16.msra.mxu0 %v3814
    %4275 = vmatpush.bf16.msra.mxu0 %v3806
    %4276 = vmatmul.bf16.gmra.mxu0 %v2697
    %v4277 = vpop.f32.mrf.mxu0
    %v4278 = vadd.f32 %v4264, %v4277
    %v4279 = vpop.f32.mrf.mxu0
    %v4280 = vadd.f32 %v4266, %v4279
    %4281 = vdwg.mxu0
    %4282 = vmatpush.bf16.msra.mxu0 %v3926
    %4283 = vmatpush.bf16.msra.mxu0 %v3918
    %4284 = vmatpush.bf16.msra.mxu0 %v3910
    %4285 = vmatpush.bf16.msra.mxu0 %v3902
    %4286 = vmatpush.bf16.msra.mxu0 %v3894
    %4287 = vmatpush.bf16.msra.mxu0 %v3886
    %4288 = vmatpush.bf16.msra.mxu0 %v3878
    %4289 = vmatpush.bf16.msra.mxu0 %v3870
    %4290 = vmatmul.bf16.gmra.mxu0 %v2698
    %v4291 = vpop.f32.mrf.mxu0
    %v4292 = vadd.f32 %v4278, %v4291
    %v4293 = vpop.f32.mrf.mxu0
    %v4294 = vadd.f32 %v4280, %v4293
    %4295 = vdwg.mxu0
    %4296 = vmatpush.bf16.msra.mxu0 %v3990
    %4297 = vmatpush.bf16.msra.mxu0 %v3982
    %4298 = vmatpush.bf16.msra.mxu0 %v3974
    %4299 = vmatpush.bf16.msra.mxu0 %v3966
    %4300 = vmatpush.bf16.msra.mxu0 %v3958
    %4301 = vmatpush.bf16.msra.mxu0 %v3950
    %4302 = vmatpush.bf16.msra.mxu0 %v3942
    %4303 = vmatpush.bf16.msra.mxu0 %v3934
    %4304 = vmatmul.bf16.gmra.mxu0 %v2699
    %v4305 = vpop.f32.mrf.mxu0
    %v4306 = vadd.f32 %v4292, %v4305
    %v4307 = vpop.f32.mrf.mxu0
    %v4308 = vadd.f32 %v4294, %v4307
    %4309 = vdwg.mxu0
    %4310 = vmatpush.bf16.msra.mxu0 %v3799
    %4311 = vmatpush.bf16.msra.mxu0 %v3791
    %4312 = vmatpush.bf16.msra.mxu0 %v3783
    %4313 = vmatpush.bf16.msra.mxu0 %v3775
    %4314 = vmatpush.bf16.msra.mxu0 %v3767
    %4315 = vmatpush.bf16.msra.mxu0 %v3759
    %4316 = vmatpush.bf16.msra.mxu0 %v3751
    %4317 = vmatpush.bf16.msra.mxu0 %v3743
    %4318 = vmatmul.bf16.gmra.mxu0 %v2696
    %v4319 = vpop.f32.mrf.mxu0
    %v4320 = vadd.f32 %v2959, %v4319
    %v4321 = vpop.f32.mrf.mxu0
    %v4322 = vadd.f32 %v2959, %v4321
    %4323 = vdwg.mxu0
    %4324 = vmatpush.bf16.msra.mxu0 %v3863
    %4325 = vmatpush.bf16.msra.mxu0 %v3855
    %4326 = vmatpush.bf16.msra.mxu0 %v3847
    %4327 = vmatpush.bf16.msra.mxu0 %v3839
    %4328 = vmatpush.bf16.msra.mxu0 %v3831
    %4329 = vmatpush.bf16.msra.mxu0 %v3823
    %4330 = vmatpush.bf16.msra.mxu0 %v3815
    %4331 = vmatpush.bf16.msra.mxu0 %v3807
    %4332 = vmatmul.bf16.gmra.mxu0 %v2697
    %v4333 = vpop.f32.mrf.mxu0
    %v4334 = vadd.f32 %v4320, %v4333
    %v4335 = vpop.f32.mrf.mxu0
    %v4336 = vadd.f32 %v4322, %v4335
    %4337 = vdwg.mxu0
    %4338 = vmatpush.bf16.msra.mxu0 %v3927
    %4339 = vmatpush.bf16.msra.mxu0 %v3919
    %4340 = vmatpush.bf16.msra.mxu0 %v3911
    %4341 = vmatpush.bf16.msra.mxu0 %v3903
    %4342 = vmatpush.bf16.msra.mxu0 %v3895
    %4343 = vmatpush.bf16.msra.mxu0 %v3887
    %4344 = vmatpush.bf16.msra.mxu0 %v3879
    %4345 = vmatpush.bf16.msra.mxu0 %v3871
    %4346 = vmatmul.bf16.gmra.mxu0 %v2698
    %v4347 = vpop.f32.mrf.mxu0
    %v4348 = vadd.f32 %v4334, %v4347
    %v4349 = vpop.f32.mrf.mxu0
    %v4350 = vadd.f32 %v4336, %v4349
    %4351 = vdwg.mxu0
    %4352 = vmatpush.bf16.msra.mxu0 %v3991
    %4353 = vmatpush.bf16.msra.mxu0 %v3983
    %4354 = vmatpush.bf16.msra.mxu0 %v3975
    %4355 = vmatpush.bf16.msra.mxu0 %v3967
    %4356 = vmatpush.bf16.msra.mxu0 %v3959
    %4357 = vmatpush.bf16.msra.mxu0 %v3951
    %4358 = vmatpush.bf16.msra.mxu0 %v3943
    %4359 = vmatpush.bf16.msra.mxu0 %v3935
    %4360 = vmatmul.bf16.gmra.mxu0 %v2699
    %v4361 = vpop.f32.mrf.mxu0
    %v4362 = vadd.f32 %v4348, %v4361
    %v4363 = vpop.f32.mrf.mxu0
    %v4364 = vadd.f32 %v4350, %v4363
    %4365 = vdwg.mxu0
    %4366 = vmatpush.bf16.msra.mxu0 %v3800
    %4367 = vmatpush.bf16.msra.mxu0 %v3792
    %4368 = vmatpush.bf16.msra.mxu0 %v3784
    %4369 = vmatpush.bf16.msra.mxu0 %v3776
    %4370 = vmatpush.bf16.msra.mxu0 %v3768
    %4371 = vmatpush.bf16.msra.mxu0 %v3760
    %4372 = vmatpush.bf16.msra.mxu0 %v3752
    %4373 = vmatpush.bf16.msra.mxu0 %v3744
    %4374 = vmatmul.bf16.gmra.mxu0 %v2696
    %v4375 = vpop.f32.mrf.mxu0
    %v4376 = vadd.f32 %v2960, %v4375
    %v4377 = vpop.f32.mrf.mxu0
    %v4378 = vadd.f32 %v2960, %v4377
    %4379 = vdwg.mxu0
    %4380 = vmatpush.bf16.msra.mxu0 %v3864
    %4381 = vmatpush.bf16.msra.mxu0 %v3856
    %4382 = vmatpush.bf16.msra.mxu0 %v3848
    %4383 = vmatpush.bf16.msra.mxu0 %v3840
    %4384 = vmatpush.bf16.msra.mxu0 %v3832
    %4385 = vmatpush.bf16.msra.mxu0 %v3824
    %4386 = vmatpush.bf16.msra.mxu0 %v3816
    %4387 = vmatpush.bf16.msra.mxu0 %v3808
    %4388 = vmatmul.bf16.gmra.mxu0 %v2697
    %v4389 = vpop.f32.mrf.mxu0
    %v4390 = vadd.f32 %v4376, %v4389
    %v4391 = vpop.f32.mrf.mxu0
    %v4392 = vadd.f32 %v4378, %v4391
    %4393 = vdwg.mxu0
    %4394 = vmatpush.bf16.msra.mxu0 %v3928
    %4395 = vmatpush.bf16.msra.mxu0 %v3920
    %4396 = vmatpush.bf16.msra.mxu0 %v3912
    %4397 = vmatpush.bf16.msra.mxu0 %v3904
    %4398 = vmatpush.bf16.msra.mxu0 %v3896
    %4399 = vmatpush.bf16.msra.mxu0 %v3888
    %4400 = vmatpush.bf16.msra.mxu0 %v3880
    %4401 = vmatpush.bf16.msra.mxu0 %v3872
    %4402 = vmatmul.bf16.gmra.mxu0 %v2698
    %v4403 = vpop.f32.mrf.mxu0
    %v4404 = vadd.f32 %v4390, %v4403
    %v4405 = vpop.f32.mrf.mxu0
    %v4406 = vadd.f32 %v4392, %v4405
    %4407 = vdwg.mxu0
    %4408 = vmatpush.bf16.msra.mxu0 %v3992
    %4409 = vmatpush.bf16.msra.mxu0 %v3984
    %4410 = vmatpush.bf16.msra.mxu0 %v3976
    %4411 = vmatpush.bf16.msra.mxu0 %v3968
    %4412 = vmatpush.bf16.msra.mxu0 %v3960
    %4413 = vmatpush.bf16.msra.mxu0 %v3952
    %4414 = vmatpush.bf16.msra.mxu0 %v3944
    %4415 = vmatpush.bf16.msra.mxu0 %v3936
    %4416 = vmatmul.bf16.gmra.mxu0 %v2699
    %v4417 = vpop.f32.mrf.mxu0
    %v4418 = vadd.f32 %v4404, %v4417
    %v4419 = vpop.f32.mrf.mxu0
    %v4420 = vadd.f32 %v4406, %v4419
    %4421 = vdwg.mxu0
    %4422 = vmatpush.bf16.msra.mxu0 %v3801
    %4423 = vmatpush.bf16.msra.mxu0 %v3793
    %4424 = vmatpush.bf16.msra.mxu0 %v3785
    %4425 = vmatpush.bf16.msra.mxu0 %v3777
    %4426 = vmatpush.bf16.msra.mxu0 %v3769
    %4427 = vmatpush.bf16.msra.mxu0 %v3761
    %4428 = vmatpush.bf16.msra.mxu0 %v3753
    %4429 = vmatpush.bf16.msra.mxu0 %v3745
    %4430 = vmatmul.bf16.gmra.mxu0 %v2696
    %v4431 = vpop.f32.mrf.mxu0
    %v4432 = vadd.f32 %v2961, %v4431
    %v4433 = vpop.f32.mrf.mxu0
    %v4434 = vadd.f32 %v2961, %v4433
    %4435 = vdwg.mxu0
    %4436 = vmatpush.bf16.msra.mxu0 %v3865
    %4437 = vmatpush.bf16.msra.mxu0 %v3857
    %4438 = vmatpush.bf16.msra.mxu0 %v3849
    %4439 = vmatpush.bf16.msra.mxu0 %v3841
    %4440 = vmatpush.bf16.msra.mxu0 %v3833
    %4441 = vmatpush.bf16.msra.mxu0 %v3825
    %4442 = vmatpush.bf16.msra.mxu0 %v3817
    %4443 = vmatpush.bf16.msra.mxu0 %v3809
    %4444 = vmatmul.bf16.gmra.mxu0 %v2697
    %v4445 = vpop.f32.mrf.mxu0
    %v4446 = vadd.f32 %v4432, %v4445
    %v4447 = vpop.f32.mrf.mxu0
    %v4448 = vadd.f32 %v4434, %v4447
    %4449 = vdwg.mxu0
    %4450 = vmatpush.bf16.msra.mxu0 %v3929
    %4451 = vmatpush.bf16.msra.mxu0 %v3921
    %4452 = vmatpush.bf16.msra.mxu0 %v3913
    %4453 = vmatpush.bf16.msra.mxu0 %v3905
    %4454 = vmatpush.bf16.msra.mxu0 %v3897
    %4455 = vmatpush.bf16.msra.mxu0 %v3889
    %4456 = vmatpush.bf16.msra.mxu0 %v3881
    %4457 = vmatpush.bf16.msra.mxu0 %v3873
    %4458 = vmatmul.bf16.gmra.mxu0 %v2698
    %v4459 = vpop.f32.mrf.mxu0
    %v4460 = vadd.f32 %v4446, %v4459
    %v4461 = vpop.f32.mrf.mxu0
    %v4462 = vadd.f32 %v4448, %v4461
    %4463 = vdwg.mxu0
    %4464 = vmatpush.bf16.msra.mxu0 %v3993
    %4465 = vmatpush.bf16.msra.mxu0 %v3985
    %4466 = vmatpush.bf16.msra.mxu0 %v3977
    %4467 = vmatpush.bf16.msra.mxu0 %v3969
    %4468 = vmatpush.bf16.msra.mxu0 %v3961
    %4469 = vmatpush.bf16.msra.mxu0 %v3953
    %4470 = vmatpush.bf16.msra.mxu0 %v3945
    %4471 = vmatpush.bf16.msra.mxu0 %v3937
    %4472 = vmatmul.bf16.gmra.mxu0 %v2699
    %v4473 = vpop.f32.mrf.mxu0
    %v4474 = vadd.f32 %v4460, %v4473
    %v4475 = vpop.f32.mrf.mxu0
    %v4476 = vadd.f32 %v4462, %v4475
    %4477 = vdwg.mxu0
    %4478 = vmatpush.bf16.msra.mxu0 %v3802
    %4479 = vmatpush.bf16.msra.mxu0 %v3794
    %4480 = vmatpush.bf16.msra.mxu0 %v3786
    %4481 = vmatpush.bf16.msra.mxu0 %v3778
    %4482 = vmatpush.bf16.msra.mxu0 %v3770
    %4483 = vmatpush.bf16.msra.mxu0 %v3762
    %4484 = vmatpush.bf16.msra.mxu0 %v3754
    %4485 = vmatpush.bf16.msra.mxu0 %v3746
    %4486 = vmatmul.bf16.gmra.mxu0 %v2696
    %v4487 = vpop.f32.mrf.mxu0
    %v4488 = vadd.f32 %v2962, %v4487
    %v4489 = vpop.f32.mrf.mxu0
    %v4490 = vadd.f32 %v2962, %v4489
    %4491 = vdwg.mxu0
    %4492 = vmatpush.bf16.msra.mxu0 %v3866
    %4493 = vmatpush.bf16.msra.mxu0 %v3858
    %4494 = vmatpush.bf16.msra.mxu0 %v3850
    %4495 = vmatpush.bf16.msra.mxu0 %v3842
    %4496 = vmatpush.bf16.msra.mxu0 %v3834
    %4497 = vmatpush.bf16.msra.mxu0 %v3826
    %4498 = vmatpush.bf16.msra.mxu0 %v3818
    %4499 = vmatpush.bf16.msra.mxu0 %v3810
    %4500 = vmatmul.bf16.gmra.mxu0 %v2697
    %v4501 = vpop.f32.mrf.mxu0
    %v4502 = vadd.f32 %v4488, %v4501
    %v4503 = vpop.f32.mrf.mxu0
    %v4504 = vadd.f32 %v4490, %v4503
    %4505 = vdwg.mxu0
    %4506 = vmatpush.bf16.msra.mxu0 %v3930
    %4507 = vmatpush.bf16.msra.mxu0 %v3922
    %4508 = vmatpush.bf16.msra.mxu0 %v3914
    %4509 = vmatpush.bf16.msra.mxu0 %v3906
    %4510 = vmatpush.bf16.msra.mxu0 %v3898
    %4511 = vmatpush.bf16.msra.mxu0 %v3890
    %4512 = vmatpush.bf16.msra.mxu0 %v3882
    %4513 = vmatpush.bf16.msra.mxu0 %v3874
    %4514 = vmatmul.bf16.gmra.mxu0 %v2698
    %v4515 = vpop.f32.mrf.mxu0
    %v4516 = vadd.f32 %v4502, %v4515
    %v4517 = vpop.f32.mrf.mxu0
    %v4518 = vadd.f32 %v4504, %v4517
    %4519 = vdwg.mxu0
    %4520 = vmatpush.bf16.msra.mxu0 %v3994
    %4521 = vmatpush.bf16.msra.mxu0 %v3986
    %4522 = vmatpush.bf16.msra.mxu0 %v3978
    %4523 = vmatpush.bf16.msra.mxu0 %v3970
    %4524 = vmatpush.bf16.msra.mxu0 %v3962
    %4525 = vmatpush.bf16.msra.mxu0 %v3954
    %4526 = vmatpush.bf16.msra.mxu0 %v3946
    %4527 = vmatpush.bf16.msra.mxu0 %v3938
    %4528 = vmatmul.bf16.gmra.mxu0 %v2699
    %v4529 = vpop.f32.mrf.mxu0
    %v4530 = vadd.f32 %v4516, %v4529
    %v4531 = vpop.f32.mrf.mxu0
    %v4532 = vadd.f32 %v4518, %v4531
    %4533 = vdwg.mxu0
    %4534 = vmatpush.bf16.msra.mxu0 %v3803
    %4535 = vmatpush.bf16.msra.mxu0 %v3795
    %4536 = vmatpush.bf16.msra.mxu0 %v3787
    %4537 = vmatpush.bf16.msra.mxu0 %v3779
    %4538 = vmatpush.bf16.msra.mxu0 %v3771
    %4539 = vmatpush.bf16.msra.mxu0 %v3763
    %4540 = vmatpush.bf16.msra.mxu0 %v3755
    %4541 = vmatpush.bf16.msra.mxu0 %v3747
    %4542 = vmatmul.bf16.gmra.mxu0 %v2696
    %v4543 = vpop.f32.mrf.mxu0
    %v4544 = vadd.f32 %v2963, %v4543
    %v4545 = vpop.f32.mrf.mxu0
    %v4546 = vadd.f32 %v2963, %v4545
    %4547 = vdwg.mxu0
    %4548 = vmatpush.bf16.msra.mxu0 %v3867
    %4549 = vmatpush.bf16.msra.mxu0 %v3859
    %4550 = vmatpush.bf16.msra.mxu0 %v3851
    %4551 = vmatpush.bf16.msra.mxu0 %v3843
    %4552 = vmatpush.bf16.msra.mxu0 %v3835
    %4553 = vmatpush.bf16.msra.mxu0 %v3827
    %4554 = vmatpush.bf16.msra.mxu0 %v3819
    %4555 = vmatpush.bf16.msra.mxu0 %v3811
    %4556 = vmatmul.bf16.gmra.mxu0 %v2697
    %v4557 = vpop.f32.mrf.mxu0
    %v4558 = vadd.f32 %v4544, %v4557
    %v4559 = vpop.f32.mrf.mxu0
    %v4560 = vadd.f32 %v4546, %v4559
    %4561 = vdwg.mxu0
    %4562 = vmatpush.bf16.msra.mxu0 %v3931
    %4563 = vmatpush.bf16.msra.mxu0 %v3923
    %4564 = vmatpush.bf16.msra.mxu0 %v3915
    %4565 = vmatpush.bf16.msra.mxu0 %v3907
    %4566 = vmatpush.bf16.msra.mxu0 %v3899
    %4567 = vmatpush.bf16.msra.mxu0 %v3891
    %4568 = vmatpush.bf16.msra.mxu0 %v3883
    %4569 = vmatpush.bf16.msra.mxu0 %v3875
    %4570 = vmatmul.bf16.gmra.mxu0 %v2698
    %v4571 = vpop.f32.mrf.mxu0
    %v4572 = vadd.f32 %v4558, %v4571
    %v4573 = vpop.f32.mrf.mxu0
    %v4574 = vadd.f32 %v4560, %v4573
    %4575 = vdwg.mxu0
    %4576 = vmatpush.bf16.msra.mxu0 %v3995
    %4577 = vmatpush.bf16.msra.mxu0 %v3987
    %4578 = vmatpush.bf16.msra.mxu0 %v3979
    %4579 = vmatpush.bf16.msra.mxu0 %v3971
    %4580 = vmatpush.bf16.msra.mxu0 %v3963
    %4581 = vmatpush.bf16.msra.mxu0 %v3955
    %4582 = vmatpush.bf16.msra.mxu0 %v3947
    %4583 = vmatpush.bf16.msra.mxu0 %v3939
    %4584 = vmatmul.bf16.gmra.mxu0 %v2699
    %v4585 = vpop.f32.mrf.mxu0
    %v4586 = vadd.f32 %v4572, %v4585
    %v4587 = vpop.f32.mrf.mxu0
    %v4588 = vadd.f32 %v4574, %v4587
    %4589 = vdwg.mxu0
    %4590 = vmatpush.bf16.msra.mxu0 %v3804
    %4591 = vmatpush.bf16.msra.mxu0 %v3796
    %4592 = vmatpush.bf16.msra.mxu0 %v3788
    %4593 = vmatpush.bf16.msra.mxu0 %v3780
    %4594 = vmatpush.bf16.msra.mxu0 %v3772
    %4595 = vmatpush.bf16.msra.mxu0 %v3764
    %4596 = vmatpush.bf16.msra.mxu0 %v3756
    %4597 = vmatpush.bf16.msra.mxu0 %v3748
    %4598 = vmatmul.bf16.gmra.mxu0 %v2696
    %v4599 = vpop.f32.mrf.mxu0
    %v4600 = vadd.f32 %v2964, %v4599
    %v4601 = vpop.f32.mrf.mxu0
    %v4602 = vadd.f32 %v2964, %v4601
    %4603 = vdwg.mxu0
    %4604 = vmatpush.bf16.msra.mxu0 %v3868
    %4605 = vmatpush.bf16.msra.mxu0 %v3860
    %4606 = vmatpush.bf16.msra.mxu0 %v3852
    %4607 = vmatpush.bf16.msra.mxu0 %v3844
    %4608 = vmatpush.bf16.msra.mxu0 %v3836
    %4609 = vmatpush.bf16.msra.mxu0 %v3828
    %4610 = vmatpush.bf16.msra.mxu0 %v3820
    %4611 = vmatpush.bf16.msra.mxu0 %v3812
    %4612 = vmatmul.bf16.gmra.mxu0 %v2697
    %v4613 = vpop.f32.mrf.mxu0
    %v4614 = vadd.f32 %v4600, %v4613
    %v4615 = vpop.f32.mrf.mxu0
    %v4616 = vadd.f32 %v4602, %v4615
    %4617 = vdwg.mxu0
    %4618 = vmatpush.bf16.msra.mxu0 %v3932
    %4619 = vmatpush.bf16.msra.mxu0 %v3924
    %4620 = vmatpush.bf16.msra.mxu0 %v3916
    %4621 = vmatpush.bf16.msra.mxu0 %v3908
    %4622 = vmatpush.bf16.msra.mxu0 %v3900
    %4623 = vmatpush.bf16.msra.mxu0 %v3892
    %4624 = vmatpush.bf16.msra.mxu0 %v3884
    %4625 = vmatpush.bf16.msra.mxu0 %v3876
    %4626 = vmatmul.bf16.gmra.mxu0 %v2698
    %v4627 = vpop.f32.mrf.mxu0
    %v4628 = vadd.f32 %v4614, %v4627
    %v4629 = vpop.f32.mrf.mxu0
    %v4630 = vadd.f32 %v4616, %v4629
    %4631 = vdwg.mxu0
    %4632 = vmatpush.bf16.msra.mxu0 %v3996
    %4633 = vmatpush.bf16.msra.mxu0 %v3988
    %4634 = vmatpush.bf16.msra.mxu0 %v3980
    %4635 = vmatpush.bf16.msra.mxu0 %v3972
    %4636 = vmatpush.bf16.msra.mxu0 %v3964
    %4637 = vmatpush.bf16.msra.mxu0 %v3956
    %4638 = vmatpush.bf16.msra.mxu0 %v3948
    %4639 = vmatpush.bf16.msra.mxu0 %v3940
    %4640 = vmatmul.bf16.gmra.mxu0 %v2699
    %v4641 = vpop.f32.mrf.mxu0
    %v4642 = vadd.f32 %v4628, %v4641
    %v4643 = vpop.f32.mrf.mxu0
    %v4644 = vadd.f32 %v4630, %v4643
    %4645 = vdwg.mxu0
    %4646 = vmatpush.bf16.msra.mxu0 %v3805
    %4647 = vmatpush.bf16.msra.mxu0 %v3797
    %4648 = vmatpush.bf16.msra.mxu0 %v3789
    %4649 = vmatpush.bf16.msra.mxu0 %v3781
    %4650 = vmatpush.bf16.msra.mxu0 %v3773
    %4651 = vmatpush.bf16.msra.mxu0 %v3765
    %4652 = vmatpush.bf16.msra.mxu0 %v3757
    %4653 = vmatpush.bf16.msra.mxu0 %v3749
    %4654 = vmatmul.bf16.gmra.mxu0 %v2696
    %v4655 = vpop.f32.mrf.mxu0
    %v4656 = vadd.f32 %v2965, %v4655
    %v4657 = vpop.f32.mrf.mxu0
    %v4658 = vadd.f32 %v2965, %v4657
    %4659 = vdwg.mxu0
    %4660 = vmatpush.bf16.msra.mxu0 %v3869
    %4661 = vmatpush.bf16.msra.mxu0 %v3861
    %4662 = vmatpush.bf16.msra.mxu0 %v3853
    %4663 = vmatpush.bf16.msra.mxu0 %v3845
    %4664 = vmatpush.bf16.msra.mxu0 %v3837
    %4665 = vmatpush.bf16.msra.mxu0 %v3829
    %4666 = vmatpush.bf16.msra.mxu0 %v3821
    %4667 = vmatpush.bf16.msra.mxu0 %v3813
    %4668 = vmatmul.bf16.gmra.mxu0 %v2697
    %v4669 = vpop.f32.mrf.mxu0
    %v4670 = vadd.f32 %v4656, %v4669
    %v4671 = vpop.f32.mrf.mxu0
    %v4672 = vadd.f32 %v4658, %v4671
    %4673 = vdwg.mxu0
    %4674 = vmatpush.bf16.msra.mxu0 %v3933
    %4675 = vmatpush.bf16.msra.mxu0 %v3925
    %4676 = vmatpush.bf16.msra.mxu0 %v3917
    %4677 = vmatpush.bf16.msra.mxu0 %v3909
    %4678 = vmatpush.bf16.msra.mxu0 %v3901
    %4679 = vmatpush.bf16.msra.mxu0 %v3893
    %4680 = vmatpush.bf16.msra.mxu0 %v3885
    %4681 = vmatpush.bf16.msra.mxu0 %v3877
    %4682 = vmatmul.bf16.gmra.mxu0 %v2698
    %v4683 = vpop.f32.mrf.mxu0
    %v4684 = vadd.f32 %v4670, %v4683
    %v4685 = vpop.f32.mrf.mxu0
    %v4686 = vadd.f32 %v4672, %v4685
    %4687 = vdwg.mxu0
    %4688 = vmatpush.bf16.msra.mxu0 %v3997
    %4689 = vmatpush.bf16.msra.mxu0 %v3989
    %4690 = vmatpush.bf16.msra.mxu0 %v3981
    %4691 = vmatpush.bf16.msra.mxu0 %v3973
    %4692 = vmatpush.bf16.msra.mxu0 %v3965
    %4693 = vmatpush.bf16.msra.mxu0 %v3957
    %4694 = vmatpush.bf16.msra.mxu0 %v3949
    %4695 = vmatpush.bf16.msra.mxu0 %v3941
    %4696 = vmatmul.bf16.gmra.mxu0 %v2699
    %v4697 = vpop.f32.mrf.mxu0
    %v4698 = vadd.f32 %v4684, %v4697
    %v4699 = vpop.f32.mrf.mxu0
    %v4700 = vadd.f32 %v4686, %v4699
    %4701 = vdwg.mxu0
    %v4702 = vsub.f32 0.0, %v4306
    %v4703 = vsub.f32 0.0, %v4362
    %v4704 = vsub.f32 0.0, %v4418
    %v4705 = vsub.f32 0.0, %v4474
    %v4706 = vsub.f32 0.0, %v4530
    %v4707 = vsub.f32 0.0, %v4586
    %v4708 = vsub.f32 0.0, %v4642
    %v4709 = vsub.f32 0.0, %v4698
    %v4710 = vsub.f32 0.0, %v4308
    %v4711 = vsub.f32 0.0, %v4364
    %v4712 = vsub.f32 0.0, %v4420
    %v4713 = vsub.f32 0.0, %v4476
    %v4714 = vsub.f32 0.0, %v4532
    %v4715 = vsub.f32 0.0, %v4588
    %v4716 = vsub.f32 0.0, %v4644
    %v4717 = vsub.f32 0.0, %v4700
    %v4718 = vmul.f32 %v4702, 1.442695
    %v4719 = vpow.pop %v4718
    %v4720 = vmul.f32 %v4703, 1.442695
    %v4721 = vpow.pop %v4720
    %v4722 = vmul.f32 %v4704, 1.442695
    %v4723 = vpow.pop %v4722
    %v4724 = vmul.f32 %v4705, 1.442695
    %v4725 = vpow.pop %v4724
    %v4726 = vmul.f32 %v4706, 1.442695
    %v4727 = vpow.pop %v4726
    %v4728 = vmul.f32 %v4707, 1.442695
    %v4729 = vpow.pop %v4728
    %v4730 = vmul.f32 %v4708, 1.442695
    %v4731 = vpow.pop %v4730
    %v4732 = vmul.f32 %v4709, 1.442695
    %v4733 = vpow.pop %v4732
    %v4734 = vmul.f32 %v4710, 1.442695
    %v4735 = vpow.pop %v4734
    %v4736 = vmul.f32 %v4711, 1.442695
    %v4737 = vpow.pop %v4736
    %v4738 = vmul.f32 %v4712, 1.442695
    %v4739 = vpow.pop %v4738
    %v4740 = vmul.f32 %v4713, 1.442695
    %v4741 = vpow.pop %v4740
    %v4742 = vmul.f32 %v4714, 1.442695
    %v4743 = vpow.pop %v4742
    %v4744 = vmul.f32 %v4715, 1.442695
    %v4745 = vpow.pop %v4744
    %v4746 = vmul.f32 %v4716, 1.442695
    %v4747 = vpow.pop %v4746
    %v4748 = vmul.f32 %v4717, 1.442695
    %v4749 = vpow.pop %v4748
    %v4750 = vadd.f32 %v4719, 1.0
    %v4751 = vadd.f32 %v4721, 1.0
    %v4752 = vadd.f32 %v4723, 1.0
    %v4753 = vadd.f32 %v4725, 1.0
    %v4754 = vadd.f32 %v4727, 1.0
    %v4755 = vadd.f32 %v4729, 1.0
    %v4756 = vadd.f32 %v4731, 1.0
    %v4757 = vadd.f32 %v4733, 1.0
    %v4758 = vadd.f32 %v4735, 1.0
    %v4759 = vadd.f32 %v4737, 1.0
    %v4760 = vadd.f32 %v4739, 1.0
    %v4761 = vadd.f32 %v4741, 1.0
    %v4762 = vadd.f32 %v4743, 1.0
    %v4763 = vadd.f32 %v4745, 1.0
    %v4764 = vadd.f32 %v4747, 1.0
    %v4765 = vadd.f32 %v4749, 1.0
    %v4766 = vrcp.pop %v4750
    %v4767 = vrcp.pop %v4751
    %v4768 = vrcp.pop %v4752
    %v4769 = vrcp.pop %v4753
    %v4770 = vrcp.pop %v4754
    %v4771 = vrcp.pop %v4755
    %v4772 = vrcp.pop %v4756
    %v4773 = vrcp.pop %v4757
    %v4774 = vrcp.pop %v4758
    %v4775 = vrcp.pop %v4759
    %v4776 = vrcp.pop %v4760
    %v4777 = vrcp.pop %v4761
    %v4778 = vrcp.pop %v4762
    %v4779 = vrcp.pop %v4763
    %v4780 = vrcp.pop %v4764
    %v4781 = vrcp.pop %v4765
    %v4782 = vpack.c.bf16 %v4767, %v4766
    %v4783 = vpack.c.bf16 %v4769, %v4768
    %v4784 = vpack.c.bf16 %v4771, %v4770
    %v4785 = vpack.c.bf16 %v4773, %v4772
    %v4786 = vpack.c.bf16 %v4775, %v4774
    %v4787 = vpack.c.bf16 %v4777, %v4776
    %v4788 = vpack.c.bf16 %v4779, %v4778
    %v4789 = vpack.c.bf16 %v4781, %v4780
    %4790 = vst [vmem:[%s10] sm:$0xff] %v4782
    %4791 = vst [vmem:[%s10 + $0x8] sm:$0xff] %v4783
    %4792 = vst [vmem:[%s10 + $0x10] sm:$0xff] %v4784
    %4793 = vst [vmem:[%s10 + $0x18] sm:$0xff] %v4785
    %4794 = vst [vmem:[%s10 + $0x20] sm:$0xff] %v4786
    %4795 = vst [vmem:[%s10 + $0x28] sm:$0xff] %v4787
    %4796 = vst [vmem:[%s10 + $0x30] sm:$0xff] %v4788
    %4797 = vst [vmem:[%s10 + $0x38] sm:$0xff] %v4789
    // Predicated region
    $region50: #{mlp_forward.1} parent=1 // pred_check
      _
    $region51: #{mlp_forward.1} parent=1 // pred_check_branch
      %4799 = sbr.rel (0) target = $region53
    $region52: #{mlp_forward.1} parent=1 // pred_region
      _
    $region53: #{mlp_forward.1} parent=1 // pred_fallthru
      _
    // Predicated region
    $region54: #{mlp_forward.1} parent=1 // pred_check
      _
    $region55: #{mlp_forward.1} parent=1 // pred_check_branch
      %4801 = sbr.rel (0) target = $region57
    $region56: #{mlp_forward.1} parent=1 // pred_region
      _
    $region57: #{mlp_forward.1} parent=1 // pred_fallthru
      _
    // Predicated region
    $region58: #{mlp_forward.1} parent=1 // pred_check
      _
    $region59: #{mlp_forward.1} parent=1 // pred_check_branch
      %4803 = sbr.rel (0) target = $region61
    $region60: #{mlp_forward.1} parent=1 // pred_region
      _
    $region61: #{mlp_forward.1} parent=1 // pred_fallthru
      _
    // Predicated region
    $region62: #{mlp_forward.1} parent=1 // pred_check
      _
    $region63: #{mlp_forward.1} parent=1 // pred_check_branch
      %4805 = sbr.rel (0) target = $region65
    $region64: #{mlp_forward.1} parent=1 // pred_region
      _
    $region65: #{mlp_forward.1} parent=1 // pred_fallthru
      _
    %4806 = vsyncpa [#allocation3], 1
    %4807 = vsyncpa [#allocation5], 1

</llo_original>
